<compile_context>
chip_gen: v7x
topology: tpu7x:2x2x1
jax: 0.10.0
libtpu: 0.0.40
codegen_flags: <defaults>
</compile_context>

<pallas_src>
import numpy as np
import jax
import jax.numpy as jnp
from jax.experimental import pallas as pl
from jax.experimental.pallas import tpu as pltpu

EPS = 1e-5
LRELU_SLOPE = 0.01

# problem sizes (synthetic config, same assumptions as the reference)
LS = 8            # latent / style channels
NC = 4            # NUM_CLASSES
ZDIM = LS + NC    # reshape_fc input features
CIMG = 3          # output image channels
S = 8             # spatial dim after reshape_fc (16 // 2**(2-1))
C0, C1 = 32, 16   # dec_layer_dims

_VMEM = pl.BlockSpec(memory_space=pltpu.MemorySpace.VMEM)

# nine 3x3 tap offsets, kh-major (t = kh*3 + kw); the 4 ConvTranspose taps are
# the subset {(0,0),(0,1),(1,0),(1,1)}.
_OFFS9 = tuple((kh - 1, kw - 1) for kh in range(3) for kw in range(3))
_UP_OFFS = ((0, 0), (0, 1), (1, 0), (1, 1))


def _tree_sum(xs):
    xs = list(xs)
    while len(xs) > 1:
        nxt = [xs[i] + xs[i + 1] for i in range(0, len(xs) - 1, 2)]
        if len(xs) % 2:
            nxt.append(xs[-1])
        xs = nxt
    return xs[0]


# ----------------------------------------------------------------------------
# Fused decoder kernel
# ----------------------------------------------------------------------------
def _make_dec_kernel(B):
    H = W = S
    HW = H * W
    N = B * HW            # lanes at the 8x8 stage (128 for B=2)

    def lrelu(x):
        return jnp.where(x >= 0.0, x, LRELU_SLOPE * x)

    def kernel(zt_ref, mask_ref, fc_w_ref, fc_b_ref,
               proj_g_ref, proj_be_ref, proj_w_ref, proj_b_ref,
               c0_g_ref, c0_be_ref, c0_w_ref, c0_b_ref,
               st_w_ref, st_b_ref,
               c1_g_ref, c1_be_ref, c1_w_ref, c1_b_ref,
               up_g_ref, up_be_ref, up_w_ref, up_b_ref,
               mu_g_ref, mu_be_ref, mu_wblk_ref, mu_b_ref,
               lv_g_ref, lv_be_ref, lv_wblk_ref, lv_b_ref,
               o_mu_ref, o_std_ref):
        f32 = jnp.float32

        # ---- hoisted lane geometry & precomputed boundary masks ------------
        lane = jax.lax.broadcasted_iota(jnp.int32, (1, N), 1)
        masks = mask_ref[...]                                # (9, N) 0/1 f32

        def taps(x, offs):
            # x: (C, N), lane n = b*HW + i*W + j.  For each (di, dj) return
            # x[b, i+di, j+dj] (zero outside the HxW grid): lane roll (XLU)
            # + precomputed edge mask.  No iota / compares re-emitted here.
            outs = []
            for di, dj in offs:
                d = di * W + dj
                r = x if d == 0 else pltpu.roll(x, shift=(-d) % N, axis=1)
                if (di, dj) != (0, 0):
                    t = (di + 1) * 3 + (dj + 1)
                    r = r * masks[t:t + 1, :]
                outs.append(r)
            return outs

        def conv_acc(x, w_ref, bias, offs):
            # conv / conv-transpose as per-tap accumulating matmuls; no wide-K
            # im2col operand is materialised, results are tree-summed.
            parts = [jnp.dot(w_ref[t], r, preferred_element_type=f32)
                     for t, r in enumerate(taps(x, offs))]
            return _tree_sum(parts) + bias

        def bn_stats(x):
            # training-mode BatchNorm2d statistics (biased var, two-pass)
            mean = jnp.mean(x, axis=1, keepdims=True)
            var = jnp.mean(jnp.square(x - mean), axis=1, keepdims=True)
            return mean, jax.lax.rsqrt(var + EPS)

        def affine(mean, rstd, g, be):
            # BN folded to one scale + one bias (single mul+add per use)
            scale = rstd * g
            return scale, be - mean * scale

        # ---- per-lane latent broadcast (selects, no MXU) --------------------
        # zlane[d, b*HW + pos] == z[b, d]
        zlane = jnp.broadcast_to(zt_ref[:, 0:1], (ZDIM, N))
        for b in range(1, B):
            zlane = jnp.where(lane >= b * HW, zt_ref[:, b:b + 1], zlane)

        # ---- reshape_fc : 4 independent partial sums (tree-added) ----------
        parts = [fc_b_ref[...]]                              # (C0, N)
        for g0 in range(0, ZDIM, 3):
            acc = zlane[g0:g0 + 1, :] * fc_w_ref[g0]
            for d in range(g0 + 1, min(g0 + 3, ZDIM)):
                acc = acc + zlane[d:d + 1, :] * fc_w_ref[d]
            parts.append(acc)
        x0 = _tree_sum(parts)                                # (C0, N)

        # ---- resup_style_block ----------------------------------------------
        # proj and conv0 see the same input -> share one BN stats pass.
        m0, r0 = bn_stats(x0)
        s_p, b_p = affine(m0, r0, proj_g_ref[...], proj_be_ref[...])
        yp = (jnp.dot(proj_w_ref[...], x0 * s_p + b_p,
                      preferred_element_type=f32) + proj_b_ref[...])
        s_0, b_0 = affine(m0, r0, c0_g_ref[...], c0_be_ref[...])
        a0 = lrelu(x0 * s_0 + b_0)
        y0 = conv_acc(a0, c0_w_ref, c0_b_ref[...], _OFFS9)
        x1 = y0 + yp                                         # (C1, N)

        # conv1 with style injection: x + project_style(style) -> BN -> LReLU -> 3x3
        style_bias = (jnp.dot(st_w_ref[...], zlane[:LS, :],
                              preferred_element_type=f32) + st_b_ref[...])
        x1s = x1 + style_bias
        m1, r1 = bn_stats(x1s)
        s_1, b_1 = affine(m1, r1, c1_g_ref[...], c1_be_ref[...])
        a1 = lrelu(x1s * s_1 + b_1)
        y1 = conv_acc(a1, c1_w_ref, c1_b_ref[...], _OFFS9)   # (C1, N)

        # ---- upsample: BN -> LReLU -> ConvTranspose2d(k3, s2, p1, op1) ------
        m2, r2 = bn_stats(y1)
        s_u, b_u = affine(m2, r2, up_g_ref[...], up_be_ref[...])
        au = lrelu(y1 * s_u + b_u)
        # rows of u: (output parity p = 2*pa+pb, out channel); lanes: (b, i, j)
        u = conv_acc(au, up_w_ref, up_b_ref[...], _UP_OFFS)  # (4*C1, N)

        # ---- shared BN statistics of the upsampled tensor (both heads) ------
        blocks = [u[p * C1:(p + 1) * C1, :] for p in range(4)]
        cnt = float(4 * N)
        mean_u = _tree_sum([jnp.sum(bk, axis=1, keepdims=True)
                            for bk in blocks]) / cnt
        var_u = _tree_sum([jnp.sum(jnp.square(bk - mean_u),
                                   axis=1, keepdims=True)
                           for bk in blocks]) / cnt
        rstd_u = jax.lax.rsqrt(var_u + EPS)

        def head(g_ref, be_ref, wblk_ref, b_ref):
            # BN(affine) -> LReLU on the parity-blocked tensor, then one
            # block-diagonal 1x1-conv matmul covering all 4 parities and both
            # batch elements.
            sc, bi = affine(mean_u, rstd_u, g_ref[...], be_ref[...])
            s4 = jnp.concatenate([sc] * 4, axis=0)           # (4*C1, 1)
            b4 = jnp.concatenate([bi] * 4, axis=0)
            h = lrelu(u * s4 + b4)
            return (jnp.dot(wblk_ref[...], h, preferred_element_type=f32)
                    + b_ref[...])                            # (4*CIMG, N)

        o_mu_ref[...] = jnp.tanh(
            head(mu_g_ref, mu_be_ref, mu_wblk_ref, mu_b_ref))

        lv = head(lv_g_ref, lv_be_ref, lv_wblk_ref, lv_b_ref)
        hlf = 0.5 * lv
        sp = jnp.maximum(hlf, 0.0) + jnp.log(1.0 + jnp.exp(-jnp.abs(hlf)))
        o_std_ref[...] = jnp.exp(jnp.minimum(sp, 20.0))

    return kernel


# ----------------------------------------------------------------------------
# Parameter setup: spectral norm + packing into the kernel's working layout
# ----------------------------------------------------------------------------
def init_params(key, B):
    H = W = S
    HW = H * W
    N = B * HW
    kit = iter(jax.random.split(key, 64))

    def nrm(shape, scale=0.1):
        return np.asarray(scale * jax.random.normal(next(kit), shape),
                          dtype=np.float32)

    def sn(w, dim=0):
        # TODO(synk): PyTorch spectral_norm uses a one-step power-iteration
        # estimate of sigma; we normalise by the exact top singular value.
        wn = np.asarray(w, dtype=np.float64)
        mat = np.moveaxis(wn, dim, 0).reshape(wn.shape[dim], -1)
        sigma = np.linalg.svd(mat, compute_uv=False)[0]
        return (wn / sigma).astype(np.float32)

    def bn_pair(c):
        return ((1.0 + nrm((c, 1))).astype(np.float32), nrm((c, 1)))

    p = {}

    # precomputed boundary masks for the nine 3x3 tap offsets (also reused by
    # the ConvTranspose taps) -- kernel does no per-conv iota/compare work.
    mask = np.zeros((9, N), np.float32)
    for t, (di, dj) in enumerate(_OFFS9):
        for i in range(H):
            for j in range(W):
                if 0 <= i + di < H and 0 <= j + dj < W:
                    for b in range(B):
                        mask[t, b * HW + i * W + j] = 1.0
    p["tap_mask"] = mask

    # reshape_fc : spectral_norm(Linear(LS+NC -> C0*S*S)), pre-permuted into
    # the (C0, B*H*W) working layout (pre-tiled per batch -- see header note).
    w = sn(nrm((C0 * HW, ZDIM)), dim=0)                    # torch (out, in)
    v = w.T.reshape(ZDIM, C0, HW)                          # [d, c0, pos]
    p["fc_w"] = np.concatenate([v] * B, axis=2)            # (ZDIM, C0, N)
    fb = nrm((C0 * HW,)).reshape(C0, HW)
    p["fc_b"] = np.concatenate([fb] * B, axis=1)           # (C0, N)

    # resup_style_block.proj : BN(C0) -> Conv1x1(C0->C1), no activation
    p["proj_g"], p["proj_be"] = bn_pair(C0)
    w = sn(nrm((C1, C0, 1, 1)), dim=0)
    p["proj_w"] = w[:, :, 0, 0]                            # (C1, C0)
    p["proj_b"] = nrm((C1, 1))

    # resup_style_block.conv0 : BN(C0) -> LReLU -> Conv3x3(C0->C1)
    p["c0_g"], p["c0_be"] = bn_pair(C0)
    w = sn(nrm((C1, C0, 3, 3)), dim=0)
    p["c0_w"] = np.transpose(w, (2, 3, 0, 1)).reshape(9, C1, C0)
    p["c0_b"] = nrm((C1, 1))

    # bnconv_style.project_style : spectral_norm(Linear(LS -> C1))
    p["st_w"] = sn(nrm((C1, LS)), dim=0)                   # (C1, LS)
    p["st_b"] = nrm((C1, 1))

    # bnconv_style.conv : BN(C1) -> LReLU -> Conv3x3(C1->C1)
    p["c1_g"], p["c1_be"] = bn_pair(C1)
    w = sn(nrm((C1, C1, 3, 3)), dim=0)
    p["c1_w"] = np.transpose(w, (2, 3, 0, 1)).reshape(9, C1, C1)
    p["c1_b"] = nrm((C1, 1))

    # bnconv_up : BN(C1) -> LReLU -> ConvTranspose2d(C1->C1, k3 s2 p1 op1)
    # Packed per tap: up_w[tap, par*C1 + cout, cin], taps ordered
    # [x(i,j), x(i,j+1), x(i+1,j), x(i+1,j+1)], parity par = 2*pa + pb.
    p["up_g"], p["up_be"] = bn_pair(C1)
    w = sn(nrm((C1, C1, 3, 3)), dim=1)                     # torch (Cin,Cout,kh,kw)
    wt = np.zeros((4, 4 * C1, C1), np.float32)

    def put(tap, par, kh, kw):
        wt[tap, par * C1:(par + 1) * C1, :] = w[:, :, kh, kw].T

    put(0, 0, 1, 1)                        # out[2i  , 2j  ]
    put(0, 1, 1, 2); put(1, 1, 1, 0)       # out[2i  , 2j+1]
    put(0, 2, 2, 1); put(2, 2, 0, 1)       # out[2i+1, 2j  ]
    put(0, 3, 2, 2); put(1, 3, 2, 0)       # out[2i+1, 2j+1]
    put(2, 3, 0, 2); put(3, 3, 0, 0)
    p["up_w"] = wt
    p["up_b"] = np.tile(nrm((C1, 1)), (4, 1))              # (4*C1, 1)

    # heads : BN(C1) -> LReLU -> Conv1x1(C1->CIMG), block-diagonal per parity
    def head_params():
        g, be = bn_pair(C1)
        w1 = sn(nrm((CIMG, C1, 1, 1)), dim=0)[:, :, 0, 0]  # (CIMG, C1)
        wblk = np.zeros((4 * CIMG, 4 * C1), np.float32)
        for par in range(4):
            wblk[par * CIMG:(par + 1) * CIMG, par * C1:(par + 1) * C1] = w1
        b1 = np.tile(nrm((CIMG, 1)), (4, 1))               # (4*CIMG, 1)
        return g, be, wblk, b1

    p["mu_g"], p["mu_be"], p["mu_wblk"], p["mu_b"] = head_params()
    p["lv_g"], p["lv_be"], p["lv_wblk"], p["lv_b"] = head_params()

    return {k: jnp.asarray(v, dtype=jnp.float32) for k, v in p.items()}


_PARAM_ORDER = ("tap_mask", "fc_w", "fc_b",
                "proj_g", "proj_be", "proj_w", "proj_b",
                "c0_g", "c0_be", "c0_w", "c0_b",
                "st_w", "st_b",
                "c1_g", "c1_be", "c1_w", "c1_b",
                "up_g", "up_be", "up_w", "up_b",
                "mu_g", "mu_be", "mu_wblk", "mu_b",
                "lv_g", "lv_be", "lv_wblk", "lv_b")


# ----------------------------------------------------------------------------
# Full Dec.forward : one fused grid-less pallas_call + a tiny wrapper transpose
# ----------------------------------------------------------------------------
def dec_forward(params, style, target):
    B = style.shape[0]
    # tiny (ZDIM, B) latent operand; everything else happens inside the kernel
    z_t = jnp.concatenate([style, target], axis=1).T

    args = (z_t,) + tuple(params[k] for k in _PARAM_ORDER)
    out_sds = jax.ShapeDtypeStruct((4 * CIMG, B * S * S), jnp.float32)

    mu_pm, std_pm = pl.pallas_call(
        _make_dec_kernel(B),
        out_shape=(out_sds, out_sds),
        in_specs=[_VMEM] * len(args),
        out_specs=(_VMEM, _VMEM),
    )(*args)

    def interleave(x):
        # kernel rows = (pa, pb, c) parity-major, lanes = (b, i, j): the 2x
        # upsample interleave is a ~12 KiB transpose here instead of 8 scatter
        # matmuls + a 256 KiB constant inside the kernel.
        x = x.reshape(2, 2, CIMG, B, S, S)      # (pa, pb, c, b, i, j)
        x = x.transpose(3, 2, 4, 0, 5, 1)       # (b, c, i, pa, j, pb)
        return x.reshape(B, CIMG, 2 * S, 2 * S)

    return interleave(mu_pm), interleave(std_pm)


if __name__ == "__main__":
    key = jax.random.PRNGKey(0)
    k_params, k_style = jax.random.split(key, 2)

    B = 2
    params = init_params(k_params, B)
    style = jax.random.normal(k_style, (B, LS), dtype=jnp.float32)
    target = jax.nn.one_hot(jnp.array([1, 3]), NC, dtype=jnp.float32)

    fwd = jax.jit(dec_forward)
    mu, mv_std = fwd(params, style, target)
    jax.block_until_ready((mu, mv_std))

    assert mu.shape == (B, CIMG, 2 * S, 2 * S)
    assert mv_std.shape == (B, CIMG, 2 * S, 2 * S)
    assert bool(jnp.all(jnp.isfinite(mu))) and bool(jnp.all(jnp.isfinite(mv_std)))
    assert bool(jnp.all(mv_std > 0.0))
    print("KERNEL_OK")
</pallas_src>

<mosaic_0001>
module attributes {stable_mosaic.version = 11 : i64} {
  func.func @kernel(%arg0: memref<12x2xf32, #tpu.memory_space<vmem>>, %arg1: memref<9x128xf32, #tpu.memory_space<vmem>>, %arg2: memref<12x32x128xf32, #tpu.memory_space<vmem>>, %arg3: memref<32x128xf32, #tpu.memory_space<vmem>>, %arg4: memref<32x1xf32, #tpu.memory_space<vmem>>, %arg5: memref<32x1xf32, #tpu.memory_space<vmem>>, %arg6: memref<16x32xf32, #tpu.memory_space<vmem>>, %arg7: memref<16x1xf32, #tpu.memory_space<vmem>>, %arg8: memref<32x1xf32, #tpu.memory_space<vmem>>, %arg9: memref<32x1xf32, #tpu.memory_space<vmem>>, %arg10: memref<9x16x32xf32, #tpu.memory_space<vmem>>, %arg11: memref<16x1xf32, #tpu.memory_space<vmem>>, %arg12: memref<16x8xf32, #tpu.memory_space<vmem>>, %arg13: memref<16x1xf32, #tpu.memory_space<vmem>>, %arg14: memref<16x1xf32, #tpu.memory_space<vmem>>, %arg15: memref<16x1xf32, #tpu.memory_space<vmem>>, %arg16: memref<9x16x16xf32, #tpu.memory_space<vmem>>, %arg17: memref<16x1xf32, #tpu.memory_space<vmem>>, %arg18: memref<16x1xf32, #tpu.memory_space<vmem>>, %arg19: memref<16x1xf32, #tpu.memory_space<vmem>>, %arg20: memref<4x64x16xf32, #tpu.memory_space<vmem>>, %arg21: memref<64x1xf32, #tpu.memory_space<vmem>>, %arg22: memref<16x1xf32, #tpu.memory_space<vmem>>, %arg23: memref<16x1xf32, #tpu.memory_space<vmem>>, %arg24: memref<12x64xf32, #tpu.memory_space<vmem>>, %arg25: memref<12x1xf32, #tpu.memory_space<vmem>>, %arg26: memref<16x1xf32, #tpu.memory_space<vmem>>, %arg27: memref<16x1xf32, #tpu.memory_space<vmem>>, %arg28: memref<12x64xf32, #tpu.memory_space<vmem>>, %arg29: memref<12x1xf32, #tpu.memory_space<vmem>>, %arg30: memref<12x128xf32, #tpu.memory_space<vmem>>, %arg31: memref<12x128xf32, #tpu.memory_space<vmem>>) attributes {dimension_semantics = [], scalar_prefetch = 0 : i64, scratch_operands = 0 : i64, tpu.core_type = #tpu.core_type<tc>} {
    %0 = tpu.iota {dimensions = array<i32: 1>} : vector<1x128xi32>
    %c0 = arith.constant 0 : index
    %c0_0 = arith.constant 0 : index
    %1 = vector.load %arg1[%c0, %c0_0] : memref<9x128xf32, #tpu.memory_space<vmem>>, vector<9x128xf32>
    %c0_1 = arith.constant 0 : index
    %c0_2 = arith.constant 0 : index
    %2 = vector.load %arg0[%c0_1, %c0_2] : memref<12x2xf32, #tpu.memory_space<vmem>>, vector<12x1xf32>
    %3 = vector.shape_cast %2 : vector<12x1xf32> to vector<12x1xf32>
    %4 = vector.broadcast %3 : vector<12x1xf32> to vector<12x128xf32>
    %c64_i32 = arith.constant 64 : i32
    %5 = vector.broadcast %c64_i32 : i32 to vector<1x128xi32>
    %6 = arith.cmpi sge, %0, %5 : vector<1x128xi32>
    %c0_3 = arith.constant 0 : index
    %c1 = arith.constant 1 : index
    %7 = vector.load %arg0[%c0_3, %c1] : memref<12x2xf32, #tpu.memory_space<vmem>>, vector<12x1xf32>
    %8 = vector.shape_cast %6 : vector<1x128xi1> to vector<1x128xi1>
    %9 = vector.broadcast %8 : vector<1x128xi1> to vector<12x128xi1>
    %10 = vector.shape_cast %7 : vector<12x1xf32> to vector<12x1xf32>
    %11 = vector.broadcast %10 : vector<12x1xf32> to vector<12x128xf32>
    %12 = arith.select %9, %11, %4 : vector<12x128xi1>, vector<12x128xf32>
    %c0_4 = arith.constant 0 : index
    %c0_5 = arith.constant 0 : index
    %13 = vector.load %arg3[%c0_4, %c0_5] : memref<32x128xf32, #tpu.memory_space<vmem>>, vector<32x128xf32>
    %14 = vector.extract_strided_slice %12 {offsets = [0, 0], sizes = [1, 128], strides = [1, 1]} : vector<12x128xf32> to vector<1x128xf32>
    %c0_6 = arith.constant 0 : index
    %c0_7 = arith.constant 0 : index
    %c0_8 = arith.constant 0 : index
    %15 = vector.load %arg2[%c0_6, %c0_7, %c0_8] : memref<12x32x128xf32, #tpu.memory_space<vmem>>, vector<1x32x128xf32>
    %16 = vector.shape_cast %15 : vector<1x32x128xf32> to vector<32x128xf32>
    %17 = vector.broadcast %14 : vector<1x128xf32> to vector<32x128xf32>
    %18 = arith.mulf %17, %16 : vector<32x128xf32>
    %19 = vector.extract_strided_slice %12 {offsets = [1, 0], sizes = [1, 128], strides = [1, 1]} : vector<12x128xf32> to vector<1x128xf32>
    %c1_9 = arith.constant 1 : index
    %c0_10 = arith.constant 0 : index
    %c0_11 = arith.constant 0 : index
    %20 = vector.load %arg2[%c1_9, %c0_10, %c0_11] : memref<12x32x128xf32, #tpu.memory_space<vmem>>, vector<1x32x128xf32>
    %21 = vector.shape_cast %20 : vector<1x32x128xf32> to vector<32x128xf32>
    %22 = vector.broadcast %19 : vector<1x128xf32> to vector<32x128xf32>
    %23 = arith.mulf %22, %21 : vector<32x128xf32>
    %24 = arith.addf %18, %23 : vector<32x128xf32>
    %25 = vector.extract_strided_slice %12 {offsets = [2, 0], sizes = [1, 128], strides = [1, 1]} : vector<12x128xf32> to vector<1x128xf32>
    %c2 = arith.constant 2 : index
    %c0_12 = arith.constant 0 : index
    %c0_13 = arith.constant 0 : index
    %26 = vector.load %arg2[%c2, %c0_12, %c0_13] : memref<12x32x128xf32, #tpu.memory_space<vmem>>, vector<1x32x128xf32>
    %27 = vector.shape_cast %26 : vector<1x32x128xf32> to vector<32x128xf32>
    %28 = vector.broadcast %25 : vector<1x128xf32> to vector<32x128xf32>
    %29 = arith.mulf %28, %27 : vector<32x128xf32>
    %30 = arith.addf %24, %29 : vector<32x128xf32>
    %31 = vector.extract_strided_slice %12 {offsets = [3, 0], sizes = [1, 128], strides = [1, 1]} : vector<12x128xf32> to vector<1x128xf32>
    %c3 = arith.constant 3 : index
    %c0_14 = arith.constant 0 : index
    %c0_15 = arith.constant 0 : index
    %32 = vector.load %arg2[%c3, %c0_14, %c0_15] : memref<12x32x128xf32, #tpu.memory_space<vmem>>, vector<1x32x128xf32>
    %33 = vector.shape_cast %32 : vector<1x32x128xf32> to vector<32x128xf32>
    %34 = vector.broadcast %31 : vector<1x128xf32> to vector<32x128xf32>
    %35 = arith.mulf %34, %33 : vector<32x128xf32>
    %36 = vector.extract_strided_slice %12 {offsets = [4, 0], sizes = [1, 128], strides = [1, 1]} : vector<12x128xf32> to vector<1x128xf32>
    %c4 = arith.constant 4 : index
    %c0_16 = arith.constant 0 : index
    %c0_17 = arith.constant 0 : index
    %37 = vector.load %arg2[%c4, %c0_16, %c0_17] : memref<12x32x128xf32, #tpu.memory_space<vmem>>, vector<1x32x128xf32>
    %38 = vector.shape_cast %37 : vector<1x32x128xf32> to vector<32x128xf32>
    %39 = vector.broadcast %36 : vector<1x128xf32> to vector<32x128xf32>
    %40 = arith.mulf %39, %38 : vector<32x128xf32>
    %41 = arith.addf %35, %40 : vector<32x128xf32>
    %42 = vector.extract_strided_slice %12 {offsets = [5, 0], sizes = [1, 128], strides = [1, 1]} : vector<12x128xf32> to vector<1x128xf32>
    %c5 = arith.constant 5 : index
    %c0_18 = arith.constant 0 : index
    %c0_19 = arith.constant 0 : index
    %43 = vector.load %arg2[%c5, %c0_18, %c0_19] : memref<12x32x128xf32, #tpu.memory_space<vmem>>, vector<1x32x128xf32>
    %44 = vector.shape_cast %43 : vector<1x32x128xf32> to vector<32x128xf32>
    %45 = vector.broadcast %42 : vector<1x128xf32> to vector<32x128xf32>
    %46 = arith.mulf %45, %44 : vector<32x128xf32>
    %47 = arith.addf %41, %46 : vector<32x128xf32>
    %48 = vector.extract_strided_slice %12 {offsets = [6, 0], sizes = [1, 128], strides = [1, 1]} : vector<12x128xf32> to vector<1x128xf32>
    %c6 = arith.constant 6 : index
    %c0_20 = arith.constant 0 : index
    %c0_21 = arith.constant 0 : index
    %49 = vector.load %arg2[%c6, %c0_20, %c0_21] : memref<12x32x128xf32, #tpu.memory_space<vmem>>, vector<1x32x128xf32>
    %50 = vector.shape_cast %49 : vector<1x32x128xf32> to vector<32x128xf32>
    %51 = vector.broadcast %48 : vector<1x128xf32> to vector<32x128xf32>
    %52 = arith.mulf %51, %50 : vector<32x128xf32>
    %53 = vector.extract_strided_slice %12 {offsets = [7, 0], sizes = [1, 128], strides = [1, 1]} : vector<12x128xf32> to vector<1x128xf32>
    %c7 = arith.constant 7 : index
    %c0_22 = arith.constant 0 : index
    %c0_23 = arith.constant 0 : index
    %54 = vector.load %arg2[%c7, %c0_22, %c0_23] : memref<12x32x128xf32, #tpu.memory_space<vmem>>, vector<1x32x128xf32>
    %55 = vector.shape_cast %54 : vector<1x32x128xf32> to vector<32x128xf32>
    %56 = vector.broadcast %53 : vector<1x128xf32> to vector<32x128xf32>
    %57 = arith.mulf %56, %55 : vector<32x128xf32>
    %58 = arith.addf %52, %57 : vector<32x128xf32>
    %59 = vector.extract_strided_slice %12 {offsets = [8, 0], sizes = [1, 128], strides = [1, 1]} : vector<12x128xf32> to vector<1x128xf32>
    %c8 = arith.constant 8 : index
    %c0_24 = arith.constant 0 : index
    %c0_25 = arith.constant 0 : index
    %60 = vector.load %arg2[%c8, %c0_24, %c0_25] : memref<12x32x128xf32, #tpu.memory_space<vmem>>, vector<1x32x128xf32>
    %61 = vector.shape_cast %60 : vector<1x32x128xf32> to vector<32x128xf32>
    %62 = vector.broadcast %59 : vector<1x128xf32> to vector<32x128xf32>
    %63 = arith.mulf %62, %61 : vector<32x128xf32>
    %64 = arith.addf %58, %63 : vector<32x128xf32>
    %65 = vector.extract_strided_slice %12 {offsets = [9, 0], sizes = [1, 128], strides = [1, 1]} : vector<12x128xf32> to vector<1x128xf32>
    %c9 = arith.constant 9 : index
    %c0_26 = arith.constant 0 : index
    %c0_27 = arith.constant 0 : index
    %66 = vector.load %arg2[%c9, %c0_26, %c0_27] : memref<12x32x128xf32, #tpu.memory_space<vmem>>, vector<1x32x128xf32>
    %67 = vector.shape_cast %66 : vector<1x32x128xf32> to vector<32x128xf32>
    %68 = vector.broadcast %65 : vector<1x128xf32> to vector<32x128xf32>
    %69 = arith.mulf %68, %67 : vector<32x128xf32>
    %70 = vector.extract_strided_slice %12 {offsets = [10, 0], sizes = [1, 128], strides = [1, 1]} : vector<12x128xf32> to vector<1x128xf32>
    %c10 = arith.constant 10 : index
    %c0_28 = arith.constant 0 : index
    %c0_29 = arith.constant 0 : index
    %71 = vector.load %arg2[%c10, %c0_28, %c0_29] : memref<12x32x128xf32, #tpu.memory_space<vmem>>, vector<1x32x128xf32>
    %72 = vector.shape_cast %71 : vector<1x32x128xf32> to vector<32x128xf32>
    %73 = vector.broadcast %70 : vector<1x128xf32> to vector<32x128xf32>
    %74 = arith.mulf %73, %72 : vector<32x128xf32>
    %75 = arith.addf %69, %74 : vector<32x128xf32>
    %76 = vector.extract_strided_slice %12 {offsets = [11, 0], sizes = [1, 128], strides = [1, 1]} : vector<12x128xf32> to vector<1x128xf32>
    %c11 = arith.constant 11 : index
    %c0_30 = arith.constant 0 : index
    %c0_31 = arith.constant 0 : index
    %77 = vector.load %arg2[%c11, %c0_30, %c0_31] : memref<12x32x128xf32, #tpu.memory_space<vmem>>, vector<1x32x128xf32>
    %78 = vector.shape_cast %77 : vector<1x32x128xf32> to vector<32x128xf32>
    %79 = vector.broadcast %76 : vector<1x128xf32> to vector<32x128xf32>
    %80 = arith.mulf %79, %78 : vector<32x128xf32>
    %81 = arith.addf %75, %80 : vector<32x128xf32>
    %82 = arith.addf %13, %30 : vector<32x128xf32>
    %83 = arith.addf %47, %64 : vector<32x128xf32>
    %84 = arith.addf %82, %83 : vector<32x128xf32>
    %85 = arith.addf %84, %81 : vector<32x128xf32>
    %cst = arith.constant dense<0.000000e+00> : vector<32xf32>
    %86 = vector.multi_reduction <add>, %85, %cst [1] : vector<32x128xf32> to vector<32xf32>
    %87 = vector.shape_cast %86 : vector<32xf32> to vector<32x1xf32>
    %cst_32 = arith.constant 1.280000e+02 : f32
    %88 = vector.broadcast %cst_32 : f32 to vector<32x1xf32>
    %89 = arith.divf %87, %88 : vector<32x1xf32>
    %90 = vector.broadcast %89 : vector<32x1xf32> to vector<32x128xf32>
    %91 = arith.subf %85, %90 : vector<32x128xf32>
    %92 = arith.mulf %91, %91 : vector<32x128xf32>
    %cst_33 = arith.constant dense<0.000000e+00> : vector<32xf32>
    %93 = vector.multi_reduction <add>, %92, %cst_33 [1] : vector<32x128xf32> to vector<32xf32>
    %94 = vector.shape_cast %93 : vector<32xf32> to vector<32x1xf32>
    %cst_34 = arith.constant 1.280000e+02 : f32
    %95 = vector.broadcast %cst_34 : f32 to vector<32x1xf32>
    %96 = arith.divf %94, %95 : vector<32x1xf32>
    %cst_35 = arith.constant 9.99999974E-6 : f32
    %97 = vector.broadcast %cst_35 : f32 to vector<32x1xf32>
    %98 = arith.addf %96, %97 : vector<32x1xf32>
    %99 = math.rsqrt %98 : vector<32x1xf32>
    %c0_36 = arith.constant 0 : index
    %c0_37 = arith.constant 0 : index
    %100 = vector.load %arg4[%c0_36, %c0_37] : memref<32x1xf32, #tpu.memory_space<vmem>>, vector<32x1xf32>
    %c0_38 = arith.constant 0 : index
    %c0_39 = arith.constant 0 : index
    %101 = vector.load %arg5[%c0_38, %c0_39] : memref<32x1xf32, #tpu.memory_space<vmem>>, vector<32x1xf32>
    %102 = arith.mulf %99, %100 : vector<32x1xf32>
    %103 = arith.mulf %89, %102 : vector<32x1xf32>
    %104 = arith.subf %101, %103 : vector<32x1xf32>
    %c0_40 = arith.constant 0 : index
    %c0_41 = arith.constant 0 : index
    %105 = vector.load %arg6[%c0_40, %c0_41] : memref<16x32xf32, #tpu.memory_space<vmem>>, vector<16x32xf32>
    %106 = vector.broadcast %102 : vector<32x1xf32> to vector<32x128xf32>
    %107 = arith.mulf %85, %106 : vector<32x128xf32>
    %108 = vector.broadcast %104 : vector<32x1xf32> to vector<32x128xf32>
    %109 = arith.addf %107, %108 : vector<32x128xf32>
    %cst_42 = arith.constant dense<0.000000e+00> : vector<16x128xf32>
    %110 = tpu.matmul %105, %109, %cst_42 {dimension_numbers = #tpu.dot_dimension_numbers<[1], [0], [0], [1], [0, 0, 1, 1], [], []>} : vector<16x32xf32>, vector<32x128xf32>, vector<16x128xf32> -> vector<16x128xf32>
    %c0_43 = arith.constant 0 : index
    %c0_44 = arith.constant 0 : index
    %111 = vector.load %arg7[%c0_43, %c0_44] : memref<16x1xf32, #tpu.memory_space<vmem>>, vector<16x1xf32>
    %112 = vector.broadcast %111 : vector<16x1xf32> to vector<16x128xf32>
    %113 = arith.addf %110, %112 : vector<16x128xf32>
    %c0_45 = arith.constant 0 : index
    %c0_46 = arith.constant 0 : index
    %114 = vector.load %arg8[%c0_45, %c0_46] : memref<32x1xf32, #tpu.memory_space<vmem>>, vector<32x1xf32>
    %c0_47 = arith.constant 0 : index
    %c0_48 = arith.constant 0 : index
    %115 = vector.load %arg9[%c0_47, %c0_48] : memref<32x1xf32, #tpu.memory_space<vmem>>, vector<32x1xf32>
    %116 = arith.mulf %99, %114 : vector<32x1xf32>
    %117 = arith.mulf %89, %116 : vector<32x1xf32>
    %118 = arith.subf %115, %117 : vector<32x1xf32>
    %119 = vector.broadcast %116 : vector<32x1xf32> to vector<32x128xf32>
    %120 = arith.mulf %85, %119 : vector<32x128xf32>
    %121 = vector.broadcast %118 : vector<32x1xf32> to vector<32x128xf32>
    %122 = arith.addf %120, %121 : vector<32x128xf32>
    %cst_49 = arith.constant 0.000000e+00 : f32
    %123 = vector.broadcast %cst_49 : f32 to vector<32x128xf32>
    %124 = arith.cmpf oge, %122, %123 : vector<32x128xf32>
    %cst_50 = arith.constant 0.00999999977 : f32
    %125 = vector.broadcast %cst_50 : f32 to vector<32x128xf32>
    %126 = arith.mulf %125, %122 : vector<32x128xf32>
    %127 = arith.select %124, %122, %126 : vector<32x128xi1>, vector<32x128xf32>
    %c0_51 = arith.constant 0 : index
    %c0_52 = arith.constant 0 : index
    %128 = vector.load %arg11[%c0_51, %c0_52] : memref<16x1xf32, #tpu.memory_space<vmem>>, vector<16x1xf32>
    %c9_i32 = arith.constant 9 : i32
    %129 = tpu.dynamic_rotate %127 by %c9_i32 dim 1 : vector<32x128xf32>, i32 -> vector<32x128xf32>
    %130 = vector.extract_strided_slice %1 {offsets = [0, 0], sizes = [1, 128], strides = [1, 1]} : vector<9x128xf32> to vector<1x128xf32>
    %131 = vector.broadcast %130 : vector<1x128xf32> to vector<32x128xf32>
    %132 = arith.mulf %129, %131 : vector<32x128xf32>
    %c8_i32 = arith.constant 8 : i32
    %133 = tpu.dynamic_rotate %127 by %c8_i32 dim 1 : vector<32x128xf32>, i32 -> vector<32x128xf32>
    %134 = vector.extract_strided_slice %1 {offsets = [1, 0], sizes = [1, 128], strides = [1, 1]} : vector<9x128xf32> to vector<1x128xf32>
    %135 = vector.broadcast %134 : vector<1x128xf32> to vector<32x128xf32>
    %136 = arith.mulf %133, %135 : vector<32x128xf32>
    %c7_i32 = arith.constant 7 : i32
    %137 = tpu.dynamic_rotate %127 by %c7_i32 dim 1 : vector<32x128xf32>, i32 -> vector<32x128xf32>
    %138 = vector.extract_strided_slice %1 {offsets = [2, 0], sizes = [1, 128], strides = [1, 1]} : vector<9x128xf32> to vector<1x128xf32>
    %139 = vector.broadcast %138 : vector<1x128xf32> to vector<32x128xf32>
    %140 = arith.mulf %137, %139 : vector<32x128xf32>
    %c1_i32 = arith.constant 1 : i32
    %141 = tpu.dynamic_rotate %127 by %c1_i32 dim 1 : vector<32x128xf32>, i32 -> vector<32x128xf32>
    %142 = vector.extract_strided_slice %1 {offsets = [3, 0], sizes = [1, 128], strides = [1, 1]} : vector<9x128xf32> to vector<1x128xf32>
    %143 = vector.broadcast %142 : vector<1x128xf32> to vector<32x128xf32>
    %144 = arith.mulf %141, %143 : vector<32x128xf32>
    %c127_i32 = arith.constant 127 : i32
    %145 = tpu.dynamic_rotate %127 by %c127_i32 dim 1 : vector<32x128xf32>, i32 -> vector<32x128xf32>
    %146 = vector.extract_strided_slice %1 {offsets = [5, 0], sizes = [1, 128], strides = [1, 1]} : vector<9x128xf32> to vector<1x128xf32>
    %147 = vector.broadcast %146 : vector<1x128xf32> to vector<32x128xf32>
    %148 = arith.mulf %145, %147 : vector<32x128xf32>
    %c121_i32 = arith.constant 121 : i32
    %149 = tpu.dynamic_rotate %127 by %c121_i32 dim 1 : vector<32x128xf32>, i32 -> vector<32x128xf32>
    %150 = vector.extract_strided_slice %1 {offsets = [6, 0], sizes = [1, 128], strides = [1, 1]} : vector<9x128xf32> to vector<1x128xf32>
    %151 = vector.broadcast %150 : vector<1x128xf32> to vector<32x128xf32>
    %152 = arith.mulf %149, %151 : vector<32x128xf32>
    %c120_i32 = arith.constant 120 : i32
    %153 = tpu.dynamic_rotate %127 by %c120_i32 dim 1 : vector<32x128xf32>, i32 -> vector<32x128xf32>
    %154 = vector.extract_strided_slice %1 {offsets = [7, 0], sizes = [1, 128], strides = [1, 1]} : vector<9x128xf32> to vector<1x128xf32>
    %155 = vector.broadcast %154 : vector<1x128xf32> to vector<32x128xf32>
    %156 = arith.mulf %153, %155 : vector<32x128xf32>
    %c119_i32 = arith.constant 119 : i32
    %157 = tpu.dynamic_rotate %127 by %c119_i32 dim 1 : vector<32x128xf32>, i32 -> vector<32x128xf32>
    %158 = vector.extract_strided_slice %1 {offsets = [8, 0], sizes = [1, 128], strides = [1, 1]} : vector<9x128xf32> to vector<1x128xf32>
    %159 = vector.broadcast %158 : vector<1x128xf32> to vector<32x128xf32>
    %160 = arith.mulf %157, %159 : vector<32x128xf32>
    %c0_53 = arith.constant 0 : index
    %c0_54 = arith.constant 0 : index
    %c0_55 = arith.constant 0 : index
    %161 = vector.load %arg10[%c0_53, %c0_54, %c0_55] : memref<9x16x32xf32, #tpu.memory_space<vmem>>, vector<1x16x32xf32>
    %162 = vector.shape_cast %161 : vector<1x16x32xf32> to vector<16x32xf32>
    %cst_56 = arith.constant dense<0.000000e+00> : vector<16x128xf32>
    %163 = tpu.matmul %162, %132, %cst_56 {dimension_numbers = #tpu.dot_dimension_numbers<[1], [0], [0], [1], [0, 0, 1, 1], [], []>} : vector<16x32xf32>, vector<32x128xf32>, vector<16x128xf32> -> vector<16x128xf32>
    %c1_57 = arith.constant 1 : index
    %c0_58 = arith.constant 0 : index
    %c0_59 = arith.constant 0 : index
    %164 = vector.load %arg10[%c1_57, %c0_58, %c0_59] : memref<9x16x32xf32, #tpu.memory_space<vmem>>, vector<1x16x32xf32>
    %165 = vector.shape_cast %164 : vector<1x16x32xf32> to vector<16x32xf32>
    %cst_60 = arith.constant dense<0.000000e+00> : vector<16x128xf32>
    %166 = tpu.matmul %165, %136, %cst_60 {dimension_numbers = #tpu.dot_dimension_numbers<[1], [0], [0], [1], [0, 0, 1, 1], [], []>} : vector<16x32xf32>, vector<32x128xf32>, vector<16x128xf32> -> vector<16x128xf32>
    %c2_61 = arith.constant 2 : index
    %c0_62 = arith.constant 0 : index
    %c0_63 = arith.constant 0 : index
    %167 = vector.load %arg10[%c2_61, %c0_62, %c0_63] : memref<9x16x32xf32, #tpu.memory_space<vmem>>, vector<1x16x32xf32>
    %168 = vector.shape_cast %167 : vector<1x16x32xf32> to vector<16x32xf32>
    %cst_64 = arith.constant dense<0.000000e+00> : vector<16x128xf32>
    %169 = tpu.matmul %168, %140, %cst_64 {dimension_numbers = #tpu.dot_dimension_numbers<[1], [0], [0], [1], [0, 0, 1, 1], [], []>} : vector<16x32xf32>, vector<32x128xf32>, vector<16x128xf32> -> vector<16x128xf32>
    %c3_65 = arith.constant 3 : index
    %c0_66 = arith.constant 0 : index
    %c0_67 = arith.constant 0 : index
    %170 = vector.load %arg10[%c3_65, %c0_66, %c0_67] : memref<9x16x32xf32, #tpu.memory_space<vmem>>, vector<1x16x32xf32>
    %171 = vector.shape_cast %170 : vector<1x16x32xf32> to vector<16x32xf32>
    %cst_68 = arith.constant dense<0.000000e+00> : vector<16x128xf32>
    %172 = tpu.matmul %171, %144, %cst_68 {dimension_numbers = #tpu.dot_dimension_numbers<[1], [0], [0], [1], [0, 0, 1, 1], [], []>} : vector<16x32xf32>, vector<32x128xf32>, vector<16x128xf32> -> vector<16x128xf32>
    %c4_69 = arith.constant 4 : index
    %c0_70 = arith.constant 0 : index
    %c0_71 = arith.constant 0 : index
    %173 = vector.load %arg10[%c4_69, %c0_70, %c0_71] : memref<9x16x32xf32, #tpu.memory_space<vmem>>, vector<1x16x32xf32>
    %174 = vector.shape_cast %173 : vector<1x16x32xf32> to vector<16x32xf32>
    %cst_72 = arith.constant dense<0.000000e+00> : vector<16x128xf32>
    %175 = tpu.matmul %174, %127, %cst_72 {dimension_numbers = #tpu.dot_dimension_numbers<[1], [0], [0], [1], [0, 0, 1, 1], [], []>} : vector<16x32xf32>, vector<32x128xf32>, vector<16x128xf32> -> vector<16x128xf32>
    %c5_73 = arith.constant 5 : index
    %c0_74 = arith.constant 0 : index
    %c0_75 = arith.constant 0 : index
    %176 = vector.load %arg10[%c5_73, %c0_74, %c0_75] : memref<9x16x32xf32, #tpu.memory_space<vmem>>, vector<1x16x32xf32>
    %177 = vector.shape_cast %176 : vector<1x16x32xf32> to vector<16x32xf32>
    %cst_76 = arith.constant dense<0.000000e+00> : vector<16x128xf32>
    %178 = tpu.matmul %177, %148, %cst_76 {dimension_numbers = #tpu.dot_dimension_numbers<[1], [0], [0], [1], [0, 0, 1, 1], [], []>} : vector<16x32xf32>, vector<32x128xf32>, vector<16x128xf32> -> vector<16x128xf32>
    %c6_77 = arith.constant 6 : index
    %c0_78 = arith.constant 0 : index
    %c0_79 = arith.constant 0 : index
    %179 = vector.load %arg10[%c6_77, %c0_78, %c0_79] : memref<9x16x32xf32, #tpu.memory_space<vmem>>, vector<1x16x32xf32>
    %180 = vector.shape_cast %179 : vector<1x16x32xf32> to vector<16x32xf32>
    %cst_80 = arith.constant dense<0.000000e+00> : vector<16x128xf32>
    %181 = tpu.matmul %180, %152, %cst_80 {dimension_numbers = #tpu.dot_dimension_numbers<[1], [0], [0], [1], [0, 0, 1, 1], [], []>} : vector<16x32xf32>, vector<32x128xf32>, vector<16x128xf32> -> vector<16x128xf32>
    %c7_81 = arith.constant 7 : index
    %c0_82 = arith.constant 0 : index
    %c0_83 = arith.constant 0 : index
    %182 = vector.load %arg10[%c7_81, %c0_82, %c0_83] : memref<9x16x32xf32, #tpu.memory_space<vmem>>, vector<1x16x32xf32>
    %183 = vector.shape_cast %182 : vector<1x16x32xf32> to vector<16x32xf32>
    %cst_84 = arith.constant dense<0.000000e+00> : vector<16x128xf32>
    %184 = tpu.matmul %183, %156, %cst_84 {dimension_numbers = #tpu.dot_dimension_numbers<[1], [0], [0], [1], [0, 0, 1, 1], [], []>} : vector<16x32xf32>, vector<32x128xf32>, vector<16x128xf32> -> vector<16x128xf32>
    %c8_85 = arith.constant 8 : index
    %c0_86 = arith.constant 0 : index
    %c0_87 = arith.constant 0 : index
    %185 = vector.load %arg10[%c8_85, %c0_86, %c0_87] : memref<9x16x32xf32, #tpu.memory_space<vmem>>, vector<1x16x32xf32>
    %186 = vector.shape_cast %185 : vector<1x16x32xf32> to vector<16x32xf32>
    %cst_88 = arith.constant dense<0.000000e+00> : vector<16x128xf32>
    %187 = tpu.matmul %186, %160, %cst_88 {dimension_numbers = #tpu.dot_dimension_numbers<[1], [0], [0], [1], [0, 0, 1, 1], [], []>} : vector<16x32xf32>, vector<32x128xf32>, vector<16x128xf32> -> vector<16x128xf32>
    %188 = arith.addf %163, %166 : vector<16x128xf32>
    %189 = arith.addf %169, %172 : vector<16x128xf32>
    %190 = arith.addf %175, %178 : vector<16x128xf32>
    %191 = arith.addf %181, %184 : vector<16x128xf32>
    %192 = arith.addf %188, %189 : vector<16x128xf32>
    %193 = arith.addf %190, %191 : vector<16x128xf32>
    %194 = arith.addf %192, %193 : vector<16x128xf32>
    %195 = arith.addf %194, %187 : vector<16x128xf32>
    %196 = vector.broadcast %128 : vector<16x1xf32> to vector<16x128xf32>
    %197 = arith.addf %195, %196 : vector<16x128xf32>
    %198 = arith.addf %197, %113 : vector<16x128xf32>
    %c0_89 = arith.constant 0 : index
    %c0_90 = arith.constant 0 : index
    %199 = vector.load %arg12[%c0_89, %c0_90] : memref<16x8xf32, #tpu.memory_space<vmem>>, vector<16x8xf32>
    %200 = vector.extract_strided_slice %12 {offsets = [0, 0], sizes = [8, 128], strides = [1, 1]} : vector<12x128xf32> to vector<8x128xf32>
    %cst_91 = arith.constant dense<0.000000e+00> : vector<16x128xf32>
    %201 = tpu.matmul %199, %200, %cst_91 {dimension_numbers = #tpu.dot_dimension_numbers<[1], [0], [0], [1], [0, 0, 1, 1], [], []>} : vector<16x8xf32>, vector<8x128xf32>, vector<16x128xf32> -> vector<16x128xf32>
    %c0_92 = arith.constant 0 : index
    %c0_93 = arith.constant 0 : index
    %202 = vector.load %arg13[%c0_92, %c0_93] : memref<16x1xf32, #tpu.memory_space<vmem>>, vector<16x1xf32>
    %203 = vector.broadcast %202 : vector<16x1xf32> to vector<16x128xf32>
    %204 = arith.addf %201, %203 : vector<16x128xf32>
    %205 = arith.addf %198, %204 : vector<16x128xf32>
    %cst_94 = arith.constant dense<0.000000e+00> : vector<16xf32>
    %206 = vector.multi_reduction <add>, %205, %cst_94 [1] : vector<16x128xf32> to vector<16xf32>
    %207 = vector.shape_cast %206 : vector<16xf32> to vector<16x1xf32>
    %cst_95 = arith.constant 1.280000e+02 : f32
    %208 = vector.broadcast %cst_95 : f32 to vector<16x1xf32>
    %209 = arith.divf %207, %208 : vector<16x1xf32>
    %210 = vector.broadcast %209 : vector<16x1xf32> to vector<16x128xf32>
    %211 = arith.subf %205, %210 : vector<16x128xf32>
    %212 = arith.mulf %211, %211 : vector<16x128xf32>
    %cst_96 = arith.constant dense<0.000000e+00> : vector<16xf32>
    %213 = vector.multi_reduction <add>, %212, %cst_96 [1] : vector<16x128xf32> to vector<16xf32>
    %214 = vector.shape_cast %213 : vector<16xf32> to vector<16x1xf32>
    %cst_97 = arith.constant 1.280000e+02 : f32
    %215 = vector.broadcast %cst_97 : f32 to vector<16x1xf32>
    %216 = arith.divf %214, %215 : vector<16x1xf32>
    %cst_98 = arith.constant 9.99999974E-6 : f32
    %217 = vector.broadcast %cst_98 : f32 to vector<16x1xf32>
    %218 = arith.addf %216, %217 : vector<16x1xf32>
    %219 = math.rsqrt %218 : vector<16x1xf32>
    %c0_99 = arith.constant 0 : index
    %c0_100 = arith.constant 0 : index
    %220 = vector.load %arg14[%c0_99, %c0_100] : memref<16x1xf32, #tpu.memory_space<vmem>>, vector<16x1xf32>
    %c0_101 = arith.constant 0 : index
    %c0_102 = arith.constant 0 : index
    %221 = vector.load %arg15[%c0_101, %c0_102] : memref<16x1xf32, #tpu.memory_space<vmem>>, vector<16x1xf32>
    %222 = arith.mulf %219, %220 : vector<16x1xf32>
    %223 = arith.mulf %209, %222 : vector<16x1xf32>
    %224 = arith.subf %221, %223 : vector<16x1xf32>
    %225 = vector.broadcast %222 : vector<16x1xf32> to vector<16x128xf32>
    %226 = arith.mulf %205, %225 : vector<16x128xf32>
    %227 = vector.broadcast %224 : vector<16x1xf32> to vector<16x128xf32>
    %228 = arith.addf %226, %227 : vector<16x128xf32>
    %cst_103 = arith.constant 0.000000e+00 : f32
    %229 = vector.broadcast %cst_103 : f32 to vector<16x128xf32>
    %230 = arith.cmpf oge, %228, %229 : vector<16x128xf32>
    %cst_104 = arith.constant 0.00999999977 : f32
    %231 = vector.broadcast %cst_104 : f32 to vector<16x128xf32>
    %232 = arith.mulf %231, %228 : vector<16x128xf32>
    %233 = arith.select %230, %228, %232 : vector<16x128xi1>, vector<16x128xf32>
    %c0_105 = arith.constant 0 : index
    %c0_106 = arith.constant 0 : index
    %234 = vector.load %arg17[%c0_105, %c0_106] : memref<16x1xf32, #tpu.memory_space<vmem>>, vector<16x1xf32>
    %c9_i32_107 = arith.constant 9 : i32
    %235 = tpu.dynamic_rotate %233 by %c9_i32_107 dim 1 : vector<16x128xf32>, i32 -> vector<16x128xf32>
    %236 = vector.extract_strided_slice %1 {offsets = [0, 0], sizes = [1, 128], strides = [1, 1]} : vector<9x128xf32> to vector<1x128xf32>
    %237 = vector.broadcast %236 : vector<1x128xf32> to vector<16x128xf32>
    %238 = arith.mulf %235, %237 : vector<16x128xf32>
    %c8_i32_108 = arith.constant 8 : i32
    %239 = tpu.dynamic_rotate %233 by %c8_i32_108 dim 1 : vector<16x128xf32>, i32 -> vector<16x128xf32>
    %240 = vector.extract_strided_slice %1 {offsets = [1, 0], sizes = [1, 128], strides = [1, 1]} : vector<9x128xf32> to vector<1x128xf32>
    %241 = vector.broadcast %240 : vector<1x128xf32> to vector<16x128xf32>
    %242 = arith.mulf %239, %241 : vector<16x128xf32>
    %c7_i32_109 = arith.constant 7 : i32
    %243 = tpu.dynamic_rotate %233 by %c7_i32_109 dim 1 : vector<16x128xf32>, i32 -> vector<16x128xf32>
    %244 = vector.extract_strided_slice %1 {offsets = [2, 0], sizes = [1, 128], strides = [1, 1]} : vector<9x128xf32> to vector<1x128xf32>
    %245 = vector.broadcast %244 : vector<1x128xf32> to vector<16x128xf32>
    %246 = arith.mulf %243, %245 : vector<16x128xf32>
    %c1_i32_110 = arith.constant 1 : i32
    %247 = tpu.dynamic_rotate %233 by %c1_i32_110 dim 1 : vector<16x128xf32>, i32 -> vector<16x128xf32>
    %248 = vector.extract_strided_slice %1 {offsets = [3, 0], sizes = [1, 128], strides = [1, 1]} : vector<9x128xf32> to vector<1x128xf32>
    %249 = vector.broadcast %248 : vector<1x128xf32> to vector<16x128xf32>
    %250 = arith.mulf %247, %249 : vector<16x128xf32>
    %c127_i32_111 = arith.constant 127 : i32
    %251 = tpu.dynamic_rotate %233 by %c127_i32_111 dim 1 : vector<16x128xf32>, i32 -> vector<16x128xf32>
    %252 = vector.extract_strided_slice %1 {offsets = [5, 0], sizes = [1, 128], strides = [1, 1]} : vector<9x128xf32> to vector<1x128xf32>
    %253 = vector.broadcast %252 : vector<1x128xf32> to vector<16x128xf32>
    %254 = arith.mulf %251, %253 : vector<16x128xf32>
    %c121_i32_112 = arith.constant 121 : i32
    %255 = tpu.dynamic_rotate %233 by %c121_i32_112 dim 1 : vector<16x128xf32>, i32 -> vector<16x128xf32>
    %256 = vector.extract_strided_slice %1 {offsets = [6, 0], sizes = [1, 128], strides = [1, 1]} : vector<9x128xf32> to vector<1x128xf32>
    %257 = vector.broadcast %256 : vector<1x128xf32> to vector<16x128xf32>
    %258 = arith.mulf %255, %257 : vector<16x128xf32>
    %c120_i32_113 = arith.constant 120 : i32
    %259 = tpu.dynamic_rotate %233 by %c120_i32_113 dim 1 : vector<16x128xf32>, i32 -> vector<16x128xf32>
    %260 = vector.extract_strided_slice %1 {offsets = [7, 0], sizes = [1, 128], strides = [1, 1]} : vector<9x128xf32> to vector<1x128xf32>
    %261 = vector.broadcast %260 : vector<1x128xf32> to vector<16x128xf32>
    %262 = arith.mulf %259, %261 : vector<16x128xf32>
    %c119_i32_114 = arith.constant 119 : i32
    %263 = tpu.dynamic_rotate %233 by %c119_i32_114 dim 1 : vector<16x128xf32>, i32 -> vector<16x128xf32>
    %264 = vector.extract_strided_slice %1 {offsets = [8, 0], sizes = [1, 128], strides = [1, 1]} : vector<9x128xf32> to vector<1x128xf32>
    %265 = vector.broadcast %264 : vector<1x128xf32> to vector<16x128xf32>
    %266 = arith.mulf %263, %265 : vector<16x128xf32>
    %c0_115 = arith.constant 0 : index
    %c0_116 = arith.constant 0 : index
    %c0_117 = arith.constant 0 : index
    %267 = vector.load %arg16[%c0_115, %c0_116, %c0_117] : memref<9x16x16xf32, #tpu.memory_space<vmem>>, vector<1x16x16xf32>
    %268 = vector.shape_cast %267 : vector<1x16x16xf32> to vector<16x16xf32>
    %cst_118 = arith.constant dense<0.000000e+00> : vector<16x128xf32>
    %269 = tpu.matmul %268, %238, %cst_118 {dimension_numbers = #tpu.dot_dimension_numbers<[1], [0], [0], [1], [0, 0, 1, 1], [], []>} : vector<16x16xf32>, vector<16x128xf32>, vector<16x128xf32> -> vector<16x128xf32>
    %c1_119 = arith.constant 1 : index
    %c0_120 = arith.constant 0 : index
    %c0_121 = arith.constant 0 : index
    %270 = vector.load %arg16[%c1_119, %c0_120, %c0_121] : memref<9x16x16xf32, #tpu.memory_space<vmem>>, vector<1x16x16xf32>
    %271 = vector.shape_cast %270 : vector<1x16x16xf32> to vector<16x16xf32>
    %cst_122 = arith.constant dense<0.000000e+00> : vector<16x128xf32>
    %272 = tpu.matmul %271, %242, %cst_122 {dimension_numbers = #tpu.dot_dimension_numbers<[1], [0], [0], [1], [0, 0, 1, 1], [], []>} : vector<16x16xf32>, vector<16x128xf32>, vector<16x128xf32> -> vector<16x128xf32>
    %c2_123 = arith.constant 2 : index
    %c0_124 = arith.constant 0 : index
    %c0_125 = arith.constant 0 : index
    %273 = vector.load %arg16[%c2_123, %c0_124, %c0_125] : memref<9x16x16xf32, #tpu.memory_space<vmem>>, vector<1x16x16xf32>
    %274 = vector.shape_cast %273 : vector<1x16x16xf32> to vector<16x16xf32>
    %cst_126 = arith.constant dense<0.000000e+00> : vector<16x128xf32>
    %275 = tpu.matmul %274, %246, %cst_126 {dimension_numbers = #tpu.dot_dimension_numbers<[1], [0], [0], [1], [0, 0, 1, 1], [], []>} : vector<16x16xf32>, vector<16x128xf32>, vector<16x128xf32> -> vector<16x128xf32>
    %c3_127 = arith.constant 3 : index
    %c0_128 = arith.constant 0 : index
    %c0_129 = arith.constant 0 : index
    %276 = vector.load %arg16[%c3_127, %c0_128, %c0_129] : memref<9x16x16xf32, #tpu.memory_space<vmem>>, vector<1x16x16xf32>
    %277 = vector.shape_cast %276 : vector<1x16x16xf32> to vector<16x16xf32>
    %cst_130 = arith.constant dense<0.000000e+00> : vector<16x128xf32>
    %278 = tpu.matmul %277, %250, %cst_130 {dimension_numbers = #tpu.dot_dimension_numbers<[1], [0], [0], [1], [0, 0, 1, 1], [], []>} : vector<16x16xf32>, vector<16x128xf32>, vector<16x128xf32> -> vector<16x128xf32>
    %c4_131 = arith.constant 4 : index
    %c0_132 = arith.constant 0 : index
    %c0_133 = arith.constant 0 : index
    %279 = vector.load %arg16[%c4_131, %c0_132, %c0_133] : memref<9x16x16xf32, #tpu.memory_space<vmem>>, vector<1x16x16xf32>
    %280 = vector.shape_cast %279 : vector<1x16x16xf32> to vector<16x16xf32>
    %cst_134 = arith.constant dense<0.000000e+00> : vector<16x128xf32>
    %281 = tpu.matmul %280, %233, %cst_134 {dimension_numbers = #tpu.dot_dimension_numbers<[1], [0], [0], [1], [0, 0, 1, 1], [], []>} : vector<16x16xf32>, vector<16x128xf32>, vector<16x128xf32> -> vector<16x128xf32>
    %c5_135 = arith.constant 5 : index
    %c0_136 = arith.constant 0 : index
    %c0_137 = arith.constant 0 : index
    %282 = vector.load %arg16[%c5_135, %c0_136, %c0_137] : memref<9x16x16xf32, #tpu.memory_space<vmem>>, vector<1x16x16xf32>
    %283 = vector.shape_cast %282 : vector<1x16x16xf32> to vector<16x16xf32>
    %cst_138 = arith.constant dense<0.000000e+00> : vector<16x128xf32>
    %284 = tpu.matmul %283, %254, %cst_138 {dimension_numbers = #tpu.dot_dimension_numbers<[1], [0], [0], [1], [0, 0, 1, 1], [], []>} : vector<16x16xf32>, vector<16x128xf32>, vector<16x128xf32> -> vector<16x128xf32>
    %c6_139 = arith.constant 6 : index
    %c0_140 = arith.constant 0 : index
    %c0_141 = arith.constant 0 : index
    %285 = vector.load %arg16[%c6_139, %c0_140, %c0_141] : memref<9x16x16xf32, #tpu.memory_space<vmem>>, vector<1x16x16xf32>
    %286 = vector.shape_cast %285 : vector<1x16x16xf32> to vector<16x16xf32>
    %cst_142 = arith.constant dense<0.000000e+00> : vector<16x128xf32>
    %287 = tpu.matmul %286, %258, %cst_142 {dimension_numbers = #tpu.dot_dimension_numbers<[1], [0], [0], [1], [0, 0, 1, 1], [], []>} : vector<16x16xf32>, vector<16x128xf32>, vector<16x128xf32> -> vector<16x128xf32>
    %c7_143 = arith.constant 7 : index
    %c0_144 = arith.constant 0 : index
    %c0_145 = arith.constant 0 : index
    %288 = vector.load %arg16[%c7_143, %c0_144, %c0_145] : memref<9x16x16xf32, #tpu.memory_space<vmem>>, vector<1x16x16xf32>
    %289 = vector.shape_cast %288 : vector<1x16x16xf32> to vector<16x16xf32>
    %cst_146 = arith.constant dense<0.000000e+00> : vector<16x128xf32>
    %290 = tpu.matmul %289, %262, %cst_146 {dimension_numbers = #tpu.dot_dimension_numbers<[1], [0], [0], [1], [0, 0, 1, 1], [], []>} : vector<16x16xf32>, vector<16x128xf32>, vector<16x128xf32> -> vector<16x128xf32>
    %c8_147 = arith.constant 8 : index
    %c0_148 = arith.constant 0 : index
    %c0_149 = arith.constant 0 : index
    %291 = vector.load %arg16[%c8_147, %c0_148, %c0_149] : memref<9x16x16xf32, #tpu.memory_space<vmem>>, vector<1x16x16xf32>
    %292 = vector.shape_cast %291 : vector<1x16x16xf32> to vector<16x16xf32>
    %cst_150 = arith.constant dense<0.000000e+00> : vector<16x128xf32>
    %293 = tpu.matmul %292, %266, %cst_150 {dimension_numbers = #tpu.dot_dimension_numbers<[1], [0], [0], [1], [0, 0, 1, 1], [], []>} : vector<16x16xf32>, vector<16x128xf32>, vector<16x128xf32> -> vector<16x128xf32>
    %294 = arith.addf %269, %272 : vector<16x128xf32>
    %295 = arith.addf %275, %278 : vector<16x128xf32>
    %296 = arith.addf %281, %284 : vector<16x128xf32>
    %297 = arith.addf %287, %290 : vector<16x128xf32>
    %298 = arith.addf %294, %295 : vector<16x128xf32>
    %299 = arith.addf %296, %297 : vector<16x128xf32>
    %300 = arith.addf %298, %299 : vector<16x128xf32>
    %301 = arith.addf %300, %293 : vector<16x128xf32>
    %302 = vector.broadcast %234 : vector<16x1xf32> to vector<16x128xf32>
    %303 = arith.addf %301, %302 : vector<16x128xf32>
    %cst_151 = arith.constant dense<0.000000e+00> : vector<16xf32>
    %304 = vector.multi_reduction <add>, %303, %cst_151 [1] : vector<16x128xf32> to vector<16xf32>
    %305 = vector.shape_cast %304 : vector<16xf32> to vector<16x1xf32>
    %cst_152 = arith.constant 1.280000e+02 : f32
    %306 = vector.broadcast %cst_152 : f32 to vector<16x1xf32>
    %307 = arith.divf %305, %306 : vector<16x1xf32>
    %308 = vector.broadcast %307 : vector<16x1xf32> to vector<16x128xf32>
    %309 = arith.subf %303, %308 : vector<16x128xf32>
    %310 = arith.mulf %309, %309 : vector<16x128xf32>
    %cst_153 = arith.constant dense<0.000000e+00> : vector<16xf32>
    %311 = vector.multi_reduction <add>, %310, %cst_153 [1] : vector<16x128xf32> to vector<16xf32>
    %312 = vector.shape_cast %311 : vector<16xf32> to vector<16x1xf32>
    %cst_154 = arith.constant 1.280000e+02 : f32
    %313 = vector.broadcast %cst_154 : f32 to vector<16x1xf32>
    %314 = arith.divf %312, %313 : vector<16x1xf32>
    %cst_155 = arith.constant 9.99999974E-6 : f32
    %315 = vector.broadcast %cst_155 : f32 to vector<16x1xf32>
    %316 = arith.addf %314, %315 : vector<16x1xf32>
    %317 = math.rsqrt %316 : vector<16x1xf32>
    %c0_156 = arith.constant 0 : index
    %c0_157 = arith.constant 0 : index
    %318 = vector.load %arg18[%c0_156, %c0_157] : memref<16x1xf32, #tpu.memory_space<vmem>>, vector<16x1xf32>
    %c0_158 = arith.constant 0 : index
    %c0_159 = arith.constant 0 : index
    %319 = vector.load %arg19[%c0_158, %c0_159] : memref<16x1xf32, #tpu.memory_space<vmem>>, vector<16x1xf32>
    %320 = arith.mulf %317, %318 : vector<16x1xf32>
    %321 = arith.mulf %307, %320 : vector<16x1xf32>
    %322 = arith.subf %319, %321 : vector<16x1xf32>
    %323 = vector.broadcast %320 : vector<16x1xf32> to vector<16x128xf32>
    %324 = arith.mulf %303, %323 : vector<16x128xf32>
    %325 = vector.broadcast %322 : vector<16x1xf32> to vector<16x128xf32>
    %326 = arith.addf %324, %325 : vector<16x128xf32>
    %cst_160 = arith.constant 0.000000e+00 : f32
    %327 = vector.broadcast %cst_160 : f32 to vector<16x128xf32>
    %328 = arith.cmpf oge, %326, %327 : vector<16x128xf32>
    %cst_161 = arith.constant 0.00999999977 : f32
    %329 = vector.broadcast %cst_161 : f32 to vector<16x128xf32>
    %330 = arith.mulf %329, %326 : vector<16x128xf32>
    %331 = arith.select %328, %326, %330 : vector<16x128xi1>, vector<16x128xf32>
    %c0_162 = arith.constant 0 : index
    %c0_163 = arith.constant 0 : index
    %332 = vector.load %arg21[%c0_162, %c0_163] : memref<64x1xf32, #tpu.memory_space<vmem>>, vector<64x1xf32>
    %c127_i32_164 = arith.constant 127 : i32
    %333 = tpu.dynamic_rotate %331 by %c127_i32_164 dim 1 : vector<16x128xf32>, i32 -> vector<16x128xf32>
    %334 = vector.extract_strided_slice %1 {offsets = [5, 0], sizes = [1, 128], strides = [1, 1]} : vector<9x128xf32> to vector<1x128xf32>
    %335 = vector.broadcast %334 : vector<1x128xf32> to vector<16x128xf32>
    %336 = arith.mulf %333, %335 : vector<16x128xf32>
    %c120_i32_165 = arith.constant 120 : i32
    %337 = tpu.dynamic_rotate %331 by %c120_i32_165 dim 1 : vector<16x128xf32>, i32 -> vector<16x128xf32>
    %338 = vector.extract_strided_slice %1 {offsets = [7, 0], sizes = [1, 128], strides = [1, 1]} : vector<9x128xf32> to vector<1x128xf32>
    %339 = vector.broadcast %338 : vector<1x128xf32> to vector<16x128xf32>
    %340 = arith.mulf %337, %339 : vector<16x128xf32>
    %c119_i32_166 = arith.constant 119 : i32
    %341 = tpu.dynamic_rotate %331 by %c119_i32_166 dim 1 : vector<16x128xf32>, i32 -> vector<16x128xf32>
    %342 = vector.extract_strided_slice %1 {offsets = [8, 0], sizes = [1, 128], strides = [1, 1]} : vector<9x128xf32> to vector<1x128xf32>
    %343 = vector.broadcast %342 : vector<1x128xf32> to vector<16x128xf32>
    %344 = arith.mulf %341, %343 : vector<16x128xf32>
    %c0_167 = arith.constant 0 : index
    %c0_168 = arith.constant 0 : index
    %c0_169 = arith.constant 0 : index
    %345 = vector.load %arg20[%c0_167, %c0_168, %c0_169] : memref<4x64x16xf32, #tpu.memory_space<vmem>>, vector<1x64x16xf32>
    %346 = vector.shape_cast %345 : vector<1x64x16xf32> to vector<64x16xf32>
    %cst_170 = arith.constant dense<0.000000e+00> : vector<64x128xf32>
    %347 = tpu.matmul %346, %331, %cst_170 {dimension_numbers = #tpu.dot_dimension_numbers<[1], [0], [0], [1], [0, 0, 1, 1], [], []>} : vector<64x16xf32>, vector<16x128xf32>, vector<64x128xf32> -> vector<64x128xf32>
    %c1_171 = arith.constant 1 : index
    %c0_172 = arith.constant 0 : index
    %c0_173 = arith.constant 0 : index
    %348 = vector.load %arg20[%c1_171, %c0_172, %c0_173] : memref<4x64x16xf32, #tpu.memory_space<vmem>>, vector<1x64x16xf32>
    %349 = vector.shape_cast %348 : vector<1x64x16xf32> to vector<64x16xf32>
    %cst_174 = arith.constant dense<0.000000e+00> : vector<64x128xf32>
    %350 = tpu.matmul %349, %336, %cst_174 {dimension_numbers = #tpu.dot_dimension_numbers<[1], [0], [0], [1], [0, 0, 1, 1], [], []>} : vector<64x16xf32>, vector<16x128xf32>, vector<64x128xf32> -> vector<64x128xf32>
    %c2_175 = arith.constant 2 : index
    %c0_176 = arith.constant 0 : index
    %c0_177 = arith.constant 0 : index
    %351 = vector.load %arg20[%c2_175, %c0_176, %c0_177] : memref<4x64x16xf32, #tpu.memory_space<vmem>>, vector<1x64x16xf32>
    %352 = vector.shape_cast %351 : vector<1x64x16xf32> to vector<64x16xf32>
    %cst_178 = arith.constant dense<0.000000e+00> : vector<64x128xf32>
    %353 = tpu.matmul %352, %340, %cst_178 {dimension_numbers = #tpu.dot_dimension_numbers<[1], [0], [0], [1], [0, 0, 1, 1], [], []>} : vector<64x16xf32>, vector<16x128xf32>, vector<64x128xf32> -> vector<64x128xf32>
    %c3_179 = arith.constant 3 : index
    %c0_180 = arith.constant 0 : index
    %c0_181 = arith.constant 0 : index
    %354 = vector.load %arg20[%c3_179, %c0_180, %c0_181] : memref<4x64x16xf32, #tpu.memory_space<vmem>>, vector<1x64x16xf32>
    %355 = vector.shape_cast %354 : vector<1x64x16xf32> to vector<64x16xf32>
    %cst_182 = arith.constant dense<0.000000e+00> : vector<64x128xf32>
    %356 = tpu.matmul %355, %344, %cst_182 {dimension_numbers = #tpu.dot_dimension_numbers<[1], [0], [0], [1], [0, 0, 1, 1], [], []>} : vector<64x16xf32>, vector<16x128xf32>, vector<64x128xf32> -> vector<64x128xf32>
    %357 = arith.addf %347, %350 : vector<64x128xf32>
    %358 = arith.addf %353, %356 : vector<64x128xf32>
    %359 = arith.addf %357, %358 : vector<64x128xf32>
    %360 = vector.broadcast %332 : vector<64x1xf32> to vector<64x128xf32>
    %361 = arith.addf %359, %360 : vector<64x128xf32>
    %362 = vector.extract_strided_slice %361 {offsets = [0, 0], sizes = [16, 128], strides = [1, 1]} : vector<64x128xf32> to vector<16x128xf32>
    %363 = vector.extract_strided_slice %361 {offsets = [16, 0], sizes = [16, 128], strides = [1, 1]} : vector<64x128xf32> to vector<16x128xf32>
    %364 = vector.extract_strided_slice %361 {offsets = [32, 0], sizes = [16, 128], strides = [1, 1]} : vector<64x128xf32> to vector<16x128xf32>
    %365 = vector.extract_strided_slice %361 {offsets = [48, 0], sizes = [16, 128], strides = [1, 1]} : vector<64x128xf32> to vector<16x128xf32>
    %cst_183 = arith.constant dense<0.000000e+00> : vector<16xf32>
    %366 = vector.multi_reduction <add>, %362, %cst_183 [1] : vector<16x128xf32> to vector<16xf32>
    %367 = vector.shape_cast %366 : vector<16xf32> to vector<16x1xf32>
    %cst_184 = arith.constant dense<0.000000e+00> : vector<16xf32>
    %368 = vector.multi_reduction <add>, %363, %cst_184 [1] : vector<16x128xf32> to vector<16xf32>
    %369 = vector.shape_cast %368 : vector<16xf32> to vector<16x1xf32>
    %cst_185 = arith.constant dense<0.000000e+00> : vector<16xf32>
    %370 = vector.multi_reduction <add>, %364, %cst_185 [1] : vector<16x128xf32> to vector<16xf32>
    %371 = vector.shape_cast %370 : vector<16xf32> to vector<16x1xf32>
    %cst_186 = arith.constant dense<0.000000e+00> : vector<16xf32>
    %372 = vector.multi_reduction <add>, %365, %cst_186 [1] : vector<16x128xf32> to vector<16xf32>
    %373 = vector.shape_cast %372 : vector<16xf32> to vector<16x1xf32>
    %374 = arith.addf %367, %369 : vector<16x1xf32>
    %375 = arith.addf %371, %373 : vector<16x1xf32>
    %376 = arith.addf %374, %375 : vector<16x1xf32>
    %cst_187 = arith.constant 5.120000e+02 : f32
    %377 = vector.broadcast %cst_187 : f32 to vector<16x1xf32>
    %378 = arith.divf %376, %377 : vector<16x1xf32>
    %379 = vector.broadcast %378 : vector<16x1xf32> to vector<16x128xf32>
    %380 = arith.subf %362, %379 : vector<16x128xf32>
    %381 = arith.mulf %380, %380 : vector<16x128xf32>
    %cst_188 = arith.constant dense<0.000000e+00> : vector<16xf32>
    %382 = vector.multi_reduction <add>, %381, %cst_188 [1] : vector<16x128xf32> to vector<16xf32>
    %383 = vector.shape_cast %382 : vector<16xf32> to vector<16x1xf32>
    %384 = vector.broadcast %378 : vector<16x1xf32> to vector<16x128xf32>
    %385 = arith.subf %363, %384 : vector<16x128xf32>
    %386 = arith.mulf %385, %385 : vector<16x128xf32>
    %cst_189 = arith.constant dense<0.000000e+00> : vector<16xf32>
    %387 = vector.multi_reduction <add>, %386, %cst_189 [1] : vector<16x128xf32> to vector<16xf32>
    %388 = vector.shape_cast %387 : vector<16xf32> to vector<16x1xf32>
    %389 = vector.broadcast %378 : vector<16x1xf32> to vector<16x128xf32>
    %390 = arith.subf %364, %389 : vector<16x128xf32>
    %391 = arith.mulf %390, %390 : vector<16x128xf32>
    %cst_190 = arith.constant dense<0.000000e+00> : vector<16xf32>
    %392 = vector.multi_reduction <add>, %391, %cst_190 [1] : vector<16x128xf32> to vector<16xf32>
    %393 = vector.shape_cast %392 : vector<16xf32> to vector<16x1xf32>
    %394 = vector.broadcast %378 : vector<16x1xf32> to vector<16x128xf32>
    %395 = arith.subf %365, %394 : vector<16x128xf32>
    %396 = arith.mulf %395, %395 : vector<16x128xf32>
    %cst_191 = arith.constant dense<0.000000e+00> : vector<16xf32>
    %397 = vector.multi_reduction <add>, %396, %cst_191 [1] : vector<16x128xf32> to vector<16xf32>
    %398 = vector.shape_cast %397 : vector<16xf32> to vector<16x1xf32>
    %399 = arith.addf %383, %388 : vector<16x1xf32>
    %400 = arith.addf %393, %398 : vector<16x1xf32>
    %401 = arith.addf %399, %400 : vector<16x1xf32>
    %cst_192 = arith.constant 5.120000e+02 : f32
    %402 = vector.broadcast %cst_192 : f32 to vector<16x1xf32>
    %403 = arith.divf %401, %402 : vector<16x1xf32>
    %cst_193 = arith.constant 9.99999974E-6 : f32
    %404 = vector.broadcast %cst_193 : f32 to vector<16x1xf32>
    %405 = arith.addf %403, %404 : vector<16x1xf32>
    %406 = math.rsqrt %405 : vector<16x1xf32>
    %c0_194 = arith.constant 0 : index
    %c0_195 = arith.constant 0 : index
    %407 = vector.load %arg22[%c0_194, %c0_195] : memref<16x1xf32, #tpu.memory_space<vmem>>, vector<16x1xf32>
    %c0_196 = arith.constant 0 : index
    %c0_197 = arith.constant 0 : index
    %408 = vector.load %arg23[%c0_196, %c0_197] : memref<16x1xf32, #tpu.memory_space<vmem>>, vector<16x1xf32>
    %409 = arith.mulf %406, %407 : vector<16x1xf32>
    %410 = arith.mulf %378, %409 : vector<16x1xf32>
    %411 = arith.subf %408, %410 : vector<16x1xf32>
    %412 = tpu.concatenate %409, %409, %409, %409 in 0 : vector<16x1xf32>, vector<16x1xf32>, vector<16x1xf32>, vector<16x1xf32> -> vector<64x1xf32>
    %413 = tpu.concatenate %411, %411, %411, %411 in 0 : vector<16x1xf32>, vector<16x1xf32>, vector<16x1xf32>, vector<16x1xf32> -> vector<64x1xf32>
    %414 = vector.broadcast %412 : vector<64x1xf32> to vector<64x128xf32>
    %415 = arith.mulf %361, %414 : vector<64x128xf32>
    %416 = vector.broadcast %413 : vector<64x1xf32> to vector<64x128xf32>
    %417 = arith.addf %415, %416 : vector<64x128xf32>
    %cst_198 = arith.constant 0.000000e+00 : f32
    %418 = vector.broadcast %cst_198 : f32 to vector<64x128xf32>
    %419 = arith.cmpf oge, %417, %418 : vector<64x128xf32>
    %cst_199 = arith.constant 0.00999999977 : f32
    %420 = vector.broadcast %cst_199 : f32 to vector<64x128xf32>
    %421 = arith.mulf %420, %417 : vector<64x128xf32>
    %422 = arith.select %419, %417, %421 : vector<64x128xi1>, vector<64x128xf32>
    %c0_200 = arith.constant 0 : index
    %c0_201 = arith.constant 0 : index
    %423 = vector.load %arg24[%c0_200, %c0_201] : memref<12x64xf32, #tpu.memory_space<vmem>>, vector<12x64xf32>
    %cst_202 = arith.constant dense<0.000000e+00> : vector<12x128xf32>
    %424 = tpu.matmul %423, %422, %cst_202 {dimension_numbers = #tpu.dot_dimension_numbers<[1], [0], [0], [1], [0, 0, 1, 1], [], []>} : vector<12x64xf32>, vector<64x128xf32>, vector<12x128xf32> -> vector<12x128xf32>
    %c0_203 = arith.constant 0 : index
    %c0_204 = arith.constant 0 : index
    %425 = vector.load %arg25[%c0_203, %c0_204] : memref<12x1xf32, #tpu.memory_space<vmem>>, vector<12x1xf32>
    %426 = vector.broadcast %425 : vector<12x1xf32> to vector<12x128xf32>
    %427 = arith.addf %424, %426 : vector<12x128xf32>
    %428 = math.tanh %427 : vector<12x128xf32>
    %c0_205 = arith.constant 0 : index
    %c0_206 = arith.constant 0 : index
    %429 = vector.load %arg30[%c0_205, %c0_206] : memref<12x128xf32, #tpu.memory_space<vmem>>, vector<12x128xf32>
    tpu.vector_store %arg30[%c0_205, %c0_206], %428 {strides = array<i32>} : memref<12x128xf32, #tpu.memory_space<vmem>>, vector<12x128xf32>,
    %c0_207 = arith.constant 0 : index
    %c0_208 = arith.constant 0 : index
    %430 = vector.load %arg26[%c0_207, %c0_208] : memref<16x1xf32, #tpu.memory_space<vmem>>, vector<16x1xf32>
    %c0_209 = arith.constant 0 : index
    %c0_210 = arith.constant 0 : index
    %431 = vector.load %arg27[%c0_209, %c0_210] : memref<16x1xf32, #tpu.memory_space<vmem>>, vector<16x1xf32>
    %432 = arith.mulf %406, %430 : vector<16x1xf32>
    %433 = arith.mulf %378, %432 : vector<16x1xf32>
    %434 = arith.subf %431, %433 : vector<16x1xf32>
    %435 = tpu.concatenate %432, %432, %432, %432 in 0 : vector<16x1xf32>, vector<16x1xf32>, vector<16x1xf32>, vector<16x1xf32> -> vector<64x1xf32>
    %436 = tpu.concatenate %434, %434, %434, %434 in 0 : vector<16x1xf32>, vector<16x1xf32>, vector<16x1xf32>, vector<16x1xf32> -> vector<64x1xf32>
    %437 = vector.broadcast %435 : vector<64x1xf32> to vector<64x128xf32>
    %438 = arith.mulf %361, %437 : vector<64x128xf32>
    %439 = vector.broadcast %436 : vector<64x1xf32> to vector<64x128xf32>
    %440 = arith.addf %438, %439 : vector<64x128xf32>
    %cst_211 = arith.constant 0.000000e+00 : f32
    %441 = vector.broadcast %cst_211 : f32 to vector<64x128xf32>
    %442 = arith.cmpf oge, %440, %441 : vector<64x128xf32>
    %cst_212 = arith.constant 0.00999999977 : f32
    %443 = vector.broadcast %cst_212 : f32 to vector<64x128xf32>
    %444 = arith.mulf %443, %440 : vector<64x128xf32>
    %445 = arith.select %442, %440, %444 : vector<64x128xi1>, vector<64x128xf32>
    %c0_213 = arith.constant 0 : index
    %c0_214 = arith.constant 0 : index
    %446 = vector.load %arg28[%c0_213, %c0_214] : memref<12x64xf32, #tpu.memory_space<vmem>>, vector<12x64xf32>
    %cst_215 = arith.constant dense<0.000000e+00> : vector<12x128xf32>
    %447 = tpu.matmul %446, %445, %cst_215 {dimension_numbers = #tpu.dot_dimension_numbers<[1], [0], [0], [1], [0, 0, 1, 1], [], []>} : vector<12x64xf32>, vector<64x128xf32>, vector<12x128xf32> -> vector<12x128xf32>
    %c0_216 = arith.constant 0 : index
    %c0_217 = arith.constant 0 : index
    %448 = vector.load %arg29[%c0_216, %c0_217] : memref<12x1xf32, #tpu.memory_space<vmem>>, vector<12x1xf32>
    %449 = vector.broadcast %448 : vector<12x1xf32> to vector<12x128xf32>
    %450 = arith.addf %447, %449 : vector<12x128xf32>
    %cst_218 = arith.constant 5.000000e-01 : f32
    %451 = vector.broadcast %cst_218 : f32 to vector<12x128xf32>
    %452 = arith.mulf %451, %450 : vector<12x128xf32>
    %cst_219 = arith.constant 0.000000e+00 : f32
    %453 = vector.broadcast %cst_219 : f32 to vector<12x128xf32>
    %454 = arith.maximumf %452, %453 : vector<12x128xf32>
    %455 = math.absf %452 : vector<12x128xf32>
    %cst_220 = arith.constant 0.000000e+00 : f32
    %456 = vector.broadcast %cst_220 : f32 to vector<12x128xf32>
    %457 = arith.subf %456, %455 : vector<12x128xf32>
    %458 = math.exp %457 : vector<12x128xf32>
    %cst_221 = arith.constant 1.000000e+00 : f32
    %459 = vector.broadcast %cst_221 : f32 to vector<12x128xf32>
    %460 = arith.addf %459, %458 : vector<12x128xf32>
    %461 = math.log %460 : vector<12x128xf32>
    %462 = arith.addf %454, %461 : vector<12x128xf32>
    %cst_222 = arith.constant 2.000000e+01 : f32
    %463 = vector.broadcast %cst_222 : f32 to vector<12x128xf32>
    %464 = arith.minimumf %462, %463 : vector<12x128xf32>
    %465 = math.exp %464 : vector<12x128xf32>
    %c0_223 = arith.constant 0 : index
    %c0_224 = arith.constant 0 : index
    %466 = vector.load %arg31[%c0_223, %c0_224] : memref<12x128xf32, #tpu.memory_space<vmem>>, vector<12x128xf32>
    tpu.vector_store %arg31[%c0_223, %c0_224], %465 {strides = array<i32>} : memref<12x128xf32, #tpu.memory_space<vmem>>, vector<12x128xf32>,
    return
  }
}

</mosaic_0001>

<llo_original>
// kernel: dec_forward.1
$region0: #{dec_forward.1}
  #allocation0 [shape = 'u32[]', space=smem, size = 0x4, offset = 0x4, fixed_abs, tag = 'smem constant byte address 0x4 - core index']
  #allocation1 [shape = 'u32[144,128]{1,0:T(1,128)}', space=vmem, size = 0x12000, scoped, tag = 'internal scratch']
  %s0 = inlined_call_operand.smem [shape: u32[32], index: -1, kind: input, shape index: {}]
  %s1 = sld [smem:[%s0]]
  %s2 = scalar_lea.smem %s0, 1
  %s3 = sld [smem:[%s2]]
  %s4 = scalar_lea.smem %s0, 2
  %s5 = sld [smem:[%s4]]
  %s6 = scalar_lea.smem %s0, 3
  %s7 = sld [smem:[%s6]]
  %s8 = scalar_lea.smem %s0, 4
  %s9 = sld [smem:[%s8]]
  %s10 = scalar_lea.smem %s0, 5
  %s11 = sld [smem:[%s10]]
  %s12 = scalar_lea.smem %s0, 6
  %s13 = sld [smem:[%s12]]
  %s14 = scalar_lea.smem %s0, 7
  %s15 = sld [smem:[%s14]]
  %s16 = scalar_lea.smem %s0, 8
  %s17 = sld [smem:[%s16]]
  %s18 = scalar_lea.smem %s0, 9
  %s19 = sld [smem:[%s18]]
  %s20 = scalar_lea.smem %s0, 10
  %s21 = sld [smem:[%s20]]
  %s22 = scalar_lea.smem %s0, 11
  %s23 = sld [smem:[%s22]]
  %s24 = scalar_lea.smem %s0, 12
  %s25 = sld [smem:[%s24]]
  %s26 = scalar_lea.smem %s0, 13
  %s27 = sld [smem:[%s26]]
  %s28 = scalar_lea.smem %s0, 14
  %s29 = sld [smem:[%s28]]
  %s30 = scalar_lea.smem %s0, 15
  %s31 = sld [smem:[%s30]]
  %s32 = scalar_lea.smem %s0, 16
  %s33 = sld [smem:[%s32]]
  %s34 = scalar_lea.smem %s0, 17
  %s35 = sld [smem:[%s34]]
  %s36 = scalar_lea.smem %s0, 18
  %s37 = sld [smem:[%s36]]
  %s38 = scalar_lea.smem %s0, 19
  %s39 = sld [smem:[%s38]]
  %s40 = scalar_lea.smem %s0, 20
  %s41 = sld [smem:[%s40]]
  %s42 = scalar_lea.smem %s0, 21
  %s43 = sld [smem:[%s42]]
  %s44 = scalar_lea.smem %s0, 22
  %s45 = sld [smem:[%s44]]
  %s46 = scalar_lea.smem %s0, 23
  %s47 = sld [smem:[%s46]]
  %s48 = scalar_lea.smem %s0, 24
  %s49 = sld [smem:[%s48]]
  %s50 = scalar_lea.smem %s0, 25
  %s51 = sld [smem:[%s50]]
  %s52 = scalar_lea.smem %s0, 26
  %s53 = sld [smem:[%s52]]
  %s54 = scalar_lea.smem %s0, 27
  %s55 = sld [smem:[%s54]]
  %s56 = scalar_lea.smem %s0, 28
  %s57 = sld [smem:[%s56]]
  %s58 = scalar_lea.smem %s0, 29
  %s59 = sld [smem:[%s58]]
  %s60 = scalar_lea.smem %s0, 30
  %s61 = sld [smem:[%s60]]
  %s62 = scalar_lea.smem %s0, 31
  %s63 = sld [smem:[%s62]]
  %64 = xla_tuple %s61, %s63
  %s65 = sld [smem:[#allocation0]]
  $region138: #{dec_forward.1} parent=0
    _
  %s67 = ssub.s32 1, %s65
  %s68 = scalar_select 0, %s67, %s65
  // Predicated region
  $region2: #{dec_forward.1} parent=0 // pred_check
    _
  $region3: #{dec_forward.1} parent=0 // pred_check_branch
    %70 = sbr.rel (0) target = $region5
  $region4: #{dec_forward.1} parent=0 // pred_region
    _
  $region5: #{dec_forward.1} parent=0 // pred_fallthru
    _
  // Predicated region
  $region6: #{dec_forward.1} parent=0 // pred_check
    _
  $region7: #{dec_forward.1} parent=0 // pred_check_branch
    %72 = sbr.rel (0) target = $region9
  $region8: #{dec_forward.1} parent=0 // pred_region
    _
  $region9: #{dec_forward.1} parent=0 // pred_fallthru
    _
  // Predicated region
  $region10: #{dec_forward.1} parent=0 // pred_check
    _
  $region11: #{dec_forward.1} parent=0 // pred_check_branch
    %74 = sbr.rel (0) target = $region13
  $region12: #{dec_forward.1} parent=0 // pred_region
    _
  $region13: #{dec_forward.1} parent=0 // pred_fallthru
    _
  // Predicated region
  $region14: #{dec_forward.1} parent=0 // pred_check
    _
  $region15: #{dec_forward.1} parent=0 // pred_check_branch
    %76 = sbr.rel (0) target = $region17
  $region16: #{dec_forward.1} parent=0 // pred_region
    _
  $region17: #{dec_forward.1} parent=0 // pred_fallthru
    _
  // Predicated region
  $region18: #{dec_forward.1} parent=0 // pred_check
    _
  $region19: #{dec_forward.1} parent=0 // pred_check_branch
    %78 = sbr.rel (0) target = $region21
  $region20: #{dec_forward.1} parent=0 // pred_region
    _
  $region21: #{dec_forward.1} parent=0 // pred_fallthru
    _
  // Predicated region
  $region22: #{dec_forward.1} parent=0 // pred_check
    _
  $region23: #{dec_forward.1} parent=0 // pred_check_branch
    %80 = sbr.rel (0) target = $region25
  $region24: #{dec_forward.1} parent=0 // pred_region
    _
  $region25: #{dec_forward.1} parent=0 // pred_fallthru
    _
  // Predicated region
  $region26: #{dec_forward.1} parent=0 // pred_check
    _
  $region27: #{dec_forward.1} parent=0 // pred_check_branch
    %82 = sbr.rel (0) target = $region29
  $region28: #{dec_forward.1} parent=0 // pred_region
    _
  $region29: #{dec_forward.1} parent=0 // pred_fallthru
    _
  // Predicated region
  $region30: #{dec_forward.1} parent=0 // pred_check
    _
  $region31: #{dec_forward.1} parent=0 // pred_check_branch
    %84 = sbr.rel (0) target = $region33
  $region32: #{dec_forward.1} parent=0 // pred_region
    _
  $region33: #{dec_forward.1} parent=0 // pred_fallthru
    _
  // Predicated region
  $region34: #{dec_forward.1} parent=0 // pred_check
    _
  $region35: #{dec_forward.1} parent=0 // pred_check_branch
    %86 = sbr.rel (0) target = $region37
  $region36: #{dec_forward.1} parent=0 // pred_region
    _
  $region37: #{dec_forward.1} parent=0 // pred_fallthru
    _
  // Predicated region
  $region38: #{dec_forward.1} parent=0 // pred_check
    _
  $region39: #{dec_forward.1} parent=0 // pred_check_branch
    %88 = sbr.rel (0) target = $region41
  $region40: #{dec_forward.1} parent=0 // pred_region
    _
  $region41: #{dec_forward.1} parent=0 // pred_fallthru
    _
  // Predicated region
  $region42: #{dec_forward.1} parent=0 // pred_check
    _
  $region43: #{dec_forward.1} parent=0 // pred_check_branch
    %90 = sbr.rel (0) target = $region45
  $region44: #{dec_forward.1} parent=0 // pred_region
    _
  $region45: #{dec_forward.1} parent=0 // pred_fallthru
    _
  // Predicated region
  $region46: #{dec_forward.1} parent=0 // pred_check
    _
  $region47: #{dec_forward.1} parent=0 // pred_check_branch
    %92 = sbr.rel (0) target = $region49
  $region48: #{dec_forward.1} parent=0 // pred_region
    _
  $region49: #{dec_forward.1} parent=0 // pred_fallthru
    _
  // Predicated region
  $region50: #{dec_forward.1} parent=0 // pred_check
    _
  $region51: #{dec_forward.1} parent=0 // pred_check_branch
    %94 = sbr.rel (0) target = $region53
  $region52: #{dec_forward.1} parent=0 // pred_region
    _
  $region53: #{dec_forward.1} parent=0 // pred_fallthru
    _
  // Predicated region
  $region54: #{dec_forward.1} parent=0 // pred_check
    _
  $region55: #{dec_forward.1} parent=0 // pred_check_branch
    %96 = sbr.rel (0) target = $region57
  $region56: #{dec_forward.1} parent=0 // pred_region
    _
  $region57: #{dec_forward.1} parent=0 // pred_fallthru
    _
  // Predicated region
  $region58: #{dec_forward.1} parent=0 // pred_check
    _
  $region59: #{dec_forward.1} parent=0 // pred_check_branch
    %98 = sbr.rel (0) target = $region61
  $region60: #{dec_forward.1} parent=0 // pred_region
    _
  $region61: #{dec_forward.1} parent=0 // pred_fallthru
    _
  // Predicated region
  $region62: #{dec_forward.1} parent=0 // pred_check
    _
  $region63: #{dec_forward.1} parent=0 // pred_check_branch
    %100 = sbr.rel (0) target = $region65
  $region64: #{dec_forward.1} parent=0 // pred_region
    _
  $region65: #{dec_forward.1} parent=0 // pred_fallthru
    _
  // Predicated region
  $region66: #{dec_forward.1} parent=0 // pred_check
    _
  $region67: #{dec_forward.1} parent=0 // pred_check_branch
    %102 = sbr.rel (0) target = $region69
  $region68: #{dec_forward.1} parent=0 // pred_region
    _
  $region69: #{dec_forward.1} parent=0 // pred_fallthru
    _
  // Predicated region
  $region70: #{dec_forward.1} parent=0 // pred_check
    _
  $region71: #{dec_forward.1} parent=0 // pred_check_branch
    %104 = sbr.rel (0) target = $region73
  $region72: #{dec_forward.1} parent=0 // pred_region
    _
  $region73: #{dec_forward.1} parent=0 // pred_fallthru
    _
  // Predicated region
  $region74: #{dec_forward.1} parent=0 // pred_check
    _
  $region75: #{dec_forward.1} parent=0 // pred_check_branch
    %106 = sbr.rel (0) target = $region77
  $region76: #{dec_forward.1} parent=0 // pred_region
    _
  $region77: #{dec_forward.1} parent=0 // pred_fallthru
    _
  // Predicated region
  $region78: #{dec_forward.1} parent=0 // pred_check
    _
  $region79: #{dec_forward.1} parent=0 // pred_check_branch
    %108 = sbr.rel (0) target = $region81
  $region80: #{dec_forward.1} parent=0 // pred_region
    _
  $region81: #{dec_forward.1} parent=0 // pred_fallthru
    _
  // Predicated region
  $region82: #{dec_forward.1} parent=0 // pred_check
    _
  $region83: #{dec_forward.1} parent=0 // pred_check_branch
    %110 = sbr.rel (0) target = $region85
  $region84: #{dec_forward.1} parent=0 // pred_region
    _
  $region85: #{dec_forward.1} parent=0 // pred_fallthru
    _
  // Predicated region
  $region86: #{dec_forward.1} parent=0 // pred_check
    _
  $region87: #{dec_forward.1} parent=0 // pred_check_branch
    %112 = sbr.rel (0) target = $region89
  $region88: #{dec_forward.1} parent=0 // pred_region
    _
  $region89: #{dec_forward.1} parent=0 // pred_fallthru
    _
  // Predicated region
  $region90: #{dec_forward.1} parent=0 // pred_check
    _
  $region91: #{dec_forward.1} parent=0 // pred_check_branch
    %114 = sbr.rel (0) target = $region93
  $region92: #{dec_forward.1} parent=0 // pred_region
    _
  $region93: #{dec_forward.1} parent=0 // pred_fallthru
    _
  // Predicated region
  $region94: #{dec_forward.1} parent=0 // pred_check
    _
  $region95: #{dec_forward.1} parent=0 // pred_check_branch
    %116 = sbr.rel (0) target = $region97
  $region96: #{dec_forward.1} parent=0 // pred_region
    _
  $region97: #{dec_forward.1} parent=0 // pred_fallthru
    _
  // Predicated region
  $region98: #{dec_forward.1} parent=0 // pred_check
    _
  $region99: #{dec_forward.1} parent=0 // pred_check_branch
    %118 = sbr.rel (0) target = $region101
  $region100: #{dec_forward.1} parent=0 // pred_region
    _
  $region101: #{dec_forward.1} parent=0 // pred_fallthru
    _
  // Predicated region
  $region102: #{dec_forward.1} parent=0 // pred_check
    _
  $region103: #{dec_forward.1} parent=0 // pred_check_branch
    %120 = sbr.rel (0) target = $region105
  $region104: #{dec_forward.1} parent=0 // pred_region
    _
  $region105: #{dec_forward.1} parent=0 // pred_fallthru
    _
  // Predicated region
  $region106: #{dec_forward.1} parent=0 // pred_check
    _
  $region107: #{dec_forward.1} parent=0 // pred_check_branch
    %122 = sbr.rel (0) target = $region109
  $region108: #{dec_forward.1} parent=0 // pred_region
    _
  $region109: #{dec_forward.1} parent=0 // pred_fallthru
    _
  // Predicated region
  $region110: #{dec_forward.1} parent=0 // pred_check
    _
  $region111: #{dec_forward.1} parent=0 // pred_check_branch
    %124 = sbr.rel (0) target = $region113
  $region112: #{dec_forward.1} parent=0 // pred_region
    _
  $region113: #{dec_forward.1} parent=0 // pred_fallthru
    _
  // Predicated region
  $region114: #{dec_forward.1} parent=0 // pred_check
    _
  $region115: #{dec_forward.1} parent=0 // pred_check_branch
    %126 = sbr.rel (0) target = $region117
  $region116: #{dec_forward.1} parent=0 // pred_region
    _
  $region117: #{dec_forward.1} parent=0 // pred_fallthru
    _
  // Predicated region
  $region118: #{dec_forward.1} parent=0 // pred_check
    _
  $region119: #{dec_forward.1} parent=0 // pred_check_branch
    %128 = sbr.rel (0) target = $region121
  $region120: #{dec_forward.1} parent=0 // pred_region
    _
  $region121: #{dec_forward.1} parent=0 // pred_fallthru
    _
  %v129 = vlaneseq
  %v130 = vand.u32 %v129, 127
  %v131 = vld [vmem:[%s3] sm:$0xff]
  %v132 = vld [vmem:[%s3 + $0x8] sm:$0x1]
  %v133 = vld [vmem:[%s1] sm:$0xff]
  %v134 = vld [vmem:[%s1 + $0x8] sm:$0xf]
  %136 = vset.pattern.permute.xlu0 0
  %137 = vperm.xlu0 %136, %v133
  %v138 = vpop.permute.xlu0 %137
  %141 = vset.pattern.permute.xlu0 0
  %142 = vperm.xlu0 %141, %v134
  %v143 = vpop.permute.xlu0 %142
  %vm145 = vcmp.ge.s32.totalorder %v130, 64
  %v146 = vsel %vm145, 1, 0
  %vm147 = vcmp.eq.s32.totalorder %v146, 1
  %148 = vset.pattern.permute.xlu0 1
  %149 = vperm.xlu0 %148, %v133
  %v150 = vpop.permute.xlu0 %149
  %152 = vset.pattern.permute.xlu0 1
  %153 = vperm.xlu0 %152, %v134
  %v154 = vpop.permute.xlu0 %153
  %v156 = vsel %vm147, %v150, %v138
  %v157 = vsel %vm147, %v154, %v143
  %v158 = vld [vmem:[%s7] sm:$0xff]
  %v159 = vld [vmem:[%s7 + $0x8] sm:$0xff]
  %v160 = vld [vmem:[%s7 + $0x10] sm:$0xff]
  %v161 = vld [vmem:[%s7 + $0x18] sm:$0xff]
  %v162 = vld [vmem:[%s5] sm:$0xff]
  %v163 = vld [vmem:[%s5 + $0x8] sm:$0xff]
  %v164 = vld [vmem:[%s5 + $0x10] sm:$0xff]
  %v165 = vld [vmem:[%s5 + $0x18] sm:$0xff]
  %v166 = vlaneseq
  %v167 = vshrl.u32 %v166, 7
  %v168 = vsub.s32 0, %v167
  %v169 = vrot.slane %v156, %v168
  %v170 = vmul.f32 %v169, %v162
  %v171 = vmul.f32 %v169, %v163
  %v172 = vmul.f32 %v169, %v164
  %v173 = vmul.f32 %v169, %v165
  %s174 = scalar_lea.vmem %s5, 32
  %v175 = vld [vmem:[%s174] sm:$0xff]
  %v176 = vld [vmem:[%s174 + $0x8] sm:$0xff]
  %v177 = vld [vmem:[%s174 + $0x10] sm:$0xff]
  %v178 = vld [vmem:[%s174 + $0x18] sm:$0xff]
  %v179 = vlaneseq
  %v180 = vshrl.u32 %v179, 7
  %v181 = vsub.s32 1, %v180
  %v182 = vrot.slane %v156, %v181
  %v183 = vmul.f32 %v182, %v175
  %v184 = vmul.f32 %v182, %v176
  %v185 = vmul.f32 %v182, %v177
  %v186 = vmul.f32 %v182, %v178
  %v187 = vadd.f32 %v170, %v183
  %v188 = vadd.f32 %v171, %v184
  %v189 = vadd.f32 %v172, %v185
  %v190 = vadd.f32 %v173, %v186
  %s191 = scalar_lea.vmem %s5, 64
  %v192 = vld [vmem:[%s191] sm:$0xff]
  %v193 = vld [vmem:[%s191 + $0x8] sm:$0xff]
  %v194 = vld [vmem:[%s191 + $0x10] sm:$0xff]
  %v195 = vld [vmem:[%s191 + $0x18] sm:$0xff]
  %v196 = vlaneseq
  %v197 = vshrl.u32 %v196, 7
  %v198 = vsub.s32 2, %v197
  %v199 = vrot.slane %v156, %v198
  %v200 = vmul.f32 %v199, %v192
  %v201 = vmul.f32 %v199, %v193
  %v202 = vmul.f32 %v199, %v194
  %v203 = vmul.f32 %v199, %v195
  %v204 = vadd.f32 %v187, %v200
  %v205 = vadd.f32 %v188, %v201
  %v206 = vadd.f32 %v189, %v202
  %v207 = vadd.f32 %v190, %v203
  %s208 = scalar_lea.vmem %s5, 96
  %v209 = vld [vmem:[%s208] sm:$0xff]
  %v210 = vld [vmem:[%s208 + $0x8] sm:$0xff]
  %v211 = vld [vmem:[%s208 + $0x10] sm:$0xff]
  %v212 = vld [vmem:[%s208 + $0x18] sm:$0xff]
  %v213 = vlaneseq
  %v214 = vshrl.u32 %v213, 7
  %v215 = vsub.s32 3, %v214
  %v216 = vrot.slane %v156, %v215
  %v217 = vmul.f32 %v216, %v209
  %v218 = vmul.f32 %v216, %v210
  %v219 = vmul.f32 %v216, %v211
  %v220 = vmul.f32 %v216, %v212
  %s221 = scalar_lea.vmem %s5, 128
  %v222 = vld [vmem:[%s221] sm:$0xff]
  %v223 = vld [vmem:[%s221 + $0x8] sm:$0xff]
  %v224 = vld [vmem:[%s221 + $0x10] sm:$0xff]
  %v225 = vld [vmem:[%s221 + $0x18] sm:$0xff]
  %v226 = vlaneseq
  %v227 = vshrl.u32 %v226, 7
  %v228 = vsub.s32 4, %v227
  %v229 = vrot.slane %v156, %v228
  %v230 = vmul.f32 %v229, %v222
  %v231 = vmul.f32 %v229, %v223
  %v232 = vmul.f32 %v229, %v224
  %v233 = vmul.f32 %v229, %v225
  %v234 = vadd.f32 %v217, %v230
  %v235 = vadd.f32 %v218, %v231
  %v236 = vadd.f32 %v219, %v232
  %v237 = vadd.f32 %v220, %v233
  %s238 = scalar_lea.vmem %s5, 160
  %v239 = vld [vmem:[%s238] sm:$0xff]
  %v240 = vld [vmem:[%s238 + $0x8] sm:$0xff]
  %v241 = vld [vmem:[%s238 + $0x10] sm:$0xff]
  %v242 = vld [vmem:[%s238 + $0x18] sm:$0xff]
  %v243 = vlaneseq
  %v244 = vshrl.u32 %v243, 7
  %v245 = vsub.s32 5, %v244
  %v246 = vrot.slane %v156, %v245
  %v247 = vmul.f32 %v246, %v239
  %v248 = vmul.f32 %v246, %v240
  %v249 = vmul.f32 %v246, %v241
  %v250 = vmul.f32 %v246, %v242
  %v251 = vadd.f32 %v234, %v247
  %v252 = vadd.f32 %v235, %v248
  %v253 = vadd.f32 %v236, %v249
  %v254 = vadd.f32 %v237, %v250
  %s255 = scalar_lea.vmem %s5, 192
  %v256 = vld [vmem:[%s255] sm:$0xff]
  %v257 = vld [vmem:[%s255 + $0x8] sm:$0xff]
  %v258 = vld [vmem:[%s255 + $0x10] sm:$0xff]
  %v259 = vld [vmem:[%s255 + $0x18] sm:$0xff]
  %v260 = vlaneseq
  %v261 = vshrl.u32 %v260, 7
  %v262 = vsub.s32 6, %v261
  %v263 = vrot.slane %v156, %v262
  %v264 = vmul.f32 %v263, %v256
  %v265 = vmul.f32 %v263, %v257
  %v266 = vmul.f32 %v263, %v258
  %v267 = vmul.f32 %v263, %v259
  %s268 = scalar_lea.vmem %s5, 224
  %v269 = vld [vmem:[%s268] sm:$0xff]
  %v270 = vld [vmem:[%s268 + $0x8] sm:$0xff]
  %v271 = vld [vmem:[%s268 + $0x10] sm:$0xff]
  %v272 = vld [vmem:[%s268 + $0x18] sm:$0xff]
  %v273 = vlaneseq
  %v274 = vshrl.u32 %v273, 7
  %v275 = vsub.s32 7, %v274
  %v276 = vrot.slane %v156, %v275
  %v277 = vmul.f32 %v276, %v269
  %v278 = vmul.f32 %v276, %v270
  %v279 = vmul.f32 %v276, %v271
  %v280 = vmul.f32 %v276, %v272
  %v281 = vadd.f32 %v264, %v277
  %v282 = vadd.f32 %v265, %v278
  %v283 = vadd.f32 %v266, %v279
  %v284 = vadd.f32 %v267, %v280
  %s285 = scalar_lea.vmem %s5, 256
  %v286 = vld [vmem:[%s285] sm:$0xff]
  %v287 = vld [vmem:[%s285 + $0x8] sm:$0xff]
  %v288 = vld [vmem:[%s285 + $0x10] sm:$0xff]
  %v289 = vld [vmem:[%s285 + $0x18] sm:$0xff]
  %v290 = vlaneseq
  %v291 = vshrl.u32 %v290, 7
  %v292 = vsub.s32 0, %v291
  %v293 = vrot.slane %v157, %v292
  %v294 = vmul.f32 %v293, %v286
  %v295 = vmul.f32 %v293, %v287
  %v296 = vmul.f32 %v293, %v288
  %v297 = vmul.f32 %v293, %v289
  %v298 = vadd.f32 %v281, %v294
  %v299 = vadd.f32 %v282, %v295
  %v300 = vadd.f32 %v283, %v296
  %v301 = vadd.f32 %v284, %v297
  %s302 = scalar_lea.vmem %s5, 288
  %v303 = vld [vmem:[%s302] sm:$0xff]
  %v304 = vld [vmem:[%s302 + $0x8] sm:$0xff]
  %v305 = vld [vmem:[%s302 + $0x10] sm:$0xff]
  %v306 = vld [vmem:[%s302 + $0x18] sm:$0xff]
  %v307 = vlaneseq
  %v308 = vshrl.u32 %v307, 7
  %v309 = vsub.s32 1, %v308
  %v310 = vrot.slane %v157, %v309
  %v311 = vmul.f32 %v310, %v303
  %v312 = vmul.f32 %v310, %v304
  %v313 = vmul.f32 %v310, %v305
  %v314 = vmul.f32 %v310, %v306
  %s315 = scalar_lea.vmem %s5, 320
  %v316 = vld [vmem:[%s315] sm:$0xff]
  %v317 = vld [vmem:[%s315 + $0x8] sm:$0xff]
  %v318 = vld [vmem:[%s315 + $0x10] sm:$0xff]
  %v319 = vld [vmem:[%s315 + $0x18] sm:$0xff]
  %v320 = vlaneseq
  %v321 = vshrl.u32 %v320, 7
  %v322 = vsub.s32 2, %v321
  %v323 = vrot.slane %v157, %v322
  %v324 = vmul.f32 %v323, %v316
  %v325 = vmul.f32 %v323, %v317
  %v326 = vmul.f32 %v323, %v318
  %v327 = vmul.f32 %v323, %v319
  %v328 = vadd.f32 %v311, %v324
  %v329 = vadd.f32 %v312, %v325
  %v330 = vadd.f32 %v313, %v326
  %v331 = vadd.f32 %v314, %v327
  %s332 = scalar_lea.vmem %s5, 352
  %v333 = vld [vmem:[%s332] sm:$0xff]
  %v334 = vld [vmem:[%s332 + $0x8] sm:$0xff]
  %v335 = vld [vmem:[%s332 + $0x10] sm:$0xff]
  %v336 = vld [vmem:[%s332 + $0x18] sm:$0xff]
  %v337 = vlaneseq
  %v338 = vshrl.u32 %v337, 7
  %v339 = vsub.s32 3, %v338
  %v340 = vrot.slane %v157, %v339
  %v341 = vmul.f32 %v340, %v333
  %v342 = vmul.f32 %v340, %v334
  %v343 = vmul.f32 %v340, %v335
  %v344 = vmul.f32 %v340, %v336
  %v345 = vadd.f32 %v328, %v341
  %v346 = vadd.f32 %v329, %v342
  %v347 = vadd.f32 %v330, %v343
  %v348 = vadd.f32 %v331, %v344
  %v349 = vadd.f32 %v158, %v204
  %v350 = vadd.f32 %v159, %v205
  %v351 = vadd.f32 %v160, %v206
  %v352 = vadd.f32 %v161, %v207
  %v353 = vadd.f32 %v251, %v298
  %v354 = vadd.f32 %v252, %v299
  %v355 = vadd.f32 %v253, %v300
  %v356 = vadd.f32 %v254, %v301
  %v357 = vadd.f32 %v349, %v353
  %v358 = vadd.f32 %v350, %v354
  %v359 = vadd.f32 %v351, %v355
  %v360 = vadd.f32 %v352, %v356
  %v361 = vadd.f32 %v357, %v345
  %v362 = vadd.f32 %v358, %v346
  %v363 = vadd.f32 %v359, %v347
  %v364 = vadd.f32 %v360, %v348
  %365 = vadd.xlane.f32.xlu0 %v361
  %v366 = vpop.xlane.xlu0 %365
  %367 = vadd.xlane.f32.xlu0 %v362
  %v368 = vpop.xlane.xlu0 %367
  %369 = vadd.xlane.f32.xlu0 %v363
  %v370 = vpop.xlane.xlu0 %369
  %371 = vadd.xlane.f32.xlu0 %v364
  %v372 = vpop.xlane.xlu0 %371
  %v373 = vrcp.pop 128.0
  %v374 = vmul.f32 %v366, %v373
  %v375 = vmul.f32 %v368, %v373
  %v376 = vmul.f32 %v370, %v373
  %v377 = vmul.f32 %v372, %v373
  %v378 = vsub.f32 %v361, %v374
  %v379 = vsub.f32 %v362, %v375
  %v380 = vsub.f32 %v363, %v376
  %v381 = vsub.f32 %v364, %v377
  %v382 = vmul.f32 %v378, %v378
  %v383 = vmul.f32 %v379, %v379
  %v384 = vmul.f32 %v380, %v380
  %v385 = vmul.f32 %v381, %v381
  %386 = vadd.xlane.f32.xlu0 %v382
  %v387 = vpop.xlane.xlu0 %386
  %388 = vadd.xlane.f32.xlu0 %v383
  %v389 = vpop.xlane.xlu0 %388
  %390 = vadd.xlane.f32.xlu0 %v384
  %v391 = vpop.xlane.xlu0 %390
  %392 = vadd.xlane.f32.xlu0 %v385
  %v393 = vpop.xlane.xlu0 %392
  %v394 = vmul.f32 %v387, %v373
  %v395 = vmul.f32 %v389, %v373
  %v396 = vmul.f32 %v391, %v373
  %v397 = vmul.f32 %v393, %v373
  %v398 = vadd.f32 %v394, 1e-05
  %v399 = vadd.f32 %v395, 1e-05
  %v400 = vadd.f32 %v396, 1e-05
  %v401 = vadd.f32 %v397, 1e-05
  %v402 = vrsqrt.pop %v398
  %v403 = vrsqrt.pop %v399
  %v404 = vrsqrt.pop %v400
  %v405 = vrsqrt.pop %v401
  %v406 = vld [vmem:[%s9] sm:$0xff]
  %v407 = vld [vmem:[%s9 + $0x8] sm:$0xff]
  %v408 = vld [vmem:[%s9 + $0x10] sm:$0xff]
  %v409 = vld [vmem:[%s9 + $0x18] sm:$0xff]
  %v410 = vld [vmem:[%s11] sm:$0xff]
  %v411 = vld [vmem:[%s11 + $0x8] sm:$0xff]
  %v412 = vld [vmem:[%s11 + $0x10] sm:$0xff]
  %v413 = vld [vmem:[%s11 + $0x18] sm:$0xff]
  %v414 = vmul.f32 %v402, %v406
  %v415 = vmul.f32 %v403, %v407
  %v416 = vmul.f32 %v404, %v408
  %v417 = vmul.f32 %v405, %v409
  %v418 = vmul.f32 %v374, %v414
  %v419 = vmul.f32 %v375, %v415
  %v420 = vmul.f32 %v376, %v416
  %v421 = vmul.f32 %v377, %v417
  %v422 = vsub.f32 %v410, %v418
  %v423 = vsub.f32 %v411, %v419
  %v424 = vsub.f32 %v412, %v420
  %v425 = vsub.f32 %v413, %v421
  %v426 = vld [vmem:[%s13] sm:$0xff]
  %v427 = vld [vmem:[%s13 + $0x8] sm:$0xff]
  %429 = vset.pattern.permute.xlu0 0
  %430 = vperm.xlu0 %429, %v414
  %v431 = vpop.permute.xlu0 %430
  %434 = vset.pattern.permute.xlu0 0
  %435 = vperm.xlu0 %434, %v415
  %v436 = vpop.permute.xlu0 %435
  %439 = vset.pattern.permute.xlu0 0
  %440 = vperm.xlu0 %439, %v416
  %v441 = vpop.permute.xlu0 %440
  %444 = vset.pattern.permute.xlu0 0
  %445 = vperm.xlu0 %444, %v417
  %v446 = vpop.permute.xlu0 %445
  %v448 = vmul.f32 %v361, %v431
  %v449 = vmul.f32 %v362, %v436
  %v450 = vmul.f32 %v363, %v441
  %v451 = vmul.f32 %v364, %v446
  %453 = vset.pattern.permute.xlu0 0
  %454 = vperm.xlu0 %453, %v422
  %v455 = vpop.permute.xlu0 %454
  %458 = vset.pattern.permute.xlu0 0
  %459 = vperm.xlu0 %458, %v423
  %v460 = vpop.permute.xlu0 %459
  %463 = vset.pattern.permute.xlu0 0
  %464 = vperm.xlu0 %463, %v424
  %v465 = vpop.permute.xlu0 %464
  %468 = vset.pattern.permute.xlu0 0
  %469 = vperm.xlu0 %468, %v425
  %v470 = vpop.permute.xlu0 %469
  %v472 = vadd.f32 %v448, %v455
  %v473 = vadd.f32 %v449, %v460
  %v474 = vadd.f32 %v450, %v465
  %v475 = vadd.f32 %v451, %v470
  %v476 = vld [vmem:[%s15] sm:$0xff]
  %v477 = vld [vmem:[%s15 + $0x8] sm:$0xff]
  %479 = vset.pattern.permute.xlu0 0
  %480 = vperm.xlu0 %479, %v476
  %v481 = vpop.permute.xlu0 %480
  %484 = vset.pattern.permute.xlu0 0
  %485 = vperm.xlu0 %484, %v477
  %v486 = vpop.permute.xlu0 %485
  %vm488 = vcmask 261120
  %v490 = vsel %vm488, %v426, 0
  %v493 = vsel %vm488, %v427, 0
  %495 = vmatprep.subr.mxu0 0.0
  %496 = vmatpush1.msra.mxu0 %v472
  %497 = vmatprep.subr.mxu0 0.0
  %498 = vmatpush1.msra.mxu0 %v473
  %499 = vmatprep.subr.mxu0 0.0
  %500 = vmatpush1.msra.mxu0 %v474
  %501 = vmatprep.subr.mxu0 0.0
  %502 = vmatpush1.msra.mxu0 %v475
  %503 = vmatprep.subr.mxu0 0.0
  %504 = vmatpush1.msra.mxu0 0.0
  %505 = vmatprep.subr.mxu0 0.0
  %506 = vmatpush1.msra.mxu0 0.0
  %507 = vmatprep.subr.mxu0 0.0
  %508 = vmatpush1.msra.mxu0 0.0
  %509 = vmatprep.subr.mxu0 0.0
  %510 = vmatpush1.msra.mxu0 0.0
  %511 = vmatprep.subr.mxu0 0.0
  %512 = vmatpush1.msra.mxu0 0.0
  %513 = vmatprep.subr.mxu0 0.0
  %514 = vmatpush1.msra.mxu0 0.0
  %515 = vmatprep.subr.mxu0 0.0
  %516 = vmatpush1.msra.mxu0 0.0
  %517 = vmatprep.subr.mxu0 0.0
  %518 = vmatpush1.msra.mxu0 0.0
  %519 = vmatprep.subr.mxu0 0.0
  %520 = vmatpush1.msra.mxu0 0.0
  %521 = vmatprep.subr.mxu0 0.0
  %522 = vmatpush1.msra.mxu0 0.0
  %523 = vmatprep.subr.mxu0 0.0
  %524 = vmatpush1.msra.mxu0 0.0
  %525 = vmatprep.subr.mxu0 0.0
  %526 = vmatpush1.msra.mxu0 0.0
  %527 = vmatprep.subr.mxu0 0.0
  %528 = vmatpush1.msra.mxu0 0.0
  %529 = vmatprep.subr.mxu0 0.0
  %530 = vmatpush1.msra.mxu0 0.0
  %531 = vmatprep.subr.mxu0 0.0
  %532 = vmatpush1.msra.mxu0 0.0
  %533 = vmatprep.subr.mxu0 0.0
  %534 = vmatpush1.msra.mxu0 0.0
  %535 = vmatprep.subr.mxu0 0.0
  %536 = vmatpush1.msra.mxu0 0.0
  %537 = vmatprep.subr.mxu0 0.0
  %538 = vmatpush1.msra.mxu0 0.0
  %539 = vmatprep.subr.mxu0 0.0
  %540 = vmatpush1.msra.mxu0 0.0
  %541 = vmatprep.subr.mxu0 0.0
  %542 = vmatpush1.msra.mxu0 0.0
  %543 = vmatprep.subr.mxu0 0.0
  %544 = vmatpush1.msra.mxu0 0.0
  %545 = vmatprep.subr.mxu0 0.0
  %546 = vmatpush1.msra.mxu0 0.0
  %547 = vmatprep.subr.mxu0 0.0
  %548 = vmatpush1.msra.mxu0 0.0
  %549 = vmatprep.subr.mxu0 0.0
  %550 = vmatpush1.msra.mxu0 0.0
  %551 = vmatprep.subr.mxu0 0.0
  %552 = vmatpush1.msra.mxu0 0.0
  %553 = vmatprep.subr.mxu0 0.0
  %554 = vmatpush1.msra.mxu0 0.0
  %555 = vmatprep.subr.mxu0 0.0
  %556 = vmatpush1.msra.mxu0 0.0
  %557 = vmatprep.subr.mxu0 0.0
  %558 = vmatpush1.msra.mxu0 0.0
  %559 = vmatprep.mubr.f32.mxu0 0.0
  %560 = vmatmul.mubr.f32.gmra.mrb[0].mxu0 %v490
  %v561 = vpop.f32.mrb[0].mxu0
  %v562 = vadd.f32 %v481, %v561
  %v563 = vpop.f32.mrb[0].mxu0
  %564 = vmatprep.mubr.f32.mxu0 0.0
  %565 = vmatmul.mubr.f32.gmra.mrb[0].mxu0 %v493
  %v566 = vpop.f32.mrb[0].mxu0
  %v567 = vadd.f32 %v486, %v566
  %v568 = vpop.f32.mrb[0].mxu0
  %569 = vdwg.mxu0
  %v570 = vld [vmem:[%s17] sm:$0xff]
  %v571 = vld [vmem:[%s17 + $0x8] sm:$0xff]
  %v572 = vld [vmem:[%s17 + $0x10] sm:$0xff]
  %v573 = vld [vmem:[%s17 + $0x18] sm:$0xff]
  %v574 = vld [vmem:[%s19] sm:$0xff]
  %v575 = vld [vmem:[%s19 + $0x8] sm:$0xff]
  %v576 = vld [vmem:[%s19 + $0x10] sm:$0xff]
  %v577 = vld [vmem:[%s19 + $0x18] sm:$0xff]
  %v578 = vmul.f32 %v402, %v570
  %v579 = vmul.f32 %v403, %v571
  %v580 = vmul.f32 %v404, %v572
  %v581 = vmul.f32 %v405, %v573
  %v582 = vmul.f32 %v374, %v578
  %v583 = vmul.f32 %v375, %v579
  %v584 = vmul.f32 %v376, %v580
  %v585 = vmul.f32 %v377, %v581
  %v586 = vsub.f32 %v574, %v582
  %v587 = vsub.f32 %v575, %v583
  %v588 = vsub.f32 %v576, %v584
  %v589 = vsub.f32 %v577, %v585
  %591 = vset.pattern.permute.xlu0 0
  %592 = vperm.xlu0 %591, %v578
  %v593 = vpop.permute.xlu0 %592
  %596 = vset.pattern.permute.xlu0 0
  %597 = vperm.xlu0 %596, %v579
  %v598 = vpop.permute.xlu0 %597
  %601 = vset.pattern.permute.xlu0 0
  %602 = vperm.xlu0 %601, %v580
  %v603 = vpop.permute.xlu0 %602
  %606 = vset.pattern.permute.xlu0 0
  %607 = vperm.xlu0 %606, %v581
  %v608 = vpop.permute.xlu0 %607
  %v610 = vmul.f32 %v361, %v593
  %v611 = vmul.f32 %v362, %v598
  %v612 = vmul.f32 %v363, %v603
  %v613 = vmul.f32 %v364, %v608
  %615 = vset.pattern.permute.xlu0 0
  %616 = vperm.xlu0 %615, %v586
  %v617 = vpop.permute.xlu0 %616
  %620 = vset.pattern.permute.xlu0 0
  %621 = vperm.xlu0 %620, %v587
  %v622 = vpop.permute.xlu0 %621
  %625 = vset.pattern.permute.xlu0 0
  %626 = vperm.xlu0 %625, %v588
  %v627 = vpop.permute.xlu0 %626
  %630 = vset.pattern.permute.xlu0 0
  %631 = vperm.xlu0 %630, %v589
  %v632 = vpop.permute.xlu0 %631
  %v634 = vadd.f32 %v610, %v617
  %v635 = vadd.f32 %v611, %v622
  %v636 = vadd.f32 %v612, %v627
  %v637 = vadd.f32 %v613, %v632
  %vm638 = vcmp.ge.f32.partialorder %v634, 0.0
  %vm639 = vcmp.ge.f32.partialorder %v635, 0.0
  %vm640 = vcmp.ge.f32.partialorder %v636, 0.0
  %vm641 = vcmp.ge.f32.partialorder %v637, 0.0
  %v642 = vmul.f32 %v634, 0.01
  %v643 = vmul.f32 %v635, 0.01
  %v644 = vmul.f32 %v636, 0.01
  %v645 = vmul.f32 %v637, 0.01
  %v646 = vsel %vm638, %v634, %v642
  %v647 = vsel %vm639, %v635, %v643
  %v648 = vsel %vm640, %v636, %v644
  %v649 = vsel %vm641, %v637, %v645
  %v650 = vld [vmem:[%s23] sm:$0xff]
  %v651 = vld [vmem:[%s23 + $0x8] sm:$0xff]
  %652 = vrot.lane.b32.xlu0 %v646, 9
  %v653 = vpop.permute.xlu0 %652
  %654 = vrot.lane.b32.xlu0 %v647, 9
  %v655 = vpop.permute.xlu0 %654
  %656 = vrot.lane.b32.xlu0 %v648, 9
  %v657 = vpop.permute.xlu0 %656
  %658 = vrot.lane.b32.xlu0 %v649, 9
  %v659 = vpop.permute.xlu0 %658
  %v660 = vlaneseq
  %v661 = vshrl.u32 %v660, 7
  %v662 = vsub.s32 0, %v661
  %v663 = vrot.slane %v131, %v662
  %v664 = vmul.f32 %v653, %v663
  %v665 = vmul.f32 %v655, %v663
  %v666 = vmul.f32 %v657, %v663
  %v667 = vmul.f32 %v659, %v663
  %668 = vrot.lane.b32.xlu0 %v646, 8
  %v669 = vpop.permute.xlu0 %668
  %670 = vrot.lane.b32.xlu0 %v647, 8
  %v671 = vpop.permute.xlu0 %670
  %672 = vrot.lane.b32.xlu0 %v648, 8
  %v673 = vpop.permute.xlu0 %672
  %674 = vrot.lane.b32.xlu0 %v649, 8
  %v675 = vpop.permute.xlu0 %674
  %v676 = vlaneseq
  %v677 = vshrl.u32 %v676, 7
  %v678 = vsub.s32 1, %v677
  %v679 = vrot.slane %v131, %v678
  %v680 = vmul.f32 %v669, %v679
  %v681 = vmul.f32 %v671, %v679
  %v682 = vmul.f32 %v673, %v679
  %v683 = vmul.f32 %v675, %v679
  %684 = vrot.lane.b32.xlu0 %v646, 7
  %v685 = vpop.permute.xlu0 %684
  %686 = vrot.lane.b32.xlu0 %v647, 7
  %v687 = vpop.permute.xlu0 %686
  %688 = vrot.lane.b32.xlu0 %v648, 7
  %v689 = vpop.permute.xlu0 %688
  %690 = vrot.lane.b32.xlu0 %v649, 7
  %v691 = vpop.permute.xlu0 %690
  %v692 = vlaneseq
  %v693 = vshrl.u32 %v692, 7
  %v694 = vsub.s32 2, %v693
  %v695 = vrot.slane %v131, %v694
  %v696 = vmul.f32 %v685, %v695
  %v697 = vmul.f32 %v687, %v695
  %v698 = vmul.f32 %v689, %v695
  %v699 = vmul.f32 %v691, %v695
  %700 = vrot.lane.b32.xlu0 %v646, 1
  %v701 = vpop.permute.xlu0 %700
  %702 = vrot.lane.b32.xlu0 %v647, 1
  %v703 = vpop.permute.xlu0 %702
  %704 = vrot.lane.b32.xlu0 %v648, 1
  %v705 = vpop.permute.xlu0 %704
  %706 = vrot.lane.b32.xlu0 %v649, 1
  %v707 = vpop.permute.xlu0 %706
  %v708 = vlaneseq
  %v709 = vshrl.u32 %v708, 7
  %v710 = vsub.s32 3, %v709
  %v711 = vrot.slane %v131, %v710
  %v712 = vmul.f32 %v701, %v711
  %v713 = vmul.f32 %v703, %v711
  %v714 = vmul.f32 %v705, %v711
  %v715 = vmul.f32 %v707, %v711
  %716 = vrot.lane.b32.xlu0 %v646, 127
  %v717 = vpop.permute.xlu0 %716
  %718 = vrot.lane.b32.xlu0 %v647, 127
  %v719 = vpop.permute.xlu0 %718
  %720 = vrot.lane.b32.xlu0 %v648, 127
  %v721 = vpop.permute.xlu0 %720
  %722 = vrot.lane.b32.xlu0 %v649, 127
  %v723 = vpop.permute.xlu0 %722
  %v724 = vlaneseq
  %v725 = vshrl.u32 %v724, 7
  %v726 = vsub.s32 5, %v725
  %v727 = vrot.slane %v131, %v726
  %v728 = vmul.f32 %v717, %v727
  %v729 = vmul.f32 %v719, %v727
  %v730 = vmul.f32 %v721, %v727
  %v731 = vmul.f32 %v723, %v727
  %732 = vrot.lane.b32.xlu0 %v646, 121
  %v733 = vpop.permute.xlu0 %732
  %734 = vrot.lane.b32.xlu0 %v647, 121
  %v735 = vpop.permute.xlu0 %734
  %736 = vrot.lane.b32.xlu0 %v648, 121
  %v737 = vpop.permute.xlu0 %736
  %738 = vrot.lane.b32.xlu0 %v649, 121
  %v739 = vpop.permute.xlu0 %738
  %v740 = vlaneseq
  %v741 = vshrl.u32 %v740, 7
  %v742 = vsub.s32 6, %v741
  %v743 = vrot.slane %v131, %v742
  %v744 = vmul.f32 %v733, %v743
  %v745 = vmul.f32 %v735, %v743
  %v746 = vmul.f32 %v737, %v743
  %v747 = vmul.f32 %v739, %v743
  %748 = vrot.lane.b32.xlu0 %v646, 120
  %v749 = vpop.permute.xlu0 %748
  %750 = vrot.lane.b32.xlu0 %v647, 120
  %v751 = vpop.permute.xlu0 %750
  %752 = vrot.lane.b32.xlu0 %v648, 120
  %v753 = vpop.permute.xlu0 %752
  %754 = vrot.lane.b32.xlu0 %v649, 120
  %v755 = vpop.permute.xlu0 %754
  %v756 = vlaneseq
  %v757 = vshrl.u32 %v756, 7
  %v758 = vsub.s32 7, %v757
  %v759 = vrot.slane %v131, %v758
  %v760 = vmul.f32 %v749, %v759
  %v761 = vmul.f32 %v751, %v759
  %v762 = vmul.f32 %v753, %v759
  %v763 = vmul.f32 %v755, %v759
  %764 = vrot.lane.b32.xlu0 %v646, 119
  %v765 = vpop.permute.xlu0 %764
  %766 = vrot.lane.b32.xlu0 %v647, 119
  %v767 = vpop.permute.xlu0 %766
  %768 = vrot.lane.b32.xlu0 %v648, 119
  %v769 = vpop.permute.xlu0 %768
  %770 = vrot.lane.b32.xlu0 %v649, 119
  %v771 = vpop.permute.xlu0 %770
  %v772 = vlaneseq
  %v773 = vshrl.u32 %v772, 7
  %v774 = vsub.s32 0, %v773
  %v775 = vrot.slane %v132, %v774
  %v776 = vmul.f32 %v765, %v775
  %v777 = vmul.f32 %v767, %v775
  %v778 = vmul.f32 %v769, %v775
  %v779 = vmul.f32 %v771, %v775
  %v780 = vld [vmem:[%s21] sm:$0xff]
  %v781 = vld [vmem:[%s21 + $0x8] sm:$0xff]
  %s782 = scalar_lea.vmem %s21, 16
  %v783 = vld [vmem:[%s782] sm:$0xff]
  %v784 = vld [vmem:[%s782 + $0x8] sm:$0xff]
  %v786 = vsel %vm488, %v783, 0
  %v789 = vsel %vm488, %v784, 0
  %791 = vmatprep.subr.mxu0 0.0
  %792 = vmatpush1.msra.mxu0 %v680
  %793 = vmatprep.subr.mxu0 0.0
  %794 = vmatpush1.msra.mxu0 %v681
  %795 = vmatprep.subr.mxu0 0.0
  %796 = vmatpush1.msra.mxu0 %v682
  %797 = vmatprep.subr.mxu0 0.0
  %798 = vmatpush1.msra.mxu0 %v683
  %799 = vmatprep.subr.mxu0 0.0
  %800 = vmatpush1.msra.mxu0 0.0
  %801 = vmatprep.subr.mxu0 0.0
  %802 = vmatpush1.msra.mxu0 0.0
  %803 = vmatprep.subr.mxu0 0.0
  %804 = vmatpush1.msra.mxu0 0.0
  %805 = vmatprep.subr.mxu0 0.0
  %806 = vmatpush1.msra.mxu0 0.0
  %807 = vmatprep.subr.mxu0 0.0
  %808 = vmatpush1.msra.mxu0 0.0
  %809 = vmatprep.subr.mxu0 0.0
  %810 = vmatpush1.msra.mxu0 0.0
  %811 = vmatprep.subr.mxu0 0.0
  %812 = vmatpush1.msra.mxu0 0.0
  %813 = vmatprep.subr.mxu0 0.0
  %814 = vmatpush1.msra.mxu0 0.0
  %815 = vmatprep.subr.mxu0 0.0
  %816 = vmatpush1.msra.mxu0 0.0
  %817 = vmatprep.subr.mxu0 0.0
  %818 = vmatpush1.msra.mxu0 0.0
  %819 = vmatprep.subr.mxu0 0.0
  %820 = vmatpush1.msra.mxu0 0.0
  %821 = vmatprep.subr.mxu0 0.0
  %822 = vmatpush1.msra.mxu0 0.0
  %823 = vmatprep.subr.mxu0 0.0
  %824 = vmatpush1.msra.mxu0 0.0
  %825 = vmatprep.subr.mxu0 0.0
  %826 = vmatpush1.msra.mxu0 0.0
  %827 = vmatprep.subr.mxu0 0.0
  %828 = vmatpush1.msra.mxu0 0.0
  %829 = vmatprep.subr.mxu0 0.0
  %830 = vmatpush1.msra.mxu0 0.0
  %831 = vmatprep.subr.mxu0 0.0
  %832 = vmatpush1.msra.mxu0 0.0
  %833 = vmatprep.subr.mxu0 0.0
  %834 = vmatpush1.msra.mxu0 0.0
  %835 = vmatprep.subr.mxu0 0.0
  %836 = vmatpush1.msra.mxu0 0.0
  %837 = vmatprep.subr.mxu0 0.0
  %838 = vmatpush1.msra.mxu0 0.0
  %839 = vmatprep.subr.mxu0 0.0
  %840 = vmatpush1.msra.mxu0 0.0
  %841 = vmatprep.subr.mxu0 0.0
  %842 = vmatpush1.msra.mxu0 0.0
  %843 = vmatprep.subr.mxu0 0.0
  %844 = vmatpush1.msra.mxu0 0.0
  %845 = vmatprep.subr.mxu0 0.0
  %846 = vmatpush1.msra.mxu0 0.0
  %847 = vmatprep.subr.mxu0 0.0
  %848 = vmatpush1.msra.mxu0 0.0
  %849 = vmatprep.subr.mxu0 0.0
  %850 = vmatpush1.msra.mxu0 0.0
  %851 = vmatprep.subr.mxu0 0.0
  %852 = vmatpush1.msra.mxu0 0.0
  %853 = vmatprep.subr.mxu0 0.0
  %854 = vmatpush1.msra.mxu0 0.0
  %855 = vmatprep.mubr.f32.mxu0 0.0
  %856 = vmatmul.mubr.f32.gmra.mrb[0].mxu0 %v786
  %v857 = vpop.f32.mrb[0].mxu0
  %v858 = vadd.f32 0.0, %v857
  %v859 = vpop.f32.mrb[0].mxu0
  %860 = vmatprep.mubr.f32.mxu0 0.0
  %861 = vmatmul.mubr.f32.gmra.mrb[0].mxu0 %v789
  %v862 = vpop.f32.mrb[0].mxu0
  %v863 = vadd.f32 0.0, %v862
  %v864 = vpop.f32.mrb[0].mxu0
  %865 = vdwg.mxu0
  %s866 = scalar_lea.vmem %s21, 32
  %v867 = vld [vmem:[%s866] sm:$0xff]
  %v868 = vld [vmem:[%s866 + $0x8] sm:$0xff]
  %s869 = scalar_lea.vmem %s21, 48
  %v870 = vld [vmem:[%s869] sm:$0xff]
  %v871 = vld [vmem:[%s869 + $0x8] sm:$0xff]
  %v873 = vsel %vm488, %v870, 0
  %v876 = vsel %vm488, %v871, 0
  %878 = vmatprep.subr.mxu0 0.0
  %879 = vmatpush1.msra.mxu0 %v712
  %880 = vmatprep.subr.mxu0 0.0
  %881 = vmatpush1.msra.mxu0 %v713
  %882 = vmatprep.subr.mxu0 0.0
  %883 = vmatpush1.msra.mxu0 %v714
  %884 = vmatprep.subr.mxu0 0.0
  %885 = vmatpush1.msra.mxu0 %v715
  %886 = vmatprep.subr.mxu0 0.0
  %887 = vmatpush1.msra.mxu0 0.0
  %888 = vmatprep.subr.mxu0 0.0
  %889 = vmatpush1.msra.mxu0 0.0
  %890 = vmatprep.subr.mxu0 0.0
  %891 = vmatpush1.msra.mxu0 0.0
  %892 = vmatprep.subr.mxu0 0.0
  %893 = vmatpush1.msra.mxu0 0.0
  %894 = vmatprep.subr.mxu0 0.0
  %895 = vmatpush1.msra.mxu0 0.0
  %896 = vmatprep.subr.mxu0 0.0
  %897 = vmatpush1.msra.mxu0 0.0
  %898 = vmatprep.subr.mxu0 0.0
  %899 = vmatpush1.msra.mxu0 0.0
  %900 = vmatprep.subr.mxu0 0.0
  %901 = vmatpush1.msra.mxu0 0.0
  %902 = vmatprep.subr.mxu0 0.0
  %903 = vmatpush1.msra.mxu0 0.0
  %904 = vmatprep.subr.mxu0 0.0
  %905 = vmatpush1.msra.mxu0 0.0
  %906 = vmatprep.subr.mxu0 0.0
  %907 = vmatpush1.msra.mxu0 0.0
  %908 = vmatprep.subr.mxu0 0.0
  %909 = vmatpush1.msra.mxu0 0.0
  %910 = vmatprep.subr.mxu0 0.0
  %911 = vmatpush1.msra.mxu0 0.0
  %912 = vmatprep.subr.mxu0 0.0
  %913 = vmatpush1.msra.mxu0 0.0
  %914 = vmatprep.subr.mxu0 0.0
  %915 = vmatpush1.msra.mxu0 0.0
  %916 = vmatprep.subr.mxu0 0.0
  %917 = vmatpush1.msra.mxu0 0.0
  %918 = vmatprep.subr.mxu0 0.0
  %919 = vmatpush1.msra.mxu0 0.0
  %920 = vmatprep.subr.mxu0 0.0
  %921 = vmatpush1.msra.mxu0 0.0
  %922 = vmatprep.subr.mxu0 0.0
  %923 = vmatpush1.msra.mxu0 0.0
  %924 = vmatprep.subr.mxu0 0.0
  %925 = vmatpush1.msra.mxu0 0.0
  %926 = vmatprep.subr.mxu0 0.0
  %927 = vmatpush1.msra.mxu0 0.0
  %928 = vmatprep.subr.mxu0 0.0
  %929 = vmatpush1.msra.mxu0 0.0
  %930 = vmatprep.subr.mxu0 0.0
  %931 = vmatpush1.msra.mxu0 0.0
  %932 = vmatprep.subr.mxu0 0.0
  %933 = vmatpush1.msra.mxu0 0.0
  %934 = vmatprep.subr.mxu0 0.0
  %935 = vmatpush1.msra.mxu0 0.0
  %936 = vmatprep.subr.mxu0 0.0
  %937 = vmatpush1.msra.mxu0 0.0
  %938 = vmatprep.subr.mxu0 0.0
  %939 = vmatpush1.msra.mxu0 0.0
  %940 = vmatprep.subr.mxu0 0.0
  %941 = vmatpush1.msra.mxu0 0.0
  %942 = vmatprep.mubr.f32.mxu0 0.0
  %943 = vmatmul.mubr.f32.gmra.mrb[0].mxu0 %v873
  %v944 = vpop.f32.mrb[0].mxu0
  %v945 = vadd.f32 0.0, %v944
  %v946 = vpop.f32.mrb[0].mxu0
  %947 = vmatprep.mubr.f32.mxu0 0.0
  %948 = vmatmul.mubr.f32.gmra.mrb[0].mxu0 %v876
  %v949 = vpop.f32.mrb[0].mxu0
  %v950 = vadd.f32 0.0, %v949
  %v951 = vpop.f32.mrb[0].mxu0
  %952 = vdwg.mxu0
  %s953 = scalar_lea.vmem %s21, 64
  %v954 = vld [vmem:[%s953] sm:$0xff]
  %v955 = vld [vmem:[%s953 + $0x8] sm:$0xff]
  %s956 = scalar_lea.vmem %s21, 80
  %v957 = vld [vmem:[%s956] sm:$0xff]
  %v958 = vld [vmem:[%s956 + $0x8] sm:$0xff]
  %v960 = vsel %vm488, %v957, 0
  %v963 = vsel %vm488, %v958, 0
  %965 = vmatprep.subr.mxu0 0.0
  %966 = vmatpush1.msra.mxu0 %v728
  %967 = vmatprep.subr.mxu0 0.0
  %968 = vmatpush1.msra.mxu0 %v729
  %969 = vmatprep.subr.mxu0 0.0
  %970 = vmatpush1.msra.mxu0 %v730
  %971 = vmatprep.subr.mxu0 0.0
  %972 = vmatpush1.msra.mxu0 %v731
  %973 = vmatprep.subr.mxu0 0.0
  %974 = vmatpush1.msra.mxu0 0.0
  %975 = vmatprep.subr.mxu0 0.0
  %976 = vmatpush1.msra.mxu0 0.0
  %977 = vmatprep.subr.mxu0 0.0
  %978 = vmatpush1.msra.mxu0 0.0
  %979 = vmatprep.subr.mxu0 0.0
  %980 = vmatpush1.msra.mxu0 0.0
  %981 = vmatprep.subr.mxu0 0.0
  %982 = vmatpush1.msra.mxu0 0.0
  %983 = vmatprep.subr.mxu0 0.0
  %984 = vmatpush1.msra.mxu0 0.0
  %985 = vmatprep.subr.mxu0 0.0
  %986 = vmatpush1.msra.mxu0 0.0
  %987 = vmatprep.subr.mxu0 0.0
  %988 = vmatpush1.msra.mxu0 0.0
  %989 = vmatprep.subr.mxu0 0.0
  %990 = vmatpush1.msra.mxu0 0.0
  %991 = vmatprep.subr.mxu0 0.0
  %992 = vmatpush1.msra.mxu0 0.0
  %993 = vmatprep.subr.mxu0 0.0
  %994 = vmatpush1.msra.mxu0 0.0
  %995 = vmatprep.subr.mxu0 0.0
  %996 = vmatpush1.msra.mxu0 0.0
  %997 = vmatprep.subr.mxu0 0.0
  %998 = vmatpush1.msra.mxu0 0.0
  %999 = vmatprep.subr.mxu0 0.0
  %1000 = vmatpush1.msra.mxu0 0.0
  %1001 = vmatprep.subr.mxu0 0.0
  %1002 = vmatpush1.msra.mxu0 0.0
  %1003 = vmatprep.subr.mxu0 0.0
  %1004 = vmatpush1.msra.mxu0 0.0
  %1005 = vmatprep.subr.mxu0 0.0
  %1006 = vmatpush1.msra.mxu0 0.0
  %1007 = vmatprep.subr.mxu0 0.0
  %1008 = vmatpush1.msra.mxu0 0.0
  %1009 = vmatprep.subr.mxu0 0.0
  %1010 = vmatpush1.msra.mxu0 0.0
  %1011 = vmatprep.subr.mxu0 0.0
  %1012 = vmatpush1.msra.mxu0 0.0
  %1013 = vmatprep.subr.mxu0 0.0
  %1014 = vmatpush1.msra.mxu0 0.0
  %1015 = vmatprep.subr.mxu0 0.0
  %1016 = vmatpush1.msra.mxu0 0.0
  %1017 = vmatprep.subr.mxu0 0.0
  %1018 = vmatpush1.msra.mxu0 0.0
  %1019 = vmatprep.subr.mxu0 0.0
  %1020 = vmatpush1.msra.mxu0 0.0
  %1021 = vmatprep.subr.mxu0 0.0
  %1022 = vmatpush1.msra.mxu0 0.0
  %1023 = vmatprep.subr.mxu0 0.0
  %1024 = vmatpush1.msra.mxu0 0.0
  %1025 = vmatprep.subr.mxu0 0.0
  %1026 = vmatpush1.msra.mxu0 0.0
  %1027 = vmatprep.subr.mxu0 0.0
  %1028 = vmatpush1.msra.mxu0 0.0
  %1029 = vmatprep.mubr.f32.mxu0 0.0
  %1030 = vmatmul.mubr.f32.gmra.mrb[0].mxu0 %v960
  %v1031 = vpop.f32.mrb[0].mxu0
  %v1032 = vadd.f32 0.0, %v1031
  %v1033 = vpop.f32.mrb[0].mxu0
  %1034 = vmatprep.mubr.f32.mxu0 0.0
  %1035 = vmatmul.mubr.f32.gmra.mrb[0].mxu0 %v963
  %v1036 = vpop.f32.mrb[0].mxu0
  %v1037 = vadd.f32 0.0, %v1036
  %v1038 = vpop.f32.mrb[0].mxu0
  %1039 = vdwg.mxu0
  %s1040 = scalar_lea.vmem %s21, 96
  %v1041 = vld [vmem:[%s1040] sm:$0xff]
  %v1042 = vld [vmem:[%s1040 + $0x8] sm:$0xff]
  %s1043 = scalar_lea.vmem %s21, 112
  %v1044 = vld [vmem:[%s1043] sm:$0xff]
  %v1045 = vld [vmem:[%s1043 + $0x8] sm:$0xff]
  %v1047 = vsel %vm488, %v1044, 0
  %v1050 = vsel %vm488, %v1045, 0
  %1052 = vmatprep.subr.mxu0 0.0
  %1053 = vmatpush1.msra.mxu0 %v760
  %1054 = vmatprep.subr.mxu0 0.0
  %1055 = vmatpush1.msra.mxu0 %v761
  %1056 = vmatprep.subr.mxu0 0.0
  %1057 = vmatpush1.msra.mxu0 %v762
  %1058 = vmatprep.subr.mxu0 0.0
  %1059 = vmatpush1.msra.mxu0 %v763
  %1060 = vmatprep.subr.mxu0 0.0
  %1061 = vmatpush1.msra.mxu0 0.0
  %1062 = vmatprep.subr.mxu0 0.0
  %1063 = vmatpush1.msra.mxu0 0.0
  %1064 = vmatprep.subr.mxu0 0.0
  %1065 = vmatpush1.msra.mxu0 0.0
  %1066 = vmatprep.subr.mxu0 0.0
  %1067 = vmatpush1.msra.mxu0 0.0
  %1068 = vmatprep.subr.mxu0 0.0
  %1069 = vmatpush1.msra.mxu0 0.0
  %1070 = vmatprep.subr.mxu0 0.0
  %1071 = vmatpush1.msra.mxu0 0.0
  %1072 = vmatprep.subr.mxu0 0.0
  %1073 = vmatpush1.msra.mxu0 0.0
  %1074 = vmatprep.subr.mxu0 0.0
  %1075 = vmatpush1.msra.mxu0 0.0
  %1076 = vmatprep.subr.mxu0 0.0
  %1077 = vmatpush1.msra.mxu0 0.0
  %1078 = vmatprep.subr.mxu0 0.0
  %1079 = vmatpush1.msra.mxu0 0.0
  %1080 = vmatprep.subr.mxu0 0.0
  %1081 = vmatpush1.msra.mxu0 0.0
  %1082 = vmatprep.subr.mxu0 0.0
  %1083 = vmatpush1.msra.mxu0 0.0
  %1084 = vmatprep.subr.mxu0 0.0
  %1085 = vmatpush1.msra.mxu0 0.0
  %1086 = vmatprep.subr.mxu0 0.0
  %1087 = vmatpush1.msra.mxu0 0.0
  %1088 = vmatprep.subr.mxu0 0.0
  %1089 = vmatpush1.msra.mxu0 0.0
  %1090 = vmatprep.subr.mxu0 0.0
  %1091 = vmatpush1.msra.mxu0 0.0
  %1092 = vmatprep.subr.mxu0 0.0
  %1093 = vmatpush1.msra.mxu0 0.0
  %1094 = vmatprep.subr.mxu0 0.0
  %1095 = vmatpush1.msra.mxu0 0.0
  %1096 = vmatprep.subr.mxu0 0.0
  %1097 = vmatpush1.msra.mxu0 0.0
  %1098 = vmatprep.subr.mxu0 0.0
  %1099 = vmatpush1.msra.mxu0 0.0
  %1100 = vmatprep.subr.mxu0 0.0
  %1101 = vmatpush1.msra.mxu0 0.0
  %1102 = vmatprep.subr.mxu0 0.0
  %1103 = vmatpush1.msra.mxu0 0.0
  %1104 = vmatprep.subr.mxu0 0.0
  %1105 = vmatpush1.msra.mxu0 0.0
  %1106 = vmatprep.subr.mxu0 0.0
  %1107 = vmatpush1.msra.mxu0 0.0
  %1108 = vmatprep.subr.mxu0 0.0
  %1109 = vmatpush1.msra.mxu0 0.0
  %1110 = vmatprep.subr.mxu0 0.0
  %1111 = vmatpush1.msra.mxu0 0.0
  %1112 = vmatprep.subr.mxu0 0.0
  %1113 = vmatpush1.msra.mxu0 0.0
  %1114 = vmatprep.subr.mxu0 0.0
  %1115 = vmatpush1.msra.mxu0 0.0
  %1116 = vmatprep.mubr.f32.mxu0 0.0
  %1117 = vmatmul.mubr.f32.gmra.mrb[0].mxu0 %v1047
  %v1118 = vpop.f32.mrb[0].mxu0
  %v1119 = vadd.f32 0.0, %v1118
  %v1120 = vpop.f32.mrb[0].mxu0
  %1121 = vmatprep.mubr.f32.mxu0 0.0
  %1122 = vmatmul.mubr.f32.gmra.mrb[0].mxu0 %v1050
  %v1123 = vpop.f32.mrb[0].mxu0
  %v1124 = vadd.f32 0.0, %v1123
  %v1125 = vpop.f32.mrb[0].mxu0
  %1126 = vdwg.mxu0
  %s1127 = scalar_lea.vmem %s21, 128
  %v1128 = vld [vmem:[%s1127] sm:$0xff]
  %v1129 = vld [vmem:[%s1127 + $0x8] sm:$0xff]
  %v1131 = vsel %vm488, %v1128, 0
  %v1134 = vsel %vm488, %v1129, 0
  %1136 = vmatprep.subr.mxu0 0.0
  %1137 = vmatpush1.msra.mxu0 %v776
  %1138 = vmatprep.subr.mxu0 0.0
  %1139 = vmatpush1.msra.mxu0 %v777
  %1140 = vmatprep.subr.mxu0 0.0
  %1141 = vmatpush1.msra.mxu0 %v778
  %1142 = vmatprep.subr.mxu0 0.0
  %1143 = vmatpush1.msra.mxu0 %v779
  %1144 = vmatprep.subr.mxu0 0.0
  %1145 = vmatpush1.msra.mxu0 0.0
  %1146 = vmatprep.subr.mxu0 0.0
  %1147 = vmatpush1.msra.mxu0 0.0
  %1148 = vmatprep.subr.mxu0 0.0
  %1149 = vmatpush1.msra.mxu0 0.0
  %1150 = vmatprep.subr.mxu0 0.0
  %1151 = vmatpush1.msra.mxu0 0.0
  %1152 = vmatprep.subr.mxu0 0.0
  %1153 = vmatpush1.msra.mxu0 0.0
  %1154 = vmatprep.subr.mxu0 0.0
  %1155 = vmatpush1.msra.mxu0 0.0
  %1156 = vmatprep.subr.mxu0 0.0
  %1157 = vmatpush1.msra.mxu0 0.0
  %1158 = vmatprep.subr.mxu0 0.0
  %1159 = vmatpush1.msra.mxu0 0.0
  %1160 = vmatprep.subr.mxu0 0.0
  %1161 = vmatpush1.msra.mxu0 0.0
  %1162 = vmatprep.subr.mxu0 0.0
  %1163 = vmatpush1.msra.mxu0 0.0
  %1164 = vmatprep.subr.mxu0 0.0
  %1165 = vmatpush1.msra.mxu0 0.0
  %1166 = vmatprep.subr.mxu0 0.0
  %1167 = vmatpush1.msra.mxu0 0.0
  %1168 = vmatprep.subr.mxu0 0.0
  %1169 = vmatpush1.msra.mxu0 0.0
  %1170 = vmatprep.subr.mxu0 0.0
  %1171 = vmatpush1.msra.mxu0 0.0
  %1172 = vmatprep.subr.mxu0 0.0
  %1173 = vmatpush1.msra.mxu0 0.0
  %1174 = vmatprep.subr.mxu0 0.0
  %1175 = vmatpush1.msra.mxu0 0.0
  %1176 = vmatprep.subr.mxu0 0.0
  %1177 = vmatpush1.msra.mxu0 0.0
  %1178 = vmatprep.subr.mxu0 0.0
  %1179 = vmatpush1.msra.mxu0 0.0
  %1180 = vmatprep.subr.mxu0 0.0
  %1181 = vmatpush1.msra.mxu0 0.0
  %1182 = vmatprep.subr.mxu0 0.0
  %1183 = vmatpush1.msra.mxu0 0.0
  %1184 = vmatprep.subr.mxu0 0.0
  %1185 = vmatpush1.msra.mxu0 0.0
  %1186 = vmatprep.subr.mxu0 0.0
  %1187 = vmatpush1.msra.mxu0 0.0
  %1188 = vmatprep.subr.mxu0 0.0
  %1189 = vmatpush1.msra.mxu0 0.0
  %1190 = vmatprep.subr.mxu0 0.0
  %1191 = vmatpush1.msra.mxu0 0.0
  %1192 = vmatprep.subr.mxu0 0.0
  %1193 = vmatpush1.msra.mxu0 0.0
  %1194 = vmatprep.subr.mxu0 0.0
  %1195 = vmatpush1.msra.mxu0 0.0
  %1196 = vmatprep.subr.mxu0 0.0
  %1197 = vmatpush1.msra.mxu0 0.0
  %1198 = vmatprep.subr.mxu0 0.0
  %1199 = vmatpush1.msra.mxu0 0.0
  %1200 = vmatprep.mubr.f32.mxu0 0.0
  %1201 = vmatmul.mubr.f32.gmra.mrb[0].mxu0 %v1131
  %v1202 = vpop.f32.mrb[0].mxu0
  %v1203 = vadd.f32 0.0, %v1202
  %v1204 = vpop.f32.mrb[0].mxu0
  %1205 = vmatprep.mubr.f32.mxu0 0.0
  %1206 = vmatmul.mubr.f32.gmra.mrb[0].mxu0 %v1134
  %v1207 = vpop.f32.mrb[0].mxu0
  %v1208 = vadd.f32 0.0, %v1207
  %v1209 = vpop.f32.mrb[0].mxu0
  %1210 = vdwg.mxu0
  %v1212 = vsel %vm488, %v780, 0
  %v1215 = vsel %vm488, %v781, 0
  %1217 = vmatprep.subr.mxu0 0.0
  %1218 = vmatpush1.msra.mxu0 %v664
  %1219 = vmatprep.subr.mxu0 0.0
  %1220 = vmatpush1.msra.mxu0 %v665
  %1221 = vmatprep.subr.mxu0 0.0
  %1222 = vmatpush1.msra.mxu0 %v666
  %1223 = vmatprep.subr.mxu0 0.0
  %1224 = vmatpush1.msra.mxu0 %v667
  %1225 = vmatprep.subr.mxu0 0.0
  %1226 = vmatpush1.msra.mxu0 0.0
  %1227 = vmatprep.subr.mxu0 0.0
  %1228 = vmatpush1.msra.mxu0 0.0
  %1229 = vmatprep.subr.mxu0 0.0
  %1230 = vmatpush1.msra.mxu0 0.0
  %1231 = vmatprep.subr.mxu0 0.0
  %1232 = vmatpush1.msra.mxu0 0.0
  %1233 = vmatprep.subr.mxu0 0.0
  %1234 = vmatpush1.msra.mxu0 0.0
  %1235 = vmatprep.subr.mxu0 0.0
  %1236 = vmatpush1.msra.mxu0 0.0
  %1237 = vmatprep.subr.mxu0 0.0
  %1238 = vmatpush1.msra.mxu0 0.0
  %1239 = vmatprep.subr.mxu0 0.0
  %1240 = vmatpush1.msra.mxu0 0.0
  %1241 = vmatprep.subr.mxu0 0.0
  %1242 = vmatpush1.msra.mxu0 0.0
  %1243 = vmatprep.subr.mxu0 0.0
  %1244 = vmatpush1.msra.mxu0 0.0
  %1245 = vmatprep.subr.mxu0 0.0
  %1246 = vmatpush1.msra.mxu0 0.0
  %1247 = vmatprep.subr.mxu0 0.0
  %1248 = vmatpush1.msra.mxu0 0.0
  %1249 = vmatprep.subr.mxu0 0.0
  %1250 = vmatpush1.msra.mxu0 0.0
  %1251 = vmatprep.subr.mxu0 0.0
  %1252 = vmatpush1.msra.mxu0 0.0
  %1253 = vmatprep.subr.mxu0 0.0
  %1254 = vmatpush1.msra.mxu0 0.0
  %1255 = vmatprep.subr.mxu0 0.0
  %1256 = vmatpush1.msra.mxu0 0.0
  %1257 = vmatprep.subr.mxu0 0.0
  %1258 = vmatpush1.msra.mxu0 0.0
  %1259 = vmatprep.subr.mxu0 0.0
  %1260 = vmatpush1.msra.mxu0 0.0
  %1261 = vmatprep.subr.mxu0 0.0
  %1262 = vmatpush1.msra.mxu0 0.0
  %1263 = vmatprep.subr.mxu0 0.0
  %1264 = vmatpush1.msra.mxu0 0.0
  %1265 = vmatprep.subr.mxu0 0.0
  %1266 = vmatpush1.msra.mxu0 0.0
  %1267 = vmatprep.subr.mxu0 0.0
  %1268 = vmatpush1.msra.mxu0 0.0
  %1269 = vmatprep.subr.mxu0 0.0
  %1270 = vmatpush1.msra.mxu0 0.0
  %1271 = vmatprep.subr.mxu0 0.0
  %1272 = vmatpush1.msra.mxu0 0.0
  %1273 = vmatprep.subr.mxu0 0.0
  %1274 = vmatpush1.msra.mxu0 0.0
  %1275 = vmatprep.subr.mxu0 0.0
  %1276 = vmatpush1.msra.mxu0 0.0
  %1277 = vmatprep.subr.mxu0 0.0
  %1278 = vmatpush1.msra.mxu0 0.0
  %1279 = vmatprep.subr.mxu0 0.0
  %1280 = vmatpush1.msra.mxu0 0.0
  %1281 = vmatprep.mubr.f32.mxu0 0.0
  %1282 = vmatmul.mubr.f32.gmra.mrb[0].mxu0 %v1212
  %v1283 = vpop.f32.mrb[0].mxu0
  %v1284 = vadd.f32 %v858, %v1283
  %v1285 = vpop.f32.mrb[0].mxu0
  %1286 = vmatprep.mubr.f32.mxu0 0.0
  %1287 = vmatmul.mubr.f32.gmra.mrb[0].mxu0 %v1215
  %v1288 = vpop.f32.mrb[0].mxu0
  %v1289 = vadd.f32 %v863, %v1288
  %v1290 = vpop.f32.mrb[0].mxu0
  %1291 = vdwg.mxu0
  %v1293 = vsel %vm488, %v867, 0
  %v1296 = vsel %vm488, %v868, 0
  %1298 = vmatprep.subr.mxu0 0.0
  %1299 = vmatpush1.msra.mxu0 %v696
  %1300 = vmatprep.subr.mxu0 0.0
  %1301 = vmatpush1.msra.mxu0 %v697
  %1302 = vmatprep.subr.mxu0 0.0
  %1303 = vmatpush1.msra.mxu0 %v698
  %1304 = vmatprep.subr.mxu0 0.0
  %1305 = vmatpush1.msra.mxu0 %v699
  %1306 = vmatprep.subr.mxu0 0.0
  %1307 = vmatpush1.msra.mxu0 0.0
  %1308 = vmatprep.subr.mxu0 0.0
  %1309 = vmatpush1.msra.mxu0 0.0
  %1310 = vmatprep.subr.mxu0 0.0
  %1311 = vmatpush1.msra.mxu0 0.0
  %1312 = vmatprep.subr.mxu0 0.0
  %1313 = vmatpush1.msra.mxu0 0.0
  %1314 = vmatprep.subr.mxu0 0.0
  %1315 = vmatpush1.msra.mxu0 0.0
  %1316 = vmatprep.subr.mxu0 0.0
  %1317 = vmatpush1.msra.mxu0 0.0
  %1318 = vmatprep.subr.mxu0 0.0
  %1319 = vmatpush1.msra.mxu0 0.0
  %1320 = vmatprep.subr.mxu0 0.0
  %1321 = vmatpush1.msra.mxu0 0.0
  %1322 = vmatprep.subr.mxu0 0.0
  %1323 = vmatpush1.msra.mxu0 0.0
  %1324 = vmatprep.subr.mxu0 0.0
  %1325 = vmatpush1.msra.mxu0 0.0
  %1326 = vmatprep.subr.mxu0 0.0
  %1327 = vmatpush1.msra.mxu0 0.0
  %1328 = vmatprep.subr.mxu0 0.0
  %1329 = vmatpush1.msra.mxu0 0.0
  %1330 = vmatprep.subr.mxu0 0.0
  %1331 = vmatpush1.msra.mxu0 0.0
  %1332 = vmatprep.subr.mxu0 0.0
  %1333 = vmatpush1.msra.mxu0 0.0
  %1334 = vmatprep.subr.mxu0 0.0
  %1335 = vmatpush1.msra.mxu0 0.0
  %1336 = vmatprep.subr.mxu0 0.0
  %1337 = vmatpush1.msra.mxu0 0.0
  %1338 = vmatprep.subr.mxu0 0.0
  %1339 = vmatpush1.msra.mxu0 0.0
  %1340 = vmatprep.subr.mxu0 0.0
  %1341 = vmatpush1.msra.mxu0 0.0
  %1342 = vmatprep.subr.mxu0 0.0
  %1343 = vmatpush1.msra.mxu0 0.0
  %1344 = vmatprep.subr.mxu0 0.0
  %1345 = vmatpush1.msra.mxu0 0.0
  %1346 = vmatprep.subr.mxu0 0.0
  %1347 = vmatpush1.msra.mxu0 0.0
  %1348 = vmatprep.subr.mxu0 0.0
  %1349 = vmatpush1.msra.mxu0 0.0
  %1350 = vmatprep.subr.mxu0 0.0
  %1351 = vmatpush1.msra.mxu0 0.0
  %1352 = vmatprep.subr.mxu0 0.0
  %1353 = vmatpush1.msra.mxu0 0.0
  %1354 = vmatprep.subr.mxu0 0.0
  %1355 = vmatpush1.msra.mxu0 0.0
  %1356 = vmatprep.subr.mxu0 0.0
  %1357 = vmatpush1.msra.mxu0 0.0
  %1358 = vmatprep.subr.mxu0 0.0
  %1359 = vmatpush1.msra.mxu0 0.0
  %1360 = vmatprep.subr.mxu0 0.0
  %1361 = vmatpush1.msra.mxu0 0.0
  %1362 = vmatprep.mubr.f32.mxu0 0.0
  %1363 = vmatmul.mubr.f32.gmra.mrb[0].mxu0 %v1293
  %v1364 = vpop.f32.mrb[0].mxu0
  %v1365 = vadd.f32 %v945, %v1364
  %v1366 = vpop.f32.mrb[0].mxu0
  %1367 = vmatprep.mubr.f32.mxu0 0.0
  %1368 = vmatmul.mubr.f32.gmra.mrb[0].mxu0 %v1296
  %v1369 = vpop.f32.mrb[0].mxu0
  %v1370 = vadd.f32 %v950, %v1369
  %v1371 = vpop.f32.mrb[0].mxu0
  %1372 = vdwg.mxu0
  %v1374 = vsel %vm488, %v954, 0
  %v1377 = vsel %vm488, %v955, 0
  %1379 = vmatprep.subr.mxu0 0.0
  %1380 = vmatpush1.msra.mxu0 %v646
  %1381 = vmatprep.subr.mxu0 0.0
  %1382 = vmatpush1.msra.mxu0 %v647
  %1383 = vmatprep.subr.mxu0 0.0
  %1384 = vmatpush1.msra.mxu0 %v648
  %1385 = vmatprep.subr.mxu0 0.0
  %1386 = vmatpush1.msra.mxu0 %v649
  %1387 = vmatprep.subr.mxu0 0.0
  %1388 = vmatpush1.msra.mxu0 0.0
  %1389 = vmatprep.subr.mxu0 0.0
  %1390 = vmatpush1.msra.mxu0 0.0
  %1391 = vmatprep.subr.mxu0 0.0
  %1392 = vmatpush1.msra.mxu0 0.0
  %1393 = vmatprep.subr.mxu0 0.0
  %1394 = vmatpush1.msra.mxu0 0.0
  %1395 = vmatprep.subr.mxu0 0.0
  %1396 = vmatpush1.msra.mxu0 0.0
  %1397 = vmatprep.subr.mxu0 0.0
  %1398 = vmatpush1.msra.mxu0 0.0
  %1399 = vmatprep.subr.mxu0 0.0
  %1400 = vmatpush1.msra.mxu0 0.0
  %1401 = vmatprep.subr.mxu0 0.0
  %1402 = vmatpush1.msra.mxu0 0.0
  %1403 = vmatprep.subr.mxu0 0.0
  %1404 = vmatpush1.msra.mxu0 0.0
  %1405 = vmatprep.subr.mxu0 0.0
  %1406 = vmatpush1.msra.mxu0 0.0
  %1407 = vmatprep.subr.mxu0 0.0
  %1408 = vmatpush1.msra.mxu0 0.0
  %1409 = vmatprep.subr.mxu0 0.0
  %1410 = vmatpush1.msra.mxu0 0.0
  %1411 = vmatprep.subr.mxu0 0.0
  %1412 = vmatpush1.msra.mxu0 0.0
  %1413 = vmatprep.subr.mxu0 0.0
  %1414 = vmatpush1.msra.mxu0 0.0
  %1415 = vmatprep.subr.mxu0 0.0
  %1416 = vmatpush1.msra.mxu0 0.0
  %1417 = vmatprep.subr.mxu0 0.0
  %1418 = vmatpush1.msra.mxu0 0.0
  %1419 = vmatprep.subr.mxu0 0.0
  %1420 = vmatpush1.msra.mxu0 0.0
  %1421 = vmatprep.subr.mxu0 0.0
  %1422 = vmatpush1.msra.mxu0 0.0
  %1423 = vmatprep.subr.mxu0 0.0
  %1424 = vmatpush1.msra.mxu0 0.0
  %1425 = vmatprep.subr.mxu0 0.0
  %1426 = vmatpush1.msra.mxu0 0.0
  %1427 = vmatprep.subr.mxu0 0.0
  %1428 = vmatpush1.msra.mxu0 0.0
  %1429 = vmatprep.subr.mxu0 0.0
  %1430 = vmatpush1.msra.mxu0 0.0
  %1431 = vmatprep.subr.mxu0 0.0
  %1432 = vmatpush1.msra.mxu0 0.0
  %1433 = vmatprep.subr.mxu0 0.0
  %1434 = vmatpush1.msra.mxu0 0.0
  %1435 = vmatprep.subr.mxu0 0.0
  %1436 = vmatpush1.msra.mxu0 0.0
  %1437 = vmatprep.subr.mxu0 0.0
  %1438 = vmatpush1.msra.mxu0 0.0
  %1439 = vmatprep.subr.mxu0 0.0
  %1440 = vmatpush1.msra.mxu0 0.0
  %1441 = vmatprep.subr.mxu0 0.0
  %1442 = vmatpush1.msra.mxu0 0.0
  %1443 = vmatprep.mubr.f32.mxu0 0.0
  %1444 = vmatmul.mubr.f32.gmra.mrb[0].mxu0 %v1374
  %v1445 = vpop.f32.mrb[0].mxu0
  %v1446 = vadd.f32 %v1032, %v1445
  %v1447 = vpop.f32.mrb[0].mxu0
  %1448 = vmatprep.mubr.f32.mxu0 0.0
  %1449 = vmatmul.mubr.f32.gmra.mrb[0].mxu0 %v1377
  %v1450 = vpop.f32.mrb[0].mxu0
  %v1451 = vadd.f32 %v1037, %v1450
  %v1452 = vpop.f32.mrb[0].mxu0
  %1453 = vdwg.mxu0
  %v1455 = vsel %vm488, %v1041, 0
  %v1458 = vsel %vm488, %v1042, 0
  %1460 = vmatprep.subr.mxu0 0.0
  %1461 = vmatpush1.msra.mxu0 %v744
  %1462 = vmatprep.subr.mxu0 0.0
  %1463 = vmatpush1.msra.mxu0 %v745
  %1464 = vmatprep.subr.mxu0 0.0
  %1465 = vmatpush1.msra.mxu0 %v746
  %1466 = vmatprep.subr.mxu0 0.0
  %1467 = vmatpush1.msra.mxu0 %v747
  %1468 = vmatprep.subr.mxu0 0.0
  %1469 = vmatpush1.msra.mxu0 0.0
  %1470 = vmatprep.subr.mxu0 0.0
  %1471 = vmatpush1.msra.mxu0 0.0
  %1472 = vmatprep.subr.mxu0 0.0
  %1473 = vmatpush1.msra.mxu0 0.0
  %1474 = vmatprep.subr.mxu0 0.0
  %1475 = vmatpush1.msra.mxu0 0.0
  %1476 = vmatprep.subr.mxu0 0.0
  %1477 = vmatpush1.msra.mxu0 0.0
  %1478 = vmatprep.subr.mxu0 0.0
  %1479 = vmatpush1.msra.mxu0 0.0
  %1480 = vmatprep.subr.mxu0 0.0
  %1481 = vmatpush1.msra.mxu0 0.0
  %1482 = vmatprep.subr.mxu0 0.0
  %1483 = vmatpush1.msra.mxu0 0.0
  %1484 = vmatprep.subr.mxu0 0.0
  %1485 = vmatpush1.msra.mxu0 0.0
  %1486 = vmatprep.subr.mxu0 0.0
  %1487 = vmatpush1.msra.mxu0 0.0
  %1488 = vmatprep.subr.mxu0 0.0
  %1489 = vmatpush1.msra.mxu0 0.0
  %1490 = vmatprep.subr.mxu0 0.0
  %1491 = vmatpush1.msra.mxu0 0.0
  %1492 = vmatprep.subr.mxu0 0.0
  %1493 = vmatpush1.msra.mxu0 0.0
  %1494 = vmatprep.subr.mxu0 0.0
  %1495 = vmatpush1.msra.mxu0 0.0
  %1496 = vmatprep.subr.mxu0 0.0
  %1497 = vmatpush1.msra.mxu0 0.0
  %1498 = vmatprep.subr.mxu0 0.0
  %1499 = vmatpush1.msra.mxu0 0.0
  %1500 = vmatprep.subr.mxu0 0.0
  %1501 = vmatpush1.msra.mxu0 0.0
  %1502 = vmatprep.subr.mxu0 0.0
  %1503 = vmatpush1.msra.mxu0 0.0
  %1504 = vmatprep.subr.mxu0 0.0
  %1505 = vmatpush1.msra.mxu0 0.0
  %1506 = vmatprep.subr.mxu0 0.0
  %1507 = vmatpush1.msra.mxu0 0.0
  %1508 = vmatprep.subr.mxu0 0.0
  %1509 = vmatpush1.msra.mxu0 0.0
  %1510 = vmatprep.subr.mxu0 0.0
  %1511 = vmatpush1.msra.mxu0 0.0
  %1512 = vmatprep.subr.mxu0 0.0
  %1513 = vmatpush1.msra.mxu0 0.0
  %1514 = vmatprep.subr.mxu0 0.0
  %1515 = vmatpush1.msra.mxu0 0.0
  %1516 = vmatprep.subr.mxu0 0.0
  %1517 = vmatpush1.msra.mxu0 0.0
  %1518 = vmatprep.subr.mxu0 0.0
  %1519 = vmatpush1.msra.mxu0 0.0
  %1520 = vmatprep.subr.mxu0 0.0
  %1521 = vmatpush1.msra.mxu0 0.0
  %1522 = vmatprep.subr.mxu0 0.0
  %1523 = vmatpush1.msra.mxu0 0.0
  %1524 = vmatprep.mubr.f32.mxu0 0.0
  %1525 = vmatmul.mubr.f32.gmra.mrb[0].mxu0 %v1455
  %v1526 = vpop.f32.mrb[0].mxu0
  %v1527 = vadd.f32 %v1119, %v1526
  %v1528 = vpop.f32.mrb[0].mxu0
  %1529 = vmatprep.mubr.f32.mxu0 0.0
  %1530 = vmatmul.mubr.f32.gmra.mrb[0].mxu0 %v1458
  %v1531 = vpop.f32.mrb[0].mxu0
  %v1532 = vadd.f32 %v1124, %v1531
  %v1533 = vpop.f32.mrb[0].mxu0
  %1534 = vdwg.mxu0
  %v1535 = vadd.f32 %v1284, %v1365
  %v1536 = vadd.f32 %v1289, %v1370
  %v1537 = vadd.f32 %v1446, %v1527
  %v1538 = vadd.f32 %v1451, %v1532
  %v1539 = vadd.f32 %v1535, %v1537
  %v1540 = vadd.f32 %v1536, %v1538
  %v1541 = vadd.f32 %v1539, %v1203
  %v1542 = vadd.f32 %v1540, %v1208
  %1544 = vset.pattern.permute.xlu0 0
  %1545 = vperm.xlu0 %1544, %v650
  %v1546 = vpop.permute.xlu0 %1545
  %1549 = vset.pattern.permute.xlu0 0
  %1550 = vperm.xlu0 %1549, %v651
  %v1551 = vpop.permute.xlu0 %1550
  %v1553 = vadd.f32 %v1541, %v1546
  %v1554 = vadd.f32 %v1542, %v1551
  %v1555 = vadd.f32 %v1553, %v562
  %v1556 = vadd.f32 %v1554, %v567
  %v1557 = vld [vmem:[%s25] sm:$0xff]
  %v1558 = vld [vmem:[%s25 + $0x8] sm:$0xff]
  %v1559 = vld [vmem:[%s27] sm:$0xff]
  %v1560 = vld [vmem:[%s27 + $0x8] sm:$0xff]
  %1562 = vset.pattern.permute.xlu0 0
  %1563 = vperm.xlu0 %1562, %v1559
  %v1564 = vpop.permute.xlu0 %1563
  %1567 = vset.pattern.permute.xlu0 0
  %1568 = vperm.xlu0 %1567, %v1560
  %v1569 = vpop.permute.xlu0 %1568
  %vm1571 = vcmask 64512
  %v1573 = vsel %vm1571, %v1557, 0
  %v1576 = vsel %vm1571, %v1558, 0
  %1578 = vmatprep.subr.mxu0 0.0
  %1579 = vmatpush1.msra.mxu0 %v156
  %1580 = vmatprep.subr.mxu0 0.0
  %1581 = vmatpush1.msra.mxu0 0.0
  %1582 = vmatprep.subr.mxu0 0.0
  %1583 = vmatpush1.msra.mxu0 0.0
  %1584 = vmatprep.subr.mxu0 0.0
  %1585 = vmatpush1.msra.mxu0 0.0
  %1586 = vmatprep.subr.mxu0 0.0
  %1587 = vmatpush1.msra.mxu0 0.0
  %1588 = vmatprep.subr.mxu0 0.0
  %1589 = vmatpush1.msra.mxu0 0.0
  %1590 = vmatprep.subr.mxu0 0.0
  %1591 = vmatpush1.msra.mxu0 0.0
  %1592 = vmatprep.subr.mxu0 0.0
  %1593 = vmatpush1.msra.mxu0 0.0
  %1594 = vmatprep.subr.mxu0 0.0
  %1595 = vmatpush1.msra.mxu0 0.0
  %1596 = vmatprep.subr.mxu0 0.0
  %1597 = vmatpush1.msra.mxu0 0.0
  %1598 = vmatprep.subr.mxu0 0.0
  %1599 = vmatpush1.msra.mxu0 0.0
  %1600 = vmatprep.subr.mxu0 0.0
  %1601 = vmatpush1.msra.mxu0 0.0
  %1602 = vmatprep.subr.mxu0 0.0
  %1603 = vmatpush1.msra.mxu0 0.0
  %1604 = vmatprep.subr.mxu0 0.0
  %1605 = vmatpush1.msra.mxu0 0.0
  %1606 = vmatprep.subr.mxu0 0.0
  %1607 = vmatpush1.msra.mxu0 0.0
  %1608 = vmatprep.subr.mxu0 0.0
  %1609 = vmatpush1.msra.mxu0 0.0
  %1610 = vmatprep.subr.mxu0 0.0
  %1611 = vmatpush1.msra.mxu0 0.0
  %1612 = vmatprep.subr.mxu0 0.0
  %1613 = vmatpush1.msra.mxu0 0.0
  %1614 = vmatprep.subr.mxu0 0.0
  %1615 = vmatpush1.msra.mxu0 0.0
  %1616 = vmatprep.subr.mxu0 0.0
  %1617 = vmatpush1.msra.mxu0 0.0
  %1618 = vmatprep.subr.mxu0 0.0
  %1619 = vmatpush1.msra.mxu0 0.0
  %1620 = vmatprep.subr.mxu0 0.0
  %1621 = vmatpush1.msra.mxu0 0.0
  %1622 = vmatprep.subr.mxu0 0.0
  %1623 = vmatpush1.msra.mxu0 0.0
  %1624 = vmatprep.subr.mxu0 0.0
  %1625 = vmatpush1.msra.mxu0 0.0
  %1626 = vmatprep.subr.mxu0 0.0
  %1627 = vmatpush1.msra.mxu0 0.0
  %1628 = vmatprep.subr.mxu0 0.0
  %1629 = vmatpush1.msra.mxu0 0.0
  %1630 = vmatprep.subr.mxu0 0.0
  %1631 = vmatpush1.msra.mxu0 0.0
  %1632 = vmatprep.subr.mxu0 0.0
  %1633 = vmatpush1.msra.mxu0 0.0
  %1634 = vmatprep.subr.mxu0 0.0
  %1635 = vmatpush1.msra.mxu0 0.0
  %1636 = vmatprep.subr.mxu0 0.0
  %1637 = vmatpush1.msra.mxu0 0.0
  %1638 = vmatprep.subr.mxu0 0.0
  %1639 = vmatpush1.msra.mxu0 0.0
  %1640 = vmatprep.subr.mxu0 0.0
  %1641 = vmatpush1.msra.mxu0 0.0
  %1642 = vmatprep.mubr.f32.mxu0 0.0
  %1643 = vmatmul.mubr.f32.gmra.mrb[0].mxu0 %v1573
  %v1644 = vpop.f32.mrb[0].mxu0
  %v1645 = vadd.f32 %v1564, %v1644
  %v1646 = vpop.f32.mrb[0].mxu0
  %1647 = vmatprep.mubr.f32.mxu0 0.0
  %1648 = vmatmul.mubr.f32.gmra.mrb[0].mxu0 %v1576
  %v1649 = vpop.f32.mrb[0].mxu0
  %v1650 = vadd.f32 %v1569, %v1649
  %v1651 = vpop.f32.mrb[0].mxu0
  %1652 = vdwg.mxu0
  %v1653 = vadd.f32 %v1555, %v1645
  %v1654 = vadd.f32 %v1556, %v1650
  %1655 = vadd.xlane.f32.xlu0 %v1653
  %v1656 = vpop.xlane.xlu0 %1655
  %1657 = vadd.xlane.f32.xlu0 %v1654
  %v1658 = vpop.xlane.xlu0 %1657
  %v1659 = vmul.f32 %v1656, %v373
  %v1660 = vmul.f32 %v1658, %v373
  %v1661 = vsub.f32 %v1653, %v1659
  %v1662 = vsub.f32 %v1654, %v1660
  %v1663 = vmul.f32 %v1661, %v1661
  %v1664 = vmul.f32 %v1662, %v1662
  %1665 = vadd.xlane.f32.xlu0 %v1663
  %v1666 = vpop.xlane.xlu0 %1665
  %1667 = vadd.xlane.f32.xlu0 %v1664
  %v1668 = vpop.xlane.xlu0 %1667
  %v1669 = vmul.f32 %v1666, %v373
  %v1670 = vmul.f32 %v1668, %v373
  %v1671 = vadd.f32 %v1669, 1e-05
  %v1672 = vadd.f32 %v1670, 1e-05
  %v1673 = vrsqrt.pop %v1671
  %v1674 = vrsqrt.pop %v1672
  %v1675 = vld [vmem:[%s29] sm:$0xff]
  %v1676 = vld [vmem:[%s29 + $0x8] sm:$0xff]
  %v1677 = vld [vmem:[%s31] sm:$0xff]
  %v1678 = vld [vmem:[%s31 + $0x8] sm:$0xff]
  %v1679 = vmul.f32 %v1673, %v1675
  %v1680 = vmul.f32 %v1674, %v1676
  %v1681 = vmul.f32 %v1659, %v1679
  %v1682 = vmul.f32 %v1660, %v1680
  %v1683 = vsub.f32 %v1677, %v1681
  %v1684 = vsub.f32 %v1678, %v1682
  %1686 = vset.pattern.permute.xlu0 0
  %1687 = vperm.xlu0 %1686, %v1679
  %v1688 = vpop.permute.xlu0 %1687
  %1691 = vset.pattern.permute.xlu0 0
  %1692 = vperm.xlu0 %1691, %v1680
  %v1693 = vpop.permute.xlu0 %1692
  %v1695 = vmul.f32 %v1653, %v1688
  %v1696 = vmul.f32 %v1654, %v1693
  %1698 = vset.pattern.permute.xlu0 0
  %1699 = vperm.xlu0 %1698, %v1683
  %v1700 = vpop.permute.xlu0 %1699
  %1703 = vset.pattern.permute.xlu0 0
  %1704 = vperm.xlu0 %1703, %v1684
  %v1705 = vpop.permute.xlu0 %1704
  %v1707 = vadd.f32 %v1695, %v1700
  %v1708 = vadd.f32 %v1696, %v1705
  %vm1709 = vcmp.ge.f32.partialorder %v1707, 0.0
  %vm1710 = vcmp.ge.f32.partialorder %v1708, 0.0
  %v1711 = vmul.f32 %v1707, 0.01
  %v1712 = vmul.f32 %v1708, 0.01
  %v1713 = vsel %vm1709, %v1707, %v1711
  %v1714 = vsel %vm1710, %v1708, %v1712
  %v1715 = vld [vmem:[%s35] sm:$0xff]
  %v1716 = vld [vmem:[%s35 + $0x8] sm:$0xff]
  %1717 = vrot.lane.b32.xlu0 %v1713, 9
  %v1718 = vpop.permute.xlu0 %1717
  %1719 = vrot.lane.b32.xlu0 %v1714, 9
  %v1720 = vpop.permute.xlu0 %1719
  %v1721 = vmul.f32 %v1718, %v663
  %v1722 = vmul.f32 %v1720, %v663
  %1723 = vrot.lane.b32.xlu0 %v1713, 8
  %v1724 = vpop.permute.xlu0 %1723
  %1725 = vrot.lane.b32.xlu0 %v1714, 8
  %v1726 = vpop.permute.xlu0 %1725
  %v1727 = vmul.f32 %v1724, %v679
  %v1728 = vmul.f32 %v1726, %v679
  %1729 = vrot.lane.b32.xlu0 %v1713, 7
  %v1730 = vpop.permute.xlu0 %1729
  %1731 = vrot.lane.b32.xlu0 %v1714, 7
  %v1732 = vpop.permute.xlu0 %1731
  %v1733 = vmul.f32 %v1730, %v695
  %v1734 = vmul.f32 %v1732, %v695
  %1735 = vrot.lane.b32.xlu0 %v1713, 1
  %v1736 = vpop.permute.xlu0 %1735
  %1737 = vrot.lane.b32.xlu0 %v1714, 1
  %v1738 = vpop.permute.xlu0 %1737
  %v1739 = vmul.f32 %v1736, %v711
  %v1740 = vmul.f32 %v1738, %v711
  %1741 = vrot.lane.b32.xlu0 %v1713, 127
  %v1742 = vpop.permute.xlu0 %1741
  %1743 = vrot.lane.b32.xlu0 %v1714, 127
  %v1744 = vpop.permute.xlu0 %1743
  %v1745 = vmul.f32 %v1742, %v727
  %v1746 = vmul.f32 %v1744, %v727
  %1747 = vrot.lane.b32.xlu0 %v1713, 121
  %v1748 = vpop.permute.xlu0 %1747
  %1749 = vrot.lane.b32.xlu0 %v1714, 121
  %v1750 = vpop.permute.xlu0 %1749
  %v1751 = vmul.f32 %v1748, %v743
  %v1752 = vmul.f32 %v1750, %v743
  %1753 = vrot.lane.b32.xlu0 %v1713, 120
  %v1754 = vpop.permute.xlu0 %1753
  %1755 = vrot.lane.b32.xlu0 %v1714, 120
  %v1756 = vpop.permute.xlu0 %1755
  %v1757 = vmul.f32 %v1754, %v759
  %v1758 = vmul.f32 %v1756, %v759
  %1759 = vrot.lane.b32.xlu0 %v1713, 119
  %v1760 = vpop.permute.xlu0 %1759
  %1761 = vrot.lane.b32.xlu0 %v1714, 119
  %v1762 = vpop.permute.xlu0 %1761
  %v1763 = vmul.f32 %v1760, %v775
  %v1764 = vmul.f32 %v1762, %v775
  %v1765 = vld [vmem:[%s33] sm:$0xff]
  %v1766 = vld [vmem:[%s33 + $0x8] sm:$0xff]
  %s1767 = scalar_lea.vmem %s33, 16
  %v1768 = vld [vmem:[%s1767] sm:$0xff]
  %v1769 = vld [vmem:[%s1767 + $0x8] sm:$0xff]
  %vm1770 = vcmask 130048
  %v1772 = vsel %vm1770, %v1768, 0
  %v1775 = vsel %vm1770, %v1769, 0
  %1777 = vmatprep.subr.mxu0 0.0
  %1778 = vmatpush1.msra.mxu0 %v1727
  %1779 = vmatprep.subr.mxu0 0.0
  %1780 = vmatpush1.msra.mxu0 %v1728
  %1781 = vmatprep.subr.mxu0 0.0
  %1782 = vmatpush1.msra.mxu0 0.0
  %1783 = vmatprep.subr.mxu0 0.0
  %1784 = vmatpush1.msra.mxu0 0.0
  %1785 = vmatprep.subr.mxu0 0.0
  %1786 = vmatpush1.msra.mxu0 0.0
  %1787 = vmatprep.subr.mxu0 0.0
  %1788 = vmatpush1.msra.mxu0 0.0
  %1789 = vmatprep.subr.mxu0 0.0
  %1790 = vmatpush1.msra.mxu0 0.0
  %1791 = vmatprep.subr.mxu0 0.0
  %1792 = vmatpush1.msra.mxu0 0.0
  %1793 = vmatprep.subr.mxu0 0.0
  %1794 = vmatpush1.msra.mxu0 0.0
  %1795 = vmatprep.subr.mxu0 0.0
  %1796 = vmatpush1.msra.mxu0 0.0
  %1797 = vmatprep.subr.mxu0 0.0
  %1798 = vmatpush1.msra.mxu0 0.0
  %1799 = vmatprep.subr.mxu0 0.0
  %1800 = vmatpush1.msra.mxu0 0.0
  %1801 = vmatprep.subr.mxu0 0.0
  %1802 = vmatpush1.msra.mxu0 0.0
  %1803 = vmatprep.subr.mxu0 0.0
  %1804 = vmatpush1.msra.mxu0 0.0
  %1805 = vmatprep.subr.mxu0 0.0
  %1806 = vmatpush1.msra.mxu0 0.0
  %1807 = vmatprep.subr.mxu0 0.0
  %1808 = vmatpush1.msra.mxu0 0.0
  %1809 = vmatprep.subr.mxu0 0.0
  %1810 = vmatpush1.msra.mxu0 0.0
  %1811 = vmatprep.subr.mxu0 0.0
  %1812 = vmatpush1.msra.mxu0 0.0
  %1813 = vmatprep.subr.mxu0 0.0
  %1814 = vmatpush1.msra.mxu0 0.0
  %1815 = vmatprep.subr.mxu0 0.0
  %1816 = vmatpush1.msra.mxu0 0.0
  %1817 = vmatprep.subr.mxu0 0.0
  %1818 = vmatpush1.msra.mxu0 0.0
  %1819 = vmatprep.subr.mxu0 0.0
  %1820 = vmatpush1.msra.mxu0 0.0
  %1821 = vmatprep.subr.mxu0 0.0
  %1822 = vmatpush1.msra.mxu0 0.0
  %1823 = vmatprep.subr.mxu0 0.0
  %1824 = vmatpush1.msra.mxu0 0.0
  %1825 = vmatprep.subr.mxu0 0.0
  %1826 = vmatpush1.msra.mxu0 0.0
  %1827 = vmatprep.subr.mxu0 0.0
  %1828 = vmatpush1.msra.mxu0 0.0
  %1829 = vmatprep.subr.mxu0 0.0
  %1830 = vmatpush1.msra.mxu0 0.0
  %1831 = vmatprep.subr.mxu0 0.0
  %1832 = vmatpush1.msra.mxu0 0.0
  %1833 = vmatprep.subr.mxu0 0.0
  %1834 = vmatpush1.msra.mxu0 0.0
  %1835 = vmatprep.subr.mxu0 0.0
  %1836 = vmatpush1.msra.mxu0 0.0
  %1837 = vmatprep.subr.mxu0 0.0
  %1838 = vmatpush1.msra.mxu0 0.0
  %1839 = vmatprep.subr.mxu0 0.0
  %1840 = vmatpush1.msra.mxu0 0.0
  %1841 = vmatprep.mubr.f32.mxu0 0.0
  %1842 = vmatmul.mubr.f32.gmra.mrb[0].mxu0 %v1772
  %v1843 = vpop.f32.mrb[0].mxu0
  %v1844 = vadd.f32 0.0, %v1843
  %v1845 = vpop.f32.mrb[0].mxu0
  %1846 = vmatprep.mubr.f32.mxu0 0.0
  %1847 = vmatmul.mubr.f32.gmra.mrb[0].mxu0 %v1775
  %v1848 = vpop.f32.mrb[0].mxu0
  %v1849 = vadd.f32 0.0, %v1848
  %v1850 = vpop.f32.mrb[0].mxu0
  %1851 = vdwg.mxu0
  %s1852 = scalar_lea.vmem %s33, 32
  %v1853 = vld [vmem:[%s1852] sm:$0xff]
  %v1854 = vld [vmem:[%s1852 + $0x8] sm:$0xff]
  %s1855 = scalar_lea.vmem %s33, 48
  %v1856 = vld [vmem:[%s1855] sm:$0xff]
  %v1857 = vld [vmem:[%s1855 + $0x8] sm:$0xff]
  %v1859 = vsel %vm1770, %v1856, 0
  %v1862 = vsel %vm1770, %v1857, 0
  %1864 = vmatprep.subr.mxu0 0.0
  %1865 = vmatpush1.msra.mxu0 %v1739
  %1866 = vmatprep.subr.mxu0 0.0
  %1867 = vmatpush1.msra.mxu0 %v1740
  %1868 = vmatprep.subr.mxu0 0.0
  %1869 = vmatpush1.msra.mxu0 0.0
  %1870 = vmatprep.subr.mxu0 0.0
  %1871 = vmatpush1.msra.mxu0 0.0
  %1872 = vmatprep.subr.mxu0 0.0
  %1873 = vmatpush1.msra.mxu0 0.0
  %1874 = vmatprep.subr.mxu0 0.0
  %1875 = vmatpush1.msra.mxu0 0.0
  %1876 = vmatprep.subr.mxu0 0.0
  %1877 = vmatpush1.msra.mxu0 0.0
  %1878 = vmatprep.subr.mxu0 0.0
  %1879 = vmatpush1.msra.mxu0 0.0
  %1880 = vmatprep.subr.mxu0 0.0
  %1881 = vmatpush1.msra.mxu0 0.0
  %1882 = vmatprep.subr.mxu0 0.0
  %1883 = vmatpush1.msra.mxu0 0.0
  %1884 = vmatprep.subr.mxu0 0.0
  %1885 = vmatpush1.msra.mxu0 0.0
  %1886 = vmatprep.subr.mxu0 0.0
  %1887 = vmatpush1.msra.mxu0 0.0
  %1888 = vmatprep.subr.mxu0 0.0
  %1889 = vmatpush1.msra.mxu0 0.0
  %1890 = vmatprep.subr.mxu0 0.0
  %1891 = vmatpush1.msra.mxu0 0.0
  %1892 = vmatprep.subr.mxu0 0.0
  %1893 = vmatpush1.msra.mxu0 0.0
  %1894 = vmatprep.subr.mxu0 0.0
  %1895 = vmatpush1.msra.mxu0 0.0
  %1896 = vmatprep.subr.mxu0 0.0
  %1897 = vmatpush1.msra.mxu0 0.0
  %1898 = vmatprep.subr.mxu0 0.0
  %1899 = vmatpush1.msra.mxu0 0.0
  %1900 = vmatprep.subr.mxu0 0.0
  %1901 = vmatpush1.msra.mxu0 0.0
  %1902 = vmatprep.subr.mxu0 0.0
  %1903 = vmatpush1.msra.mxu0 0.0
  %1904 = vmatprep.subr.mxu0 0.0
  %1905 = vmatpush1.msra.mxu0 0.0
  %1906 = vmatprep.subr.mxu0 0.0
  %1907 = vmatpush1.msra.mxu0 0.0
  %1908 = vmatprep.subr.mxu0 0.0
  %1909 = vmatpush1.msra.mxu0 0.0
  %1910 = vmatprep.subr.mxu0 0.0
  %1911 = vmatpush1.msra.mxu0 0.0
  %1912 = vmatprep.subr.mxu0 0.0
  %1913 = vmatpush1.msra.mxu0 0.0
  %1914 = vmatprep.subr.mxu0 0.0
  %1915 = vmatpush1.msra.mxu0 0.0
  %1916 = vmatprep.subr.mxu0 0.0
  %1917 = vmatpush1.msra.mxu0 0.0
  %1918 = vmatprep.subr.mxu0 0.0
  %1919 = vmatpush1.msra.mxu0 0.0
  %1920 = vmatprep.subr.mxu0 0.0
  %1921 = vmatpush1.msra.mxu0 0.0
  %1922 = vmatprep.subr.mxu0 0.0
  %1923 = vmatpush1.msra.mxu0 0.0
  %1924 = vmatprep.subr.mxu0 0.0
  %1925 = vmatpush1.msra.mxu0 0.0
  %1926 = vmatprep.subr.mxu0 0.0
  %1927 = vmatpush1.msra.mxu0 0.0
  %1928 = vmatprep.mubr.f32.mxu0 0.0
  %1929 = vmatmul.mubr.f32.gmra.mrb[0].mxu0 %v1859
  %v1930 = vpop.f32.mrb[0].mxu0
  %v1931 = vadd.f32 0.0, %v1930
  %v1932 = vpop.f32.mrb[0].mxu0
  %1933 = vmatprep.mubr.f32.mxu0 0.0
  %1934 = vmatmul.mubr.f32.gmra.mrb[0].mxu0 %v1862
  %v1935 = vpop.f32.mrb[0].mxu0
  %v1936 = vadd.f32 0.0, %v1935
  %v1937 = vpop.f32.mrb[0].mxu0
  %1938 = vdwg.mxu0
  %s1939 = scalar_lea.vmem %s33, 64
  %v1940 = vld [vmem:[%s1939] sm:$0xff]
  %v1941 = vld [vmem:[%s1939 + $0x8] sm:$0xff]
  %s1942 = scalar_lea.vmem %s33, 80
  %v1943 = vld [vmem:[%s1942] sm:$0xff]
  %v1944 = vld [vmem:[%s1942 + $0x8] sm:$0xff]
  %v1946 = vsel %vm1770, %v1943, 0
  %v1949 = vsel %vm1770, %v1944, 0
  %1951 = vmatprep.subr.mxu0 0.0
  %1952 = vmatpush1.msra.mxu0 %v1745
  %1953 = vmatprep.subr.mxu0 0.0
  %1954 = vmatpush1.msra.mxu0 %v1746
  %1955 = vmatprep.subr.mxu0 0.0
  %1956 = vmatpush1.msra.mxu0 0.0
  %1957 = vmatprep.subr.mxu0 0.0
  %1958 = vmatpush1.msra.mxu0 0.0
  %1959 = vmatprep.subr.mxu0 0.0
  %1960 = vmatpush1.msra.mxu0 0.0
  %1961 = vmatprep.subr.mxu0 0.0
  %1962 = vmatpush1.msra.mxu0 0.0
  %1963 = vmatprep.subr.mxu0 0.0
  %1964 = vmatpush1.msra.mxu0 0.0
  %1965 = vmatprep.subr.mxu0 0.0
  %1966 = vmatpush1.msra.mxu0 0.0
  %1967 = vmatprep.subr.mxu0 0.0
  %1968 = vmatpush1.msra.mxu0 0.0
  %1969 = vmatprep.subr.mxu0 0.0
  %1970 = vmatpush1.msra.mxu0 0.0
  %1971 = vmatprep.subr.mxu0 0.0
  %1972 = vmatpush1.msra.mxu0 0.0
  %1973 = vmatprep.subr.mxu0 0.0
  %1974 = vmatpush1.msra.mxu0 0.0
  %1975 = vmatprep.subr.mxu0 0.0
  %1976 = vmatpush1.msra.mxu0 0.0
  %1977 = vmatprep.subr.mxu0 0.0
  %1978 = vmatpush1.msra.mxu0 0.0
  %1979 = vmatprep.subr.mxu0 0.0
  %1980 = vmatpush1.msra.mxu0 0.0
  %1981 = vmatprep.subr.mxu0 0.0
  %1982 = vmatpush1.msra.mxu0 0.0
  %1983 = vmatprep.subr.mxu0 0.0
  %1984 = vmatpush1.msra.mxu0 0.0
  %1985 = vmatprep.subr.mxu0 0.0
  %1986 = vmatpush1.msra.mxu0 0.0
  %1987 = vmatprep.subr.mxu0 0.0
  %1988 = vmatpush1.msra.mxu0 0.0
  %1989 = vmatprep.subr.mxu0 0.0
  %1990 = vmatpush1.msra.mxu0 0.0
  %1991 = vmatprep.subr.mxu0 0.0
  %1992 = vmatpush1.msra.mxu0 0.0
  %1993 = vmatprep.subr.mxu0 0.0
  %1994 = vmatpush1.msra.mxu0 0.0
  %1995 = vmatprep.subr.mxu0 0.0
  %1996 = vmatpush1.msra.mxu0 0.0
  %1997 = vmatprep.subr.mxu0 0.0
  %1998 = vmatpush1.msra.mxu0 0.0
  %1999 = vmatprep.subr.mxu0 0.0
  %2000 = vmatpush1.msra.mxu0 0.0
  %2001 = vmatprep.subr.mxu0 0.0
  %2002 = vmatpush1.msra.mxu0 0.0
  %2003 = vmatprep.subr.mxu0 0.0
  %2004 = vmatpush1.msra.mxu0 0.0
  %2005 = vmatprep.subr.mxu0 0.0
  %2006 = vmatpush1.msra.mxu0 0.0
  %2007 = vmatprep.subr.mxu0 0.0
  %2008 = vmatpush1.msra.mxu0 0.0
  %2009 = vmatprep.subr.mxu0 0.0
  %2010 = vmatpush1.msra.mxu0 0.0
  %2011 = vmatprep.subr.mxu0 0.0
  %2012 = vmatpush1.msra.mxu0 0.0
  %2013 = vmatprep.subr.mxu0 0.0
  %2014 = vmatpush1.msra.mxu0 0.0
  %2015 = vmatprep.mubr.f32.mxu0 0.0
  %2016 = vmatmul.mubr.f32.gmra.mrb[0].mxu0 %v1946
  %v2017 = vpop.f32.mrb[0].mxu0
  %v2018 = vadd.f32 0.0, %v2017
  %v2019 = vpop.f32.mrb[0].mxu0
  %2020 = vmatprep.mubr.f32.mxu0 0.0
  %2021 = vmatmul.mubr.f32.gmra.mrb[0].mxu0 %v1949
  %v2022 = vpop.f32.mrb[0].mxu0
  %v2023 = vadd.f32 0.0, %v2022
  %v2024 = vpop.f32.mrb[0].mxu0
  %2025 = vdwg.mxu0
  %s2026 = scalar_lea.vmem %s33, 96
  %v2027 = vld [vmem:[%s2026] sm:$0xff]
  %v2028 = vld [vmem:[%s2026 + $0x8] sm:$0xff]
  %s2029 = scalar_lea.vmem %s33, 112
  %v2030 = vld [vmem:[%s2029] sm:$0xff]
  %v2031 = vld [vmem:[%s2029 + $0x8] sm:$0xff]
  %v2033 = vsel %vm1770, %v2030, 0
  %v2036 = vsel %vm1770, %v2031, 0
  %2038 = vmatprep.subr.mxu0 0.0
  %2039 = vmatpush1.msra.mxu0 %v1757
  %2040 = vmatprep.subr.mxu0 0.0
  %2041 = vmatpush1.msra.mxu0 %v1758
  %2042 = vmatprep.subr.mxu0 0.0
  %2043 = vmatpush1.msra.mxu0 0.0
  %2044 = vmatprep.subr.mxu0 0.0
  %2045 = vmatpush1.msra.mxu0 0.0
  %2046 = vmatprep.subr.mxu0 0.0
  %2047 = vmatpush1.msra.mxu0 0.0
  %2048 = vmatprep.subr.mxu0 0.0
  %2049 = vmatpush1.msra.mxu0 0.0
  %2050 = vmatprep.subr.mxu0 0.0
  %2051 = vmatpush1.msra.mxu0 0.0
  %2052 = vmatprep.subr.mxu0 0.0
  %2053 = vmatpush1.msra.mxu0 0.0
  %2054 = vmatprep.subr.mxu0 0.0
  %2055 = vmatpush1.msra.mxu0 0.0
  %2056 = vmatprep.subr.mxu0 0.0
  %2057 = vmatpush1.msra.mxu0 0.0
  %2058 = vmatprep.subr.mxu0 0.0
  %2059 = vmatpush1.msra.mxu0 0.0
  %2060 = vmatprep.subr.mxu0 0.0
  %2061 = vmatpush1.msra.mxu0 0.0
  %2062 = vmatprep.subr.mxu0 0.0
  %2063 = vmatpush1.msra.mxu0 0.0
  %2064 = vmatprep.subr.mxu0 0.0
  %2065 = vmatpush1.msra.mxu0 0.0
  %2066 = vmatprep.subr.mxu0 0.0
  %2067 = vmatpush1.msra.mxu0 0.0
  %2068 = vmatprep.subr.mxu0 0.0
  %2069 = vmatpush1.msra.mxu0 0.0
  %2070 = vmatprep.subr.mxu0 0.0
  %2071 = vmatpush1.msra.mxu0 0.0
  %2072 = vmatprep.subr.mxu0 0.0
  %2073 = vmatpush1.msra.mxu0 0.0
  %2074 = vmatprep.subr.mxu0 0.0
  %2075 = vmatpush1.msra.mxu0 0.0
  %2076 = vmatprep.subr.mxu0 0.0
  %2077 = vmatpush1.msra.mxu0 0.0
  %2078 = vmatprep.subr.mxu0 0.0
  %2079 = vmatpush1.msra.mxu0 0.0
  %2080 = vmatprep.subr.mxu0 0.0
  %2081 = vmatpush1.msra.mxu0 0.0
  %2082 = vmatprep.subr.mxu0 0.0
  %2083 = vmatpush1.msra.mxu0 0.0
  %2084 = vmatprep.subr.mxu0 0.0
  %2085 = vmatpush1.msra.mxu0 0.0
  %2086 = vmatprep.subr.mxu0 0.0
  %2087 = vmatpush1.msra.mxu0 0.0
  %2088 = vmatprep.subr.mxu0 0.0
  %2089 = vmatpush1.msra.mxu0 0.0
  %2090 = vmatprep.subr.mxu0 0.0
  %2091 = vmatpush1.msra.mxu0 0.0
  %2092 = vmatprep.subr.mxu0 0.0
  %2093 = vmatpush1.msra.mxu0 0.0
  %2094 = vmatprep.subr.mxu0 0.0
  %2095 = vmatpush1.msra.mxu0 0.0
  %2096 = vmatprep.subr.mxu0 0.0
  %2097 = vmatpush1.msra.mxu0 0.0
  %2098 = vmatprep.subr.mxu0 0.0
  %2099 = vmatpush1.msra.mxu0 0.0
  %2100 = vmatprep.subr.mxu0 0.0
  %2101 = vmatpush1.msra.mxu0 0.0
  %2102 = vmatprep.mubr.f32.mxu0 0.0
  %2103 = vmatmul.mubr.f32.gmra.mrb[0].mxu0 %v2033
  %v2104 = vpop.f32.mrb[0].mxu0
  %v2105 = vadd.f32 0.0, %v2104
  %v2106 = vpop.f32.mrb[0].mxu0
  %2107 = vmatprep.mubr.f32.mxu0 0.0
  %2108 = vmatmul.mubr.f32.gmra.mrb[0].mxu0 %v2036
  %v2109 = vpop.f32.mrb[0].mxu0
  %v2110 = vadd.f32 0.0, %v2109
  %v2111 = vpop.f32.mrb[0].mxu0
  %2112 = vdwg.mxu0
  %s2113 = scalar_lea.vmem %s33, 128
  %v2114 = vld [vmem:[%s2113] sm:$0xff]
  %v2115 = vld [vmem:[%s2113 + $0x8] sm:$0xff]
  %v2117 = vsel %vm1770, %v2114, 0
  %v2120 = vsel %vm1770, %v2115, 0
  %2122 = vmatprep.subr.mxu0 0.0
  %2123 = vmatpush1.msra.mxu0 %v1763
  %2124 = vmatprep.subr.mxu0 0.0
  %2125 = vmatpush1.msra.mxu0 %v1764
  %2126 = vmatprep.subr.mxu0 0.0
  %2127 = vmatpush1.msra.mxu0 0.0
  %2128 = vmatprep.subr.mxu0 0.0
  %2129 = vmatpush1.msra.mxu0 0.0
  %2130 = vmatprep.subr.mxu0 0.0
  %2131 = vmatpush1.msra.mxu0 0.0
  %2132 = vmatprep.subr.mxu0 0.0
  %2133 = vmatpush1.msra.mxu0 0.0
  %2134 = vmatprep.subr.mxu0 0.0
  %2135 = vmatpush1.msra.mxu0 0.0
  %2136 = vmatprep.subr.mxu0 0.0
  %2137 = vmatpush1.msra.mxu0 0.0
  %2138 = vmatprep.subr.mxu0 0.0
  %2139 = vmatpush1.msra.mxu0 0.0
  %2140 = vmatprep.subr.mxu0 0.0
  %2141 = vmatpush1.msra.mxu0 0.0
  %2142 = vmatprep.subr.mxu0 0.0
  %2143 = vmatpush1.msra.mxu0 0.0
  %2144 = vmatprep.subr.mxu0 0.0
  %2145 = vmatpush1.msra.mxu0 0.0
  %2146 = vmatprep.subr.mxu0 0.0
  %2147 = vmatpush1.msra.mxu0 0.0
  %2148 = vmatprep.subr.mxu0 0.0
  %2149 = vmatpush1.msra.mxu0 0.0
  %2150 = vmatprep.subr.mxu0 0.0
  %2151 = vmatpush1.msra.mxu0 0.0
  %2152 = vmatprep.subr.mxu0 0.0
  %2153 = vmatpush1.msra.mxu0 0.0
  %2154 = vmatprep.subr.mxu0 0.0
  %2155 = vmatpush1.msra.mxu0 0.0
  %2156 = vmatprep.subr.mxu0 0.0
  %2157 = vmatpush1.msra.mxu0 0.0
  %2158 = vmatprep.subr.mxu0 0.0
  %2159 = vmatpush1.msra.mxu0 0.0
  %2160 = vmatprep.subr.mxu0 0.0
  %2161 = vmatpush1.msra.mxu0 0.0
  %2162 = vmatprep.subr.mxu0 0.0
  %2163 = vmatpush1.msra.mxu0 0.0
  %2164 = vmatprep.subr.mxu0 0.0
  %2165 = vmatpush1.msra.mxu0 0.0
  %2166 = vmatprep.subr.mxu0 0.0
  %2167 = vmatpush1.msra.mxu0 0.0
  %2168 = vmatprep.subr.mxu0 0.0
  %2169 = vmatpush1.msra.mxu0 0.0
  %2170 = vmatprep.subr.mxu0 0.0
  %2171 = vmatpush1.msra.mxu0 0.0
  %2172 = vmatprep.subr.mxu0 0.0
  %2173 = vmatpush1.msra.mxu0 0.0
  %2174 = vmatprep.subr.mxu0 0.0
  %2175 = vmatpush1.msra.mxu0 0.0
  %2176 = vmatprep.subr.mxu0 0.0
  %2177 = vmatpush1.msra.mxu0 0.0
  %2178 = vmatprep.subr.mxu0 0.0
  %2179 = vmatpush1.msra.mxu0 0.0
  %2180 = vmatprep.subr.mxu0 0.0
  %2181 = vmatpush1.msra.mxu0 0.0
  %2182 = vmatprep.subr.mxu0 0.0
  %2183 = vmatpush1.msra.mxu0 0.0
  %2184 = vmatprep.subr.mxu0 0.0
  %2185 = vmatpush1.msra.mxu0 0.0
  %2186 = vmatprep.mubr.f32.mxu0 0.0
  %2187 = vmatmul.mubr.f32.gmra.mrb[0].mxu0 %v2117
  %v2188 = vpop.f32.mrb[0].mxu0
  %v2189 = vadd.f32 0.0, %v2188
  %v2190 = vpop.f32.mrb[0].mxu0
  %2191 = vmatprep.mubr.f32.mxu0 0.0
  %2192 = vmatmul.mubr.f32.gmra.mrb[0].mxu0 %v2120
  %v2193 = vpop.f32.mrb[0].mxu0
  %v2194 = vadd.f32 0.0, %v2193
  %v2195 = vpop.f32.mrb[0].mxu0
  %2196 = vdwg.mxu0
  %v2198 = vsel %vm1770, %v1765, 0
  %v2201 = vsel %vm1770, %v1766, 0
  %2203 = vmatprep.subr.mxu0 0.0
  %2204 = vmatpush1.msra.mxu0 %v1721
  %2205 = vmatprep.subr.mxu0 0.0
  %2206 = vmatpush1.msra.mxu0 %v1722
  %2207 = vmatprep.subr.mxu0 0.0
  %2208 = vmatpush1.msra.mxu0 0.0
  %2209 = vmatprep.subr.mxu0 0.0
  %2210 = vmatpush1.msra.mxu0 0.0
  %2211 = vmatprep.subr.mxu0 0.0
  %2212 = vmatpush1.msra.mxu0 0.0
  %2213 = vmatprep.subr.mxu0 0.0
  %2214 = vmatpush1.msra.mxu0 0.0
  %2215 = vmatprep.subr.mxu0 0.0
  %2216 = vmatpush1.msra.mxu0 0.0
  %2217 = vmatprep.subr.mxu0 0.0
  %2218 = vmatpush1.msra.mxu0 0.0
  %2219 = vmatprep.subr.mxu0 0.0
  %2220 = vmatpush1.msra.mxu0 0.0
  %2221 = vmatprep.subr.mxu0 0.0
  %2222 = vmatpush1.msra.mxu0 0.0
  %2223 = vmatprep.subr.mxu0 0.0
  %2224 = vmatpush1.msra.mxu0 0.0
  %2225 = vmatprep.subr.mxu0 0.0
  %2226 = vmatpush1.msra.mxu0 0.0
  %2227 = vmatprep.subr.mxu0 0.0
  %2228 = vmatpush1.msra.mxu0 0.0
  %2229 = vmatprep.subr.mxu0 0.0
  %2230 = vmatpush1.msra.mxu0 0.0
  %2231 = vmatprep.subr.mxu0 0.0
  %2232 = vmatpush1.msra.mxu0 0.0
  %2233 = vmatprep.subr.mxu0 0.0
  %2234 = vmatpush1.msra.mxu0 0.0
  %2235 = vmatprep.subr.mxu0 0.0
  %2236 = vmatpush1.msra.mxu0 0.0
  %2237 = vmatprep.subr.mxu0 0.0
  %2238 = vmatpush1.msra.mxu0 0.0
  %2239 = vmatprep.subr.mxu0 0.0
  %2240 = vmatpush1.msra.mxu0 0.0
  %2241 = vmatprep.subr.mxu0 0.0
  %2242 = vmatpush1.msra.mxu0 0.0
  %2243 = vmatprep.subr.mxu0 0.0
  %2244 = vmatpush1.msra.mxu0 0.0
  %2245 = vmatprep.subr.mxu0 0.0
  %2246 = vmatpush1.msra.mxu0 0.0
  %2247 = vmatprep.subr.mxu0 0.0
  %2248 = vmatpush1.msra.mxu0 0.0
  %2249 = vmatprep.subr.mxu0 0.0
  %2250 = vmatpush1.msra.mxu0 0.0
  %2251 = vmatprep.subr.mxu0 0.0
  %2252 = vmatpush1.msra.mxu0 0.0
  %2253 = vmatprep.subr.mxu0 0.0
  %2254 = vmatpush1.msra.mxu0 0.0
  %2255 = vmatprep.subr.mxu0 0.0
  %2256 = vmatpush1.msra.mxu0 0.0
  %2257 = vmatprep.subr.mxu0 0.0
  %2258 = vmatpush1.msra.mxu0 0.0
  %2259 = vmatprep.subr.mxu0 0.0
  %2260 = vmatpush1.msra.mxu0 0.0
  %2261 = vmatprep.subr.mxu0 0.0
  %2262 = vmatpush1.msra.mxu0 0.0
  %2263 = vmatprep.subr.mxu0 0.0
  %2264 = vmatpush1.msra.mxu0 0.0
  %2265 = vmatprep.subr.mxu0 0.0
  %2266 = vmatpush1.msra.mxu0 0.0
  %2267 = vmatprep.mubr.f32.mxu0 0.0
  %2268 = vmatmul.mubr.f32.gmra.mrb[0].mxu0 %v2198
  %v2269 = vpop.f32.mrb[0].mxu0
  %v2270 = vadd.f32 %v1844, %v2269
  %v2271 = vpop.f32.mrb[0].mxu0
  %2272 = vmatprep.mubr.f32.mxu0 0.0
  %2273 = vmatmul.mubr.f32.gmra.mrb[0].mxu0 %v2201
  %v2274 = vpop.f32.mrb[0].mxu0
  %v2275 = vadd.f32 %v1849, %v2274
  %v2276 = vpop.f32.mrb[0].mxu0
  %2277 = vdwg.mxu0
  %v2279 = vsel %vm1770, %v1853, 0
  %v2282 = vsel %vm1770, %v1854, 0
  %2284 = vmatprep.subr.mxu0 0.0
  %2285 = vmatpush1.msra.mxu0 %v1733
  %2286 = vmatprep.subr.mxu0 0.0
  %2287 = vmatpush1.msra.mxu0 %v1734
  %2288 = vmatprep.subr.mxu0 0.0
  %2289 = vmatpush1.msra.mxu0 0.0
  %2290 = vmatprep.subr.mxu0 0.0
  %2291 = vmatpush1.msra.mxu0 0.0
  %2292 = vmatprep.subr.mxu0 0.0
  %2293 = vmatpush1.msra.mxu0 0.0
  %2294 = vmatprep.subr.mxu0 0.0
  %2295 = vmatpush1.msra.mxu0 0.0
  %2296 = vmatprep.subr.mxu0 0.0
  %2297 = vmatpush1.msra.mxu0 0.0
  %2298 = vmatprep.subr.mxu0 0.0
  %2299 = vmatpush1.msra.mxu0 0.0
  %2300 = vmatprep.subr.mxu0 0.0
  %2301 = vmatpush1.msra.mxu0 0.0
  %2302 = vmatprep.subr.mxu0 0.0
  %2303 = vmatpush1.msra.mxu0 0.0
  %2304 = vmatprep.subr.mxu0 0.0
  %2305 = vmatpush1.msra.mxu0 0.0
  %2306 = vmatprep.subr.mxu0 0.0
  %2307 = vmatpush1.msra.mxu0 0.0
  %2308 = vmatprep.subr.mxu0 0.0
  %2309 = vmatpush1.msra.mxu0 0.0
  %2310 = vmatprep.subr.mxu0 0.0
  %2311 = vmatpush1.msra.mxu0 0.0
  %2312 = vmatprep.subr.mxu0 0.0
  %2313 = vmatpush1.msra.mxu0 0.0
  %2314 = vmatprep.subr.mxu0 0.0
  %2315 = vmatpush1.msra.mxu0 0.0
  %2316 = vmatprep.subr.mxu0 0.0
  %2317 = vmatpush1.msra.mxu0 0.0
  %2318 = vmatprep.subr.mxu0 0.0
  %2319 = vmatpush1.msra.mxu0 0.0
  %2320 = vmatprep.subr.mxu0 0.0
  %2321 = vmatpush1.msra.mxu0 0.0
  %2322 = vmatprep.subr.mxu0 0.0
  %2323 = vmatpush1.msra.mxu0 0.0
  %2324 = vmatprep.subr.mxu0 0.0
  %2325 = vmatpush1.msra.mxu0 0.0
  %2326 = vmatprep.subr.mxu0 0.0
  %2327 = vmatpush1.msra.mxu0 0.0
  %2328 = vmatprep.subr.mxu0 0.0
  %2329 = vmatpush1.msra.mxu0 0.0
  %2330 = vmatprep.subr.mxu0 0.0
  %2331 = vmatpush1.msra.mxu0 0.0
  %2332 = vmatprep.subr.mxu0 0.0
  %2333 = vmatpush1.msra.mxu0 0.0
  %2334 = vmatprep.subr.mxu0 0.0
  %2335 = vmatpush1.msra.mxu0 0.0
  %2336 = vmatprep.subr.mxu0 0.0
  %2337 = vmatpush1.msra.mxu0 0.0
  %2338 = vmatprep.subr.mxu0 0.0
  %2339 = vmatpush1.msra.mxu0 0.0
  %2340 = vmatprep.subr.mxu0 0.0
  %2341 = vmatpush1.msra.mxu0 0.0
  %2342 = vmatprep.subr.mxu0 0.0
  %2343 = vmatpush1.msra.mxu0 0.0
  %2344 = vmatprep.subr.mxu0 0.0
  %2345 = vmatpush1.msra.mxu0 0.0
  %2346 = vmatprep.subr.mxu0 0.0
  %2347 = vmatpush1.msra.mxu0 0.0
  %2348 = vmatprep.mubr.f32.mxu0 0.0
  %2349 = vmatmul.mubr.f32.gmra.mrb[0].mxu0 %v2279
  %v2350 = vpop.f32.mrb[0].mxu0
  %v2351 = vadd.f32 %v1931, %v2350
  %v2352 = vpop.f32.mrb[0].mxu0
  %2353 = vmatprep.mubr.f32.mxu0 0.0
  %2354 = vmatmul.mubr.f32.gmra.mrb[0].mxu0 %v2282
  %v2355 = vpop.f32.mrb[0].mxu0
  %v2356 = vadd.f32 %v1936, %v2355
  %v2357 = vpop.f32.mrb[0].mxu0
  %2358 = vdwg.mxu0
  %v2360 = vsel %vm1770, %v1940, 0
  %v2363 = vsel %vm1770, %v1941, 0
  %2365 = vmatprep.subr.mxu0 0.0
  %2366 = vmatpush1.msra.mxu0 %v1713
  %2367 = vmatprep.subr.mxu0 0.0
  %2368 = vmatpush1.msra.mxu0 %v1714
  %2369 = vmatprep.subr.mxu0 0.0
  %2370 = vmatpush1.msra.mxu0 0.0
  %2371 = vmatprep.subr.mxu0 0.0
  %2372 = vmatpush1.msra.mxu0 0.0
  %2373 = vmatprep.subr.mxu0 0.0
  %2374 = vmatpush1.msra.mxu0 0.0
  %2375 = vmatprep.subr.mxu0 0.0
  %2376 = vmatpush1.msra.mxu0 0.0
  %2377 = vmatprep.subr.mxu0 0.0
  %2378 = vmatpush1.msra.mxu0 0.0
  %2379 = vmatprep.subr.mxu0 0.0
  %2380 = vmatpush1.msra.mxu0 0.0
  %2381 = vmatprep.subr.mxu0 0.0
  %2382 = vmatpush1.msra.mxu0 0.0
  %2383 = vmatprep.subr.mxu0 0.0
  %2384 = vmatpush1.msra.mxu0 0.0
  %2385 = vmatprep.subr.mxu0 0.0
  %2386 = vmatpush1.msra.mxu0 0.0
  %2387 = vmatprep.subr.mxu0 0.0
  %2388 = vmatpush1.msra.mxu0 0.0
  %2389 = vmatprep.subr.mxu0 0.0
  %2390 = vmatpush1.msra.mxu0 0.0
  %2391 = vmatprep.subr.mxu0 0.0
  %2392 = vmatpush1.msra.mxu0 0.0
  %2393 = vmatprep.subr.mxu0 0.0
  %2394 = vmatpush1.msra.mxu0 0.0
  %2395 = vmatprep.subr.mxu0 0.0
  %2396 = vmatpush1.msra.mxu0 0.0
  %2397 = vmatprep.subr.mxu0 0.0
  %2398 = vmatpush1.msra.mxu0 0.0
  %2399 = vmatprep.subr.mxu0 0.0
  %2400 = vmatpush1.msra.mxu0 0.0
  %2401 = vmatprep.subr.mxu0 0.0
  %2402 = vmatpush1.msra.mxu0 0.0
  %2403 = vmatprep.subr.mxu0 0.0
  %2404 = vmatpush1.msra.mxu0 0.0
  %2405 = vmatprep.subr.mxu0 0.0
  %2406 = vmatpush1.msra.mxu0 0.0
  %2407 = vmatprep.subr.mxu0 0.0
  %2408 = vmatpush1.msra.mxu0 0.0
  %2409 = vmatprep.subr.mxu0 0.0
  %2410 = vmatpush1.msra.mxu0 0.0
  %2411 = vmatprep.subr.mxu0 0.0
  %2412 = vmatpush1.msra.mxu0 0.0
  %2413 = vmatprep.subr.mxu0 0.0
  %2414 = vmatpush1.msra.mxu0 0.0
  %2415 = vmatprep.subr.mxu0 0.0
  %2416 = vmatpush1.msra.mxu0 0.0
  %2417 = vmatprep.subr.mxu0 0.0
  %2418 = vmatpush1.msra.mxu0 0.0
  %2419 = vmatprep.subr.mxu0 0.0
  %2420 = vmatpush1.msra.mxu0 0.0
  %2421 = vmatprep.subr.mxu0 0.0
  %2422 = vmatpush1.msra.mxu0 0.0
  %2423 = vmatprep.subr.mxu0 0.0
  %2424 = vmatpush1.msra.mxu0 0.0
  %2425 = vmatprep.subr.mxu0 0.0
  %2426 = vmatpush1.msra.mxu0 0.0
  %2427 = vmatprep.subr.mxu0 0.0
  %2428 = vmatpush1.msra.mxu0 0.0
  %2429 = vmatprep.mubr.f32.mxu0 0.0
  %2430 = vmatmul.mubr.f32.gmra.mrb[0].mxu0 %v2360
  %v2431 = vpop.f32.mrb[0].mxu0
  %v2432 = vadd.f32 %v2018, %v2431
  %v2433 = vpop.f32.mrb[0].mxu0
  %2434 = vmatprep.mubr.f32.mxu0 0.0
  %2435 = vmatmul.mubr.f32.gmra.mrb[0].mxu0 %v2363
  %v2436 = vpop.f32.mrb[0].mxu0
  %v2437 = vadd.f32 %v2023, %v2436
  %v2438 = vpop.f32.mrb[0].mxu0
  %2439 = vdwg.mxu0
  %v2441 = vsel %vm1770, %v2027, 0
  %v2444 = vsel %vm1770, %v2028, 0
  %2446 = vmatprep.subr.mxu0 0.0
  %2447 = vmatpush1.msra.mxu0 %v1751
  %2448 = vmatprep.subr.mxu0 0.0
  %2449 = vmatpush1.msra.mxu0 %v1752
  %2450 = vmatprep.subr.mxu0 0.0
  %2451 = vmatpush1.msra.mxu0 0.0
  %2452 = vmatprep.subr.mxu0 0.0
  %2453 = vmatpush1.msra.mxu0 0.0
  %2454 = vmatprep.subr.mxu0 0.0
  %2455 = vmatpush1.msra.mxu0 0.0
  %2456 = vmatprep.subr.mxu0 0.0
  %2457 = vmatpush1.msra.mxu0 0.0
  %2458 = vmatprep.subr.mxu0 0.0
  %2459 = vmatpush1.msra.mxu0 0.0
  %2460 = vmatprep.subr.mxu0 0.0
  %2461 = vmatpush1.msra.mxu0 0.0
  %2462 = vmatprep.subr.mxu0 0.0
  %2463 = vmatpush1.msra.mxu0 0.0
  %2464 = vmatprep.subr.mxu0 0.0
  %2465 = vmatpush1.msra.mxu0 0.0
  %2466 = vmatprep.subr.mxu0 0.0
  %2467 = vmatpush1.msra.mxu0 0.0
  %2468 = vmatprep.subr.mxu0 0.0
  %2469 = vmatpush1.msra.mxu0 0.0
  %2470 = vmatprep.subr.mxu0 0.0
  %2471 = vmatpush1.msra.mxu0 0.0
  %2472 = vmatprep.subr.mxu0 0.0
  %2473 = vmatpush1.msra.mxu0 0.0
  %2474 = vmatprep.subr.mxu0 0.0
  %2475 = vmatpush1.msra.mxu0 0.0
  %2476 = vmatprep.subr.mxu0 0.0
  %2477 = vmatpush1.msra.mxu0 0.0
  %2478 = vmatprep.subr.mxu0 0.0
  %2479 = vmatpush1.msra.mxu0 0.0
  %2480 = vmatprep.subr.mxu0 0.0
  %2481 = vmatpush1.msra.mxu0 0.0
  %2482 = vmatprep.subr.mxu0 0.0
  %2483 = vmatpush1.msra.mxu0 0.0
  %2484 = vmatprep.subr.mxu0 0.0
  %2485 = vmatpush1.msra.mxu0 0.0
  %2486 = vmatprep.subr.mxu0 0.0
  %2487 = vmatpush1.msra.mxu0 0.0
  %2488 = vmatprep.subr.mxu0 0.0
  %2489 = vmatpush1.msra.mxu0 0.0
  %2490 = vmatprep.subr.mxu0 0.0
  %2491 = vmatpush1.msra.mxu0 0.0
  %2492 = vmatprep.subr.mxu0 0.0
  %2493 = vmatpush1.msra.mxu0 0.0
  %2494 = vmatprep.subr.mxu0 0.0
  %2495 = vmatpush1.msra.mxu0 0.0
  %2496 = vmatprep.subr.mxu0 0.0
  %2497 = vmatpush1.msra.mxu0 0.0
  %2498 = vmatprep.subr.mxu0 0.0
  %2499 = vmatpush1.msra.mxu0 0.0
  %2500 = vmatprep.subr.mxu0 0.0
  %2501 = vmatpush1.msra.mxu0 0.0
  %2502 = vmatprep.subr.mxu0 0.0
  %2503 = vmatpush1.msra.mxu0 0.0
  %2504 = vmatprep.subr.mxu0 0.0
  %2505 = vmatpush1.msra.mxu0 0.0
  %2506 = vmatprep.subr.mxu0 0.0
  %2507 = vmatpush1.msra.mxu0 0.0
  %2508 = vmatprep.subr.mxu0 0.0
  %2509 = vmatpush1.msra.mxu0 0.0
  %2510 = vmatprep.mubr.f32.mxu0 0.0
  %2511 = vmatmul.mubr.f32.gmra.mrb[0].mxu0 %v2441
  %v2512 = vpop.f32.mrb[0].mxu0
  %v2513 = vadd.f32 %v2105, %v2512
  %v2514 = vpop.f32.mrb[0].mxu0
  %2515 = vmatprep.mubr.f32.mxu0 0.0
  %2516 = vmatmul.mubr.f32.gmra.mrb[0].mxu0 %v2444
  %v2517 = vpop.f32.mrb[0].mxu0
  %v2518 = vadd.f32 %v2110, %v2517
  %v2519 = vpop.f32.mrb[0].mxu0
  %2520 = vdwg.mxu0
  %v2521 = vadd.f32 %v2270, %v2351
  %v2522 = vadd.f32 %v2275, %v2356
  %v2523 = vadd.f32 %v2432, %v2513
  %v2524 = vadd.f32 %v2437, %v2518
  %v2525 = vadd.f32 %v2521, %v2523
  %v2526 = vadd.f32 %v2522, %v2524
  %v2527 = vadd.f32 %v2525, %v2189
  %v2528 = vadd.f32 %v2526, %v2194
  %2530 = vset.pattern.permute.xlu0 0
  %2531 = vperm.xlu0 %2530, %v1715
  %v2532 = vpop.permute.xlu0 %2531
  %2535 = vset.pattern.permute.xlu0 0
  %2536 = vperm.xlu0 %2535, %v1716
  %v2537 = vpop.permute.xlu0 %2536
  %v2539 = vadd.f32 %v2527, %v2532
  %v2540 = vadd.f32 %v2528, %v2537
  %2541 = vadd.xlane.f32.xlu0 %v2539
  %v2542 = vpop.xlane.xlu0 %2541
  %2543 = vadd.xlane.f32.xlu0 %v2540
  %v2544 = vpop.xlane.xlu0 %2543
  %v2545 = vmul.f32 %v2542, %v373
  %v2546 = vmul.f32 %v2544, %v373
  %v2547 = vsub.f32 %v2539, %v2545
  %v2548 = vsub.f32 %v2540, %v2546
  %v2549 = vmul.f32 %v2547, %v2547
  %v2550 = vmul.f32 %v2548, %v2548
  %2551 = vadd.xlane.f32.xlu0 %v2549
  %v2552 = vpop.xlane.xlu0 %2551
  %2553 = vadd.xlane.f32.xlu0 %v2550
  %v2554 = vpop.xlane.xlu0 %2553
  %v2555 = vmul.f32 %v2552, %v373
  %v2556 = vmul.f32 %v2554, %v373
  %v2557 = vadd.f32 %v2555, 1e-05
  %v2558 = vadd.f32 %v2556, 1e-05
  %v2559 = vrsqrt.pop %v2557
  %v2560 = vrsqrt.pop %v2558
  %v2561 = vld [vmem:[%s37] sm:$0xff]
  %v2562 = vld [vmem:[%s37 + $0x8] sm:$0xff]
  %v2563 = vld [vmem:[%s39] sm:$0xff]
  %v2564 = vld [vmem:[%s39 + $0x8] sm:$0xff]
  %v2565 = vmul.f32 %v2559, %v2561
  %v2566 = vmul.f32 %v2560, %v2562
  %v2567 = vmul.f32 %v2545, %v2565
  %v2568 = vmul.f32 %v2546, %v2566
  %v2569 = vsub.f32 %v2563, %v2567
  %v2570 = vsub.f32 %v2564, %v2568
  %2572 = vset.pattern.permute.xlu0 0
  %2573 = vperm.xlu0 %2572, %v2565
  %v2574 = vpop.permute.xlu0 %2573
  %2577 = vset.pattern.permute.xlu0 0
  %2578 = vperm.xlu0 %2577, %v2566
  %v2579 = vpop.permute.xlu0 %2578
  %v2581 = vmul.f32 %v2539, %v2574
  %v2582 = vmul.f32 %v2540, %v2579
  %2584 = vset.pattern.permute.xlu0 0
  %2585 = vperm.xlu0 %2584, %v2569
  %v2586 = vpop.permute.xlu0 %2585
  %2589 = vset.pattern.permute.xlu0 0
  %2590 = vperm.xlu0 %2589, %v2570
  %v2591 = vpop.permute.xlu0 %2590
  %v2593 = vadd.f32 %v2581, %v2586
  %v2594 = vadd.f32 %v2582, %v2591
  %vm2595 = vcmp.ge.f32.partialorder %v2593, 0.0
  %vm2596 = vcmp.ge.f32.partialorder %v2594, 0.0
  %v2597 = vmul.f32 %v2593, 0.01
  %v2598 = vmul.f32 %v2594, 0.01
  %v2599 = vsel %vm2595, %v2593, %v2597
  %v2600 = vsel %vm2596, %v2594, %v2598
  %v2601 = vld [vmem:[%s43] sm:$0xff]
  %v2602 = vld [vmem:[%s43 + $0x8] sm:$0xff]
  %v2603 = vld [vmem:[%s43 + $0x10] sm:$0xff]
  %v2604 = vld [vmem:[%s43 + $0x18] sm:$0xff]
  %v2605 = vld [vmem:[%s43 + $0x20] sm:$0xff]
  %v2606 = vld [vmem:[%s43 + $0x28] sm:$0xff]
  %v2607 = vld [vmem:[%s43 + $0x30] sm:$0xff]
  %v2608 = vld [vmem:[%s43 + $0x38] sm:$0xff]
  %2609 = vrot.lane.b32.xlu0 %v2599, 127
  %v2610 = vpop.permute.xlu0 %2609
  %2611 = vrot.lane.b32.xlu0 %v2600, 127
  %v2612 = vpop.permute.xlu0 %2611
  %v2613 = vmul.f32 %v2610, %v727
  %v2614 = vmul.f32 %v2612, %v727
  %2615 = vrot.lane.b32.xlu0 %v2599, 120
  %v2616 = vpop.permute.xlu0 %2615
  %2617 = vrot.lane.b32.xlu0 %v2600, 120
  %v2618 = vpop.permute.xlu0 %2617
  %v2619 = vmul.f32 %v2616, %v759
  %v2620 = vmul.f32 %v2618, %v759
  %2621 = vrot.lane.b32.xlu0 %v2599, 119
  %v2622 = vpop.permute.xlu0 %2621
  %2623 = vrot.lane.b32.xlu0 %v2600, 119
  %v2624 = vpop.permute.xlu0 %2623
  %v2625 = vmul.f32 %v2622, %v775
  %v2626 = vmul.f32 %v2624, %v775
  %v2627 = vld [vmem:[%s41] sm:$0xff]
  %v2628 = vld [vmem:[%s41 + $0x8] sm:$0xff]
  %v2629 = vld [vmem:[%s41 + $0x10] sm:$0xff]
  %v2630 = vld [vmem:[%s41 + $0x18] sm:$0xff]
  %v2631 = vld [vmem:[%s41 + $0x20] sm:$0xff]
  %v2632 = vld [vmem:[%s41 + $0x28] sm:$0xff]
  %v2633 = vld [vmem:[%s41 + $0x30] sm:$0xff]
  %v2634 = vld [vmem:[%s41 + $0x38] sm:$0xff]
  %s2635 = scalar_lea.vmem %s41, 64
  %v2636 = vld [vmem:[%s2635] sm:$0xff]
  %v2637 = vld [vmem:[%s2635 + $0x8] sm:$0xff]
  %v2638 = vld [vmem:[%s2635 + $0x10] sm:$0xff]
  %v2639 = vld [vmem:[%s2635 + $0x18] sm:$0xff]
  %v2640 = vld [vmem:[%s2635 + $0x20] sm:$0xff]
  %v2641 = vld [vmem:[%s2635 + $0x28] sm:$0xff]
  %v2642 = vld [vmem:[%s2635 + $0x30] sm:$0xff]
  %v2643 = vld [vmem:[%s2635 + $0x38] sm:$0xff]
  %v2645 = vsel %vm1770, %v2636, 0
  %v2648 = vsel %vm1770, %v2637, 0
  %v2651 = vsel %vm1770, %v2638, 0
  %v2654 = vsel %vm1770, %v2639, 0
  %v2657 = vsel %vm1770, %v2640, 0
  %v2660 = vsel %vm1770, %v2641, 0
  %v2663 = vsel %vm1770, %v2642, 0
  %v2666 = vsel %vm1770, %v2643, 0
  %2668 = vmatprep.subr.mxu0 0.0
  %2669 = vmatpush1.msra.mxu0 %v2613
  %2670 = vmatprep.subr.mxu0 0.0
  %2671 = vmatpush1.msra.mxu0 %v2614
  %2672 = vmatprep.subr.mxu0 0.0
  %2673 = vmatpush1.msra.mxu0 0.0
  %2674 = vmatprep.subr.mxu0 0.0
  %2675 = vmatpush1.msra.mxu0 0.0
  %2676 = vmatprep.subr.mxu0 0.0
  %2677 = vmatpush1.msra.mxu0 0.0
  %2678 = vmatprep.subr.mxu0 0.0
  %2679 = vmatpush1.msra.mxu0 0.0
  %2680 = vmatprep.subr.mxu0 0.0
  %2681 = vmatpush1.msra.mxu0 0.0
  %2682 = vmatprep.subr.mxu0 0.0
  %2683 = vmatpush1.msra.mxu0 0.0
  %2684 = vmatprep.subr.mxu0 0.0
  %2685 = vmatpush1.msra.mxu0 0.0
  %2686 = vmatprep.subr.mxu0 0.0
  %2687 = vmatpush1.msra.mxu0 0.0
  %2688 = vmatprep.subr.mxu0 0.0
  %2689 = vmatpush1.msra.mxu0 0.0
  %2690 = vmatprep.subr.mxu0 0.0
  %2691 = vmatpush1.msra.mxu0 0.0
  %2692 = vmatprep.subr.mxu0 0.0
  %2693 = vmatpush1.msra.mxu0 0.0
  %2694 = vmatprep.subr.mxu0 0.0
  %2695 = vmatpush1.msra.mxu0 0.0
  %2696 = vmatprep.subr.mxu0 0.0
  %2697 = vmatpush1.msra.mxu0 0.0
  %2698 = vmatprep.subr.mxu0 0.0
  %2699 = vmatpush1.msra.mxu0 0.0
  %2700 = vmatprep.subr.mxu0 0.0
  %2701 = vmatpush1.msra.mxu0 0.0
  %2702 = vmatprep.subr.mxu0 0.0
  %2703 = vmatpush1.msra.mxu0 0.0
  %2704 = vmatprep.subr.mxu0 0.0
  %2705 = vmatpush1.msra.mxu0 0.0
  %2706 = vmatprep.subr.mxu0 0.0
  %2707 = vmatpush1.msra.mxu0 0.0
  %2708 = vmatprep.subr.mxu0 0.0
  %2709 = vmatpush1.msra.mxu0 0.0
  %2710 = vmatprep.subr.mxu0 0.0
  %2711 = vmatpush1.msra.mxu0 0.0
  %2712 = vmatprep.subr.mxu0 0.0
  %2713 = vmatpush1.msra.mxu0 0.0
  %2714 = vmatprep.subr.mxu0 0.0
  %2715 = vmatpush1.msra.mxu0 0.0
  %2716 = vmatprep.subr.mxu0 0.0
  %2717 = vmatpush1.msra.mxu0 0.0
  %2718 = vmatprep.subr.mxu0 0.0
  %2719 = vmatpush1.msra.mxu0 0.0
  %2720 = vmatprep.subr.mxu0 0.0
  %2721 = vmatpush1.msra.mxu0 0.0
  %2722 = vmatprep.subr.mxu0 0.0
  %2723 = vmatpush1.msra.mxu0 0.0
  %2724 = vmatprep.subr.mxu0 0.0
  %2725 = vmatpush1.msra.mxu0 0.0
  %2726 = vmatprep.subr.mxu0 0.0
  %2727 = vmatpush1.msra.mxu0 0.0
  %2728 = vmatprep.subr.mxu0 0.0
  %2729 = vmatpush1.msra.mxu0 0.0
  %2730 = vmatprep.subr.mxu0 0.0
  %2731 = vmatpush1.msra.mxu0 0.0
  %2732 = vmatprep.mubr.f32.mxu0 0.0
  %2733 = vmatmul.mubr.f32.gmra.mrb[0].mxu0 %v2645
  %v2734 = vpop.f32.mrb[0].mxu0
  %v2735 = vadd.f32 0.0, %v2734
  %v2736 = vpop.f32.mrb[0].mxu0
  %2737 = vmatprep.mubr.f32.mxu0 0.0
  %2738 = vmatmul.mubr.f32.gmra.mrb[0].mxu0 %v2648
  %v2739 = vpop.f32.mrb[0].mxu0
  %v2740 = vadd.f32 0.0, %v2739
  %v2741 = vpop.f32.mrb[0].mxu0
  %2742 = vmatprep.mubr.f32.mxu0 0.0
  %2743 = vmatmul.mubr.f32.gmra.mrb[0].mxu0 %v2651
  %v2744 = vpop.f32.mrb[0].mxu0
  %v2745 = vadd.f32 0.0, %v2744
  %v2746 = vpop.f32.mrb[0].mxu0
  %2747 = vmatprep.mubr.f32.mxu0 0.0
  %2748 = vmatmul.mubr.f32.gmra.mrb[0].mxu0 %v2654
  %v2749 = vpop.f32.mrb[0].mxu0
  %v2750 = vadd.f32 0.0, %v2749
  %v2751 = vpop.f32.mrb[0].mxu0
  %2752 = vmatprep.mubr.f32.mxu0 0.0
  %2753 = vmatmul.mubr.f32.gmra.mrb[0].mxu0 %v2657
  %v2754 = vpop.f32.mrb[0].mxu0
  %v2755 = vadd.f32 0.0, %v2754
  %v2756 = vpop.f32.mrb[0].mxu0
  %2757 = vmatprep.mubr.f32.mxu0 0.0
  %2758 = vmatmul.mubr.f32.gmra.mrb[0].mxu0 %v2660
  %v2759 = vpop.f32.mrb[0].mxu0
  %v2760 = vadd.f32 0.0, %v2759
  %v2761 = vpop.f32.mrb[0].mxu0
  %2762 = vmatprep.mubr.f32.mxu0 0.0
  %2763 = vmatmul.mubr.f32.gmra.mrb[0].mxu0 %v2663
  %v2764 = vpop.f32.mrb[0].mxu0
  %v2765 = vadd.f32 0.0, %v2764
  %v2766 = vpop.f32.mrb[0].mxu0
  %2767 = vmatprep.mubr.f32.mxu0 0.0
  %2768 = vmatmul.mubr.f32.gmra.mrb[0].mxu0 %v2666
  %v2769 = vpop.f32.mrb[0].mxu0
  %v2770 = vadd.f32 0.0, %v2769
  %v2771 = vpop.f32.mrb[0].mxu0
  %2772 = vdwg.mxu0
  %s2773 = scalar_lea.vmem %s41, 128
  %v2774 = vld [vmem:[%s2773] sm:$0xff]
  %v2775 = vld [vmem:[%s2773 + $0x8] sm:$0xff]
  %v2776 = vld [vmem:[%s2773 + $0x10] sm:$0xff]
  %v2777 = vld [vmem:[%s2773 + $0x18] sm:$0xff]
  %v2778 = vld [vmem:[%s2773 + $0x20] sm:$0xff]
  %v2779 = vld [vmem:[%s2773 + $0x28] sm:$0xff]
  %v2780 = vld [vmem:[%s2773 + $0x30] sm:$0xff]
  %v2781 = vld [vmem:[%s2773 + $0x38] sm:$0xff]
  %s2782 = scalar_lea.vmem %s41, 192
  %v2783 = vld [vmem:[%s2782] sm:$0xff]
  %v2784 = vld [vmem:[%s2782 + $0x8] sm:$0xff]
  %v2785 = vld [vmem:[%s2782 + $0x10] sm:$0xff]
  %v2786 = vld [vmem:[%s2782 + $0x18] sm:$0xff]
  %v2787 = vld [vmem:[%s2782 + $0x20] sm:$0xff]
  %v2788 = vld [vmem:[%s2782 + $0x28] sm:$0xff]
  %v2789 = vld [vmem:[%s2782 + $0x30] sm:$0xff]
  %v2790 = vld [vmem:[%s2782 + $0x38] sm:$0xff]
  %v2792 = vsel %vm1770, %v2783, 0
  %v2795 = vsel %vm1770, %v2784, 0
  %v2798 = vsel %vm1770, %v2785, 0
  %v2801 = vsel %vm1770, %v2786, 0
  %v2804 = vsel %vm1770, %v2787, 0
  %v2807 = vsel %vm1770, %v2788, 0
  %v2810 = vsel %vm1770, %v2789, 0
  %v2813 = vsel %vm1770, %v2790, 0
  %2815 = vmatprep.subr.mxu0 0.0
  %2816 = vmatpush1.msra.mxu0 %v2625
  %2817 = vmatprep.subr.mxu0 0.0
  %2818 = vmatpush1.msra.mxu0 %v2626
  %2819 = vmatprep.subr.mxu0 0.0
  %2820 = vmatpush1.msra.mxu0 0.0
  %2821 = vmatprep.subr.mxu0 0.0
  %2822 = vmatpush1.msra.mxu0 0.0
  %2823 = vmatprep.subr.mxu0 0.0
  %2824 = vmatpush1.msra.mxu0 0.0
  %2825 = vmatprep.subr.mxu0 0.0
  %2826 = vmatpush1.msra.mxu0 0.0
  %2827 = vmatprep.subr.mxu0 0.0
  %2828 = vmatpush1.msra.mxu0 0.0
  %2829 = vmatprep.subr.mxu0 0.0
  %2830 = vmatpush1.msra.mxu0 0.0
  %2831 = vmatprep.subr.mxu0 0.0
  %2832 = vmatpush1.msra.mxu0 0.0
  %2833 = vmatprep.subr.mxu0 0.0
  %2834 = vmatpush1.msra.mxu0 0.0
  %2835 = vmatprep.subr.mxu0 0.0
  %2836 = vmatpush1.msra.mxu0 0.0
  %2837 = vmatprep.subr.mxu0 0.0
  %2838 = vmatpush1.msra.mxu0 0.0
  %2839 = vmatprep.subr.mxu0 0.0
  %2840 = vmatpush1.msra.mxu0 0.0
  %2841 = vmatprep.subr.mxu0 0.0
  %2842 = vmatpush1.msra.mxu0 0.0
  %2843 = vmatprep.subr.mxu0 0.0
  %2844 = vmatpush1.msra.mxu0 0.0
  %2845 = vmatprep.subr.mxu0 0.0
  %2846 = vmatpush1.msra.mxu0 0.0
  %2847 = vmatprep.subr.mxu0 0.0
  %2848 = vmatpush1.msra.mxu0 0.0
  %2849 = vmatprep.subr.mxu0 0.0
  %2850 = vmatpush1.msra.mxu0 0.0
  %2851 = vmatprep.subr.mxu0 0.0
  %2852 = vmatpush1.msra.mxu0 0.0
  %2853 = vmatprep.subr.mxu0 0.0
  %2854 = vmatpush1.msra.mxu0 0.0
  %2855 = vmatprep.subr.mxu0 0.0
  %2856 = vmatpush1.msra.mxu0 0.0
  %2857 = vmatprep.subr.mxu0 0.0
  %2858 = vmatpush1.msra.mxu0 0.0
  %2859 = vmatprep.subr.mxu0 0.0
  %2860 = vmatpush1.msra.mxu0 0.0
  %2861 = vmatprep.subr.mxu0 0.0
  %2862 = vmatpush1.msra.mxu0 0.0
  %2863 = vmatprep.subr.mxu0 0.0
  %2864 = vmatpush1.msra.mxu0 0.0
  %2865 = vmatprep.subr.mxu0 0.0
  %2866 = vmatpush1.msra.mxu0 0.0
  %2867 = vmatprep.subr.mxu0 0.0
  %2868 = vmatpush1.msra.mxu0 0.0
  %2869 = vmatprep.subr.mxu0 0.0
  %2870 = vmatpush1.msra.mxu0 0.0
  %2871 = vmatprep.subr.mxu0 0.0
  %2872 = vmatpush1.msra.mxu0 0.0
  %2873 = vmatprep.subr.mxu0 0.0
  %2874 = vmatpush1.msra.mxu0 0.0
  %2875 = vmatprep.subr.mxu0 0.0
  %2876 = vmatpush1.msra.mxu0 0.0
  %2877 = vmatprep.subr.mxu0 0.0
  %2878 = vmatpush1.msra.mxu0 0.0
  %2879 = vmatprep.mubr.f32.mxu0 0.0
  %2880 = vmatmul.mubr.f32.gmra.mrb[0].mxu0 %v2792
  %v2881 = vpop.f32.mrb[0].mxu0
  %v2882 = vadd.f32 0.0, %v2881
  %v2883 = vpop.f32.mrb[0].mxu0
  %2884 = vmatprep.mubr.f32.mxu0 0.0
  %2885 = vmatmul.mubr.f32.gmra.mrb[0].mxu0 %v2795
  %v2886 = vpop.f32.mrb[0].mxu0
  %v2887 = vadd.f32 0.0, %v2886
  %v2888 = vpop.f32.mrb[0].mxu0
  %2889 = vmatprep.mubr.f32.mxu0 0.0
  %2890 = vmatmul.mubr.f32.gmra.mrb[0].mxu0 %v2798
  %v2891 = vpop.f32.mrb[0].mxu0
  %v2892 = vadd.f32 0.0, %v2891
  %v2893 = vpop.f32.mrb[0].mxu0
  %2894 = vmatprep.mubr.f32.mxu0 0.0
  %2895 = vmatmul.mubr.f32.gmra.mrb[0].mxu0 %v2801
  %v2896 = vpop.f32.mrb[0].mxu0
  %v2897 = vadd.f32 0.0, %v2896
  %v2898 = vpop.f32.mrb[0].mxu0
  %2899 = vmatprep.mubr.f32.mxu0 0.0
  %2900 = vmatmul.mubr.f32.gmra.mrb[0].mxu0 %v2804
  %v2901 = vpop.f32.mrb[0].mxu0
  %v2902 = vadd.f32 0.0, %v2901
  %v2903 = vpop.f32.mrb[0].mxu0
  %2904 = vmatprep.mubr.f32.mxu0 0.0
  %2905 = vmatmul.mubr.f32.gmra.mrb[0].mxu0 %v2807
  %v2906 = vpop.f32.mrb[0].mxu0
  %v2907 = vadd.f32 0.0, %v2906
  %v2908 = vpop.f32.mrb[0].mxu0
  %2909 = vmatprep.mubr.f32.mxu0 0.0
  %2910 = vmatmul.mubr.f32.gmra.mrb[0].mxu0 %v2810
  %v2911 = vpop.f32.mrb[0].mxu0
  %v2912 = vadd.f32 0.0, %v2911
  %v2913 = vpop.f32.mrb[0].mxu0
  %2914 = vmatprep.mubr.f32.mxu0 0.0
  %2915 = vmatmul.mubr.f32.gmra.mrb[0].mxu0 %v2813
  %v2916 = vpop.f32.mrb[0].mxu0
  %v2917 = vadd.f32 0.0, %v2916
  %v2918 = vpop.f32.mrb[0].mxu0
  %2919 = vdwg.mxu0
  %v2921 = vsel %vm1770, %v2627, 0
  %v2924 = vsel %vm1770, %v2628, 0
  %v2927 = vsel %vm1770, %v2629, 0
  %v2930 = vsel %vm1770, %v2630, 0
  %v2933 = vsel %vm1770, %v2631, 0
  %v2936 = vsel %vm1770, %v2632, 0
  %v2939 = vsel %vm1770, %v2633, 0
  %v2942 = vsel %vm1770, %v2634, 0
  %2944 = vmatprep.subr.mxu0 0.0
  %2945 = vmatpush1.msra.mxu0 %v2599
  %2946 = vmatprep.subr.mxu0 0.0
  %2947 = vmatpush1.msra.mxu0 %v2600
  %2948 = vmatprep.subr.mxu0 0.0
  %2949 = vmatpush1.msra.mxu0 0.0
  %2950 = vmatprep.subr.mxu0 0.0
  %2951 = vmatpush1.msra.mxu0 0.0
  %2952 = vmatprep.subr.mxu0 0.0
  %2953 = vmatpush1.msra.mxu0 0.0
  %2954 = vmatprep.subr.mxu0 0.0
  %2955 = vmatpush1.msra.mxu0 0.0
  %2956 = vmatprep.subr.mxu0 0.0
  %2957 = vmatpush1.msra.mxu0 0.0
  %2958 = vmatprep.subr.mxu0 0.0
  %2959 = vmatpush1.msra.mxu0 0.0
  %2960 = vmatprep.subr.mxu0 0.0
  %2961 = vmatpush1.msra.mxu0 0.0
  %2962 = vmatprep.subr.mxu0 0.0
  %2963 = vmatpush1.msra.mxu0 0.0
  %2964 = vmatprep.subr.mxu0 0.0
  %2965 = vmatpush1.msra.mxu0 0.0
  %2966 = vmatprep.subr.mxu0 0.0
  %2967 = vmatpush1.msra.mxu0 0.0
  %2968 = vmatprep.subr.mxu0 0.0
  %2969 = vmatpush1.msra.mxu0 0.0
  %2970 = vmatprep.subr.mxu0 0.0
  %2971 = vmatpush1.msra.mxu0 0.0
  %2972 = vmatprep.subr.mxu0 0.0
  %2973 = vmatpush1.msra.mxu0 0.0
  %2974 = vmatprep.subr.mxu0 0.0
  %2975 = vmatpush1.msra.mxu0 0.0
  %2976 = vmatprep.subr.mxu0 0.0
  %2977 = vmatpush1.msra.mxu0 0.0
  %2978 = vmatprep.subr.mxu0 0.0
  %2979 = vmatpush1.msra.mxu0 0.0
  %2980 = vmatprep.subr.mxu0 0.0
  %2981 = vmatpush1.msra.mxu0 0.0
  %2982 = vmatprep.subr.mxu0 0.0
  %2983 = vmatpush1.msra.mxu0 0.0
  %2984 = vmatprep.subr.mxu0 0.0
  %2985 = vmatpush1.msra.mxu0 0.0
  %2986 = vmatprep.subr.mxu0 0.0
  %2987 = vmatpush1.msra.mxu0 0.0
  %2988 = vmatprep.subr.mxu0 0.0
  %2989 = vmatpush1.msra.mxu0 0.0
  %2990 = vmatprep.subr.mxu0 0.0
  %2991 = vmatpush1.msra.mxu0 0.0
  %2992 = vmatprep.subr.mxu0 0.0
  %2993 = vmatpush1.msra.mxu0 0.0
  %2994 = vmatprep.subr.mxu0 0.0
  %2995 = vmatpush1.msra.mxu0 0.0
  %2996 = vmatprep.subr.mxu0 0.0
  %2997 = vmatpush1.msra.mxu0 0.0
  %2998 = vmatprep.subr.mxu0 0.0
  %2999 = vmatpush1.msra.mxu0 0.0
  %3000 = vmatprep.subr.mxu0 0.0
  %3001 = vmatpush1.msra.mxu0 0.0
  %3002 = vmatprep.subr.mxu0 0.0
  %3003 = vmatpush1.msra.mxu0 0.0
  %3004 = vmatprep.subr.mxu0 0.0
  %3005 = vmatpush1.msra.mxu0 0.0
  %3006 = vmatprep.subr.mxu0 0.0
  %3007 = vmatpush1.msra.mxu0 0.0
  %3008 = vmatprep.mubr.f32.mxu0 0.0
  %3009 = vmatmul.mubr.f32.gmra.mrb[0].mxu0 %v2921
  %v3010 = vpop.f32.mrb[0].mxu0
  %v3011 = vadd.f32 %v2735, %v3010
  %v3012 = vpop.f32.mrb[0].mxu0
  %3013 = vmatprep.mubr.f32.mxu0 0.0
  %3014 = vmatmul.mubr.f32.gmra.mrb[0].mxu0 %v2924
  %v3015 = vpop.f32.mrb[0].mxu0
  %v3016 = vadd.f32 %v2740, %v3015
  %v3017 = vpop.f32.mrb[0].mxu0
  %3018 = vmatprep.mubr.f32.mxu0 0.0
  %3019 = vmatmul.mubr.f32.gmra.mrb[0].mxu0 %v2927
  %v3020 = vpop.f32.mrb[0].mxu0
  %v3021 = vadd.f32 %v2745, %v3020
  %v3022 = vpop.f32.mrb[0].mxu0
  %3023 = vmatprep.mubr.f32.mxu0 0.0
  %3024 = vmatmul.mubr.f32.gmra.mrb[0].mxu0 %v2930
  %v3025 = vpop.f32.mrb[0].mxu0
  %v3026 = vadd.f32 %v2750, %v3025
  %v3027 = vpop.f32.mrb[0].mxu0
  %3028 = vmatprep.mubr.f32.mxu0 0.0
  %3029 = vmatmul.mubr.f32.gmra.mrb[0].mxu0 %v2933
  %v3030 = vpop.f32.mrb[0].mxu0
  %v3031 = vadd.f32 %v2755, %v3030
  %v3032 = vpop.f32.mrb[0].mxu0
  %3033 = vmatprep.mubr.f32.mxu0 0.0
  %3034 = vmatmul.mubr.f32.gmra.mrb[0].mxu0 %v2936
  %v3035 = vpop.f32.mrb[0].mxu0
  %v3036 = vadd.f32 %v2760, %v3035
  %v3037 = vpop.f32.mrb[0].mxu0
  %3038 = vmatprep.mubr.f32.mxu0 0.0
  %3039 = vmatmul.mubr.f32.gmra.mrb[0].mxu0 %v2939
  %v3040 = vpop.f32.mrb[0].mxu0
  %v3041 = vadd.f32 %v2765, %v3040
  %v3042 = vpop.f32.mrb[0].mxu0
  %3043 = vmatprep.mubr.f32.mxu0 0.0
  %3044 = vmatmul.mubr.f32.gmra.mrb[0].mxu0 %v2942
  %v3045 = vpop.f32.mrb[0].mxu0
  %v3046 = vadd.f32 %v2770, %v3045
  %v3047 = vpop.f32.mrb[0].mxu0
  %3048 = vdwg.mxu0
  %v3050 = vsel %vm1770, %v2774, 0
  %v3053 = vsel %vm1770, %v2775, 0
  %v3056 = vsel %vm1770, %v2776, 0
  %v3059 = vsel %vm1770, %v2777, 0
  %v3062 = vsel %vm1770, %v2778, 0
  %v3065 = vsel %vm1770, %v2779, 0
  %v3068 = vsel %vm1770, %v2780, 0
  %v3071 = vsel %vm1770, %v2781, 0
  %3073 = vmatprep.subr.mxu0 0.0
  %3074 = vmatpush1.msra.mxu0 %v2619
  %3075 = vmatprep.subr.mxu0 0.0
  %3076 = vmatpush1.msra.mxu0 %v2620
  %3077 = vmatprep.subr.mxu0 0.0
  %3078 = vmatpush1.msra.mxu0 0.0
  %3079 = vmatprep.subr.mxu0 0.0
  %3080 = vmatpush1.msra.mxu0 0.0
  %3081 = vmatprep.subr.mxu0 0.0
  %3082 = vmatpush1.msra.mxu0 0.0
  %3083 = vmatprep.subr.mxu0 0.0
  %3084 = vmatpush1.msra.mxu0 0.0
  %3085 = vmatprep.subr.mxu0 0.0
  %3086 = vmatpush1.msra.mxu0 0.0
  %3087 = vmatprep.subr.mxu0 0.0
  %3088 = vmatpush1.msra.mxu0 0.0
  %3089 = vmatprep.subr.mxu0 0.0
  %3090 = vmatpush1.msra.mxu0 0.0
  %3091 = vmatprep.subr.mxu0 0.0
  %3092 = vmatpush1.msra.mxu0 0.0
  %3093 = vmatprep.subr.mxu0 0.0
  %3094 = vmatpush1.msra.mxu0 0.0
  %3095 = vmatprep.subr.mxu0 0.0
  %3096 = vmatpush1.msra.mxu0 0.0
  %3097 = vmatprep.subr.mxu0 0.0
  %3098 = vmatpush1.msra.mxu0 0.0
  %3099 = vmatprep.subr.mxu0 0.0
  %3100 = vmatpush1.msra.mxu0 0.0
  %3101 = vmatprep.subr.mxu0 0.0
  %3102 = vmatpush1.msra.mxu0 0.0
  %3103 = vmatprep.subr.mxu0 0.0
  %3104 = vmatpush1.msra.mxu0 0.0
  %3105 = vmatprep.subr.mxu0 0.0
  %3106 = vmatpush1.msra.mxu0 0.0
  %3107 = vmatprep.subr.mxu0 0.0
  %3108 = vmatpush1.msra.mxu0 0.0
  %3109 = vmatprep.subr.mxu0 0.0
  %3110 = vmatpush1.msra.mxu0 0.0
  %3111 = vmatprep.subr.mxu0 0.0
  %3112 = vmatpush1.msra.mxu0 0.0
  %3113 = vmatprep.subr.mxu0 0.0
  %3114 = vmatpush1.msra.mxu0 0.0
  %3115 = vmatprep.subr.mxu0 0.0
  %3116 = vmatpush1.msra.mxu0 0.0
  %3117 = vmatprep.subr.mxu0 0.0
  %3118 = vmatpush1.msra.mxu0 0.0
  %3119 = vmatprep.subr.mxu0 0.0
  %3120 = vmatpush1.msra.mxu0 0.0
  %3121 = vmatprep.subr.mxu0 0.0
  %3122 = vmatpush1.msra.mxu0 0.0
  %3123 = vmatprep.subr.mxu0 0.0
  %3124 = vmatpush1.msra.mxu0 0.0
  %3125 = vmatprep.subr.mxu0 0.0
  %3126 = vmatpush1.msra.mxu0 0.0
  %3127 = vmatprep.subr.mxu0 0.0
  %3128 = vmatpush1.msra.mxu0 0.0
  %3129 = vmatprep.subr.mxu0 0.0
  %3130 = vmatpush1.msra.mxu0 0.0
  %3131 = vmatprep.subr.mxu0 0.0
  %3132 = vmatpush1.msra.mxu0 0.0
  %3133 = vmatprep.subr.mxu0 0.0
  %3134 = vmatpush1.msra.mxu0 0.0
  %3135 = vmatprep.subr.mxu0 0.0
  %3136 = vmatpush1.msra.mxu0 0.0
  %3137 = vmatprep.mubr.f32.mxu0 0.0
  %3138 = vmatmul.mubr.f32.gmra.mrb[0].mxu0 %v3050
  %v3139 = vpop.f32.mrb[0].mxu0
  %v3140 = vadd.f32 %v2882, %v3139
  %v3141 = vpop.f32.mrb[0].mxu0
  %3142 = vmatprep.mubr.f32.mxu0 0.0
  %3143 = vmatmul.mubr.f32.gmra.mrb[0].mxu0 %v3053
  %v3144 = vpop.f32.mrb[0].mxu0
  %v3145 = vadd.f32 %v2887, %v3144
  %v3146 = vpop.f32.mrb[0].mxu0
  %3147 = vmatprep.mubr.f32.mxu0 0.0
  %3148 = vmatmul.mubr.f32.gmra.mrb[0].mxu0 %v3056
  %v3149 = vpop.f32.mrb[0].mxu0
  %v3150 = vadd.f32 %v2892, %v3149
  %v3151 = vpop.f32.mrb[0].mxu0
  %3152 = vmatprep.mubr.f32.mxu0 0.0
  %3153 = vmatmul.mubr.f32.gmra.mrb[0].mxu0 %v3059
  %v3154 = vpop.f32.mrb[0].mxu0
  %v3155 = vadd.f32 %v2897, %v3154
  %v3156 = vpop.f32.mrb[0].mxu0
  %3157 = vmatprep.mubr.f32.mxu0 0.0
  %3158 = vmatmul.mubr.f32.gmra.mrb[0].mxu0 %v3062
  %v3159 = vpop.f32.mrb[0].mxu0
  %v3160 = vadd.f32 %v2902, %v3159
  %v3161 = vpop.f32.mrb[0].mxu0
  %3162 = vmatprep.mubr.f32.mxu0 0.0
  %3163 = vmatmul.mubr.f32.gmra.mrb[0].mxu0 %v3065
  %v3164 = vpop.f32.mrb[0].mxu0
  %v3165 = vadd.f32 %v2907, %v3164
  %v3166 = vpop.f32.mrb[0].mxu0
  %3167 = vmatprep.mubr.f32.mxu0 0.0
  %3168 = vmatmul.mubr.f32.gmra.mrb[0].mxu0 %v3068
  %v3169 = vpop.f32.mrb[0].mxu0
  %v3170 = vadd.f32 %v2912, %v3169
  %v3171 = vpop.f32.mrb[0].mxu0
  %3172 = vmatprep.mubr.f32.mxu0 0.0
  %3173 = vmatmul.mubr.f32.gmra.mrb[0].mxu0 %v3071
  %v3174 = vpop.f32.mrb[0].mxu0
  %v3175 = vadd.f32 %v2917, %v3174
  %v3176 = vpop.f32.mrb[0].mxu0
  %3177 = vdwg.mxu0
  %v3178 = vadd.f32 %v3011, %v3140
  %v3179 = vadd.f32 %v3016, %v3145
  %v3180 = vadd.f32 %v3021, %v3150
  %v3181 = vadd.f32 %v3026, %v3155
  %v3182 = vadd.f32 %v3031, %v3160
  %v3183 = vadd.f32 %v3036, %v3165
  %v3184 = vadd.f32 %v3041, %v3170
  %v3185 = vadd.f32 %v3046, %v3175
  %3187 = vset.pattern.permute.xlu0 0
  %3188 = vperm.xlu0 %3187, %v2601
  %v3189 = vpop.permute.xlu0 %3188
  %3192 = vset.pattern.permute.xlu0 0
  %3193 = vperm.xlu0 %3192, %v2602
  %v3194 = vpop.permute.xlu0 %3193
  %3197 = vset.pattern.permute.xlu0 0
  %3198 = vperm.xlu0 %3197, %v2603
  %v3199 = vpop.permute.xlu0 %3198
  %3202 = vset.pattern.permute.xlu0 0
  %3203 = vperm.xlu0 %3202, %v2604
  %v3204 = vpop.permute.xlu0 %3203
  %3207 = vset.pattern.permute.xlu0 0
  %3208 = vperm.xlu0 %3207, %v2605
  %v3209 = vpop.permute.xlu0 %3208
  %3212 = vset.pattern.permute.xlu0 0
  %3213 = vperm.xlu0 %3212, %v2606
  %v3214 = vpop.permute.xlu0 %3213
  %3217 = vset.pattern.permute.xlu0 0
  %3218 = vperm.xlu0 %3217, %v2607
  %v3219 = vpop.permute.xlu0 %3218
  %3222 = vset.pattern.permute.xlu0 0
  %3223 = vperm.xlu0 %3222, %v2608
  %v3224 = vpop.permute.xlu0 %3223
  %v3226 = vadd.f32 %v3178, %v3189
  %v3227 = vadd.f32 %v3179, %v3194
  %v3228 = vadd.f32 %v3180, %v3199
  %v3229 = vadd.f32 %v3181, %v3204
  %v3230 = vadd.f32 %v3182, %v3209
  %v3231 = vadd.f32 %v3183, %v3214
  %v3232 = vadd.f32 %v3184, %v3219
  %v3233 = vadd.f32 %v3185, %v3224
  %3234 = vadd.xlane.f32.xlu0 %v3226
  %v3235 = vpop.xlane.xlu0 %3234
  %3236 = vadd.xlane.f32.xlu0 %v3227
  %v3237 = vpop.xlane.xlu0 %3236
  %3238 = vadd.xlane.f32.xlu0 %v3228
  %v3239 = vpop.xlane.xlu0 %3238
  %3240 = vadd.xlane.f32.xlu0 %v3229
  %v3241 = vpop.xlane.xlu0 %3240
  %3242 = vadd.xlane.f32.xlu0 %v3230
  %v3243 = vpop.xlane.xlu0 %3242
  %3244 = vadd.xlane.f32.xlu0 %v3231
  %v3245 = vpop.xlane.xlu0 %3244
  %3246 = vadd.xlane.f32.xlu0 %v3232
  %v3247 = vpop.xlane.xlu0 %3246
  %3248 = vadd.xlane.f32.xlu0 %v3233
  %v3249 = vpop.xlane.xlu0 %3248
  %v3250 = vadd.f32 %v3235, %v3239
  %v3251 = vadd.f32 %v3237, %v3241
  %v3252 = vadd.f32 %v3243, %v3247
  %v3253 = vadd.f32 %v3245, %v3249
  %v3254 = vadd.f32 %v3250, %v3252
  %v3255 = vadd.f32 %v3251, %v3253
  %v3256 = vrcp.pop 512.0
  %v3257 = vmul.f32 %v3254, %v3256
  %v3258 = vmul.f32 %v3255, %v3256
  %v3259 = vsub.f32 %v3226, %v3257
  %v3260 = vsub.f32 %v3227, %v3258
  %v3261 = vmul.f32 %v3259, %v3259
  %v3262 = vmul.f32 %v3260, %v3260
  %3263 = vadd.xlane.f32.xlu0 %v3261
  %v3264 = vpop.xlane.xlu0 %3263
  %3265 = vadd.xlane.f32.xlu0 %v3262
  %v3266 = vpop.xlane.xlu0 %3265
  %v3267 = vsub.f32 %v3228, %v3257
  %v3268 = vsub.f32 %v3229, %v3258
  %v3269 = vmul.f32 %v3267, %v3267
  %v3270 = vmul.f32 %v3268, %v3268
  %3271 = vadd.xlane.f32.xlu0 %v3269
  %v3272 = vpop.xlane.xlu0 %3271
  %3273 = vadd.xlane.f32.xlu0 %v3270
  %v3274 = vpop.xlane.xlu0 %3273
  %v3275 = vsub.f32 %v3230, %v3257
  %v3276 = vsub.f32 %v3231, %v3258
  %v3277 = vmul.f32 %v3275, %v3275
  %v3278 = vmul.f32 %v3276, %v3276
  %3279 = vadd.xlane.f32.xlu0 %v3277
  %v3280 = vpop.xlane.xlu0 %3279
  %3281 = vadd.xlane.f32.xlu0 %v3278
  %v3282 = vpop.xlane.xlu0 %3281
  %v3283 = vsub.f32 %v3232, %v3257
  %v3284 = vsub.f32 %v3233, %v3258
  %v3285 = vmul.f32 %v3283, %v3283
  %v3286 = vmul.f32 %v3284, %v3284
  %3287 = vadd.xlane.f32.xlu0 %v3285
  %v3288 = vpop.xlane.xlu0 %3287
  %3289 = vadd.xlane.f32.xlu0 %v3286
  %v3290 = vpop.xlane.xlu0 %3289
  %v3291 = vadd.f32 %v3264, %v3272
  %v3292 = vadd.f32 %v3266, %v3274
  %v3293 = vadd.f32 %v3280, %v3288
  %v3294 = vadd.f32 %v3282, %v3290
  %v3295 = vadd.f32 %v3291, %v3293
  %v3296 = vadd.f32 %v3292, %v3294
  %v3297 = vmul.f32 %v3295, %v3256
  %v3298 = vmul.f32 %v3296, %v3256
  %v3299 = vadd.f32 %v3297, 1e-05
  %v3300 = vadd.f32 %v3298, 1e-05
  %v3301 = vrsqrt.pop %v3299
  %v3302 = vrsqrt.pop %v3300
  %v3303 = vld [vmem:[%s45] sm:$0xff]
  %v3304 = vld [vmem:[%s45 + $0x8] sm:$0xff]
  %v3305 = vld [vmem:[%s47] sm:$0xff]
  %v3306 = vld [vmem:[%s47 + $0x8] sm:$0xff]
  %v3307 = vmul.f32 %v3301, %v3303
  %v3308 = vmul.f32 %v3302, %v3304
  %v3309 = vmul.f32 %v3257, %v3307
  %v3310 = vmul.f32 %v3258, %v3308
  %v3311 = vsub.f32 %v3305, %v3309
  %v3312 = vsub.f32 %v3306, %v3310
  %3314 = vset.pattern.permute.xlu0 0
  %3315 = vperm.xlu0 %3314, %v3307
  %v3316 = vpop.permute.xlu0 %3315
  %3319 = vset.pattern.permute.xlu0 0
  %3320 = vperm.xlu0 %3319, %v3308
  %v3321 = vpop.permute.xlu0 %3320
  %v3323 = vmul.f32 %v3226, %v3316
  %v3324 = vmul.f32 %v3227, %v3321
  %v3325 = vmul.f32 %v3228, %v3316
  %v3326 = vmul.f32 %v3229, %v3321
  %v3327 = vmul.f32 %v3230, %v3316
  %v3328 = vmul.f32 %v3231, %v3321
  %v3329 = vmul.f32 %v3232, %v3316
  %v3330 = vmul.f32 %v3233, %v3321
  %3332 = vset.pattern.permute.xlu0 0
  %3333 = vperm.xlu0 %3332, %v3311
  %v3334 = vpop.permute.xlu0 %3333
  %3337 = vset.pattern.permute.xlu0 0
  %3338 = vperm.xlu0 %3337, %v3312
  %v3339 = vpop.permute.xlu0 %3338
  %v3341 = vadd.f32 %v3323, %v3334
  %v3342 = vadd.f32 %v3324, %v3339
  %v3343 = vadd.f32 %v3325, %v3334
  %v3344 = vadd.f32 %v3326, %v3339
  %v3345 = vadd.f32 %v3327, %v3334
  %v3346 = vadd.f32 %v3328, %v3339
  %v3347 = vadd.f32 %v3329, %v3334
  %v3348 = vadd.f32 %v3330, %v3339
  %vm3349 = vcmp.ge.f32.partialorder %v3341, 0.0
  %vm3350 = vcmp.ge.f32.partialorder %v3342, 0.0
  %vm3351 = vcmp.ge.f32.partialorder %v3343, 0.0
  %vm3352 = vcmp.ge.f32.partialorder %v3344, 0.0
  %vm3353 = vcmp.ge.f32.partialorder %v3345, 0.0
  %vm3354 = vcmp.ge.f32.partialorder %v3346, 0.0
  %vm3355 = vcmp.ge.f32.partialorder %v3347, 0.0
  %vm3356 = vcmp.ge.f32.partialorder %v3348, 0.0
  %v3357 = vmul.f32 %v3341, 0.01
  %v3358 = vmul.f32 %v3342, 0.01
  %v3359 = vmul.f32 %v3343, 0.01
  %v3360 = vmul.f32 %v3344, 0.01
  %v3361 = vmul.f32 %v3345, 0.01
  %v3362 = vmul.f32 %v3346, 0.01
  %v3363 = vmul.f32 %v3347, 0.01
  %v3364 = vmul.f32 %v3348, 0.01
  %v3365 = vsel %vm3349, %v3341, %v3357
  %v3366 = vsel %vm3350, %v3342, %v3358
  %v3367 = vsel %vm3351, %v3343, %v3359
  %v3368 = vsel %vm3352, %v3344, %v3360
  %v3369 = vsel %vm3353, %v3345, %v3361
  %v3370 = vsel %vm3354, %v3346, %v3362
  %v3371 = vsel %vm3355, %v3347, %v3363
  %v3372 = vsel %vm3356, %v3348, %v3364
  %v3373 = vld [vmem:[%s49] sm:$0xff]
  %v3374 = vld [vmem:[%s49 + $0x8] sm:$0xf]
  %v3375 = vld [vmem:[%s51] sm:$0xff]
  %v3376 = vld [vmem:[%s51 + $0x8] sm:$0xf]
  %3378 = vset.pattern.permute.xlu0 0
  %3379 = vperm.xlu0 %3378, %v3375
  %v3380 = vpop.permute.xlu0 %3379
  %3383 = vset.pattern.permute.xlu0 0
  %3384 = vperm.xlu0 %3383, %v3376
  %v3385 = vpop.permute.xlu0 %3384
  %vm3387 = vcmask 523264
  %v3389 = vsel %vm3387, %v3373, 0
  %v3392 = vsel %vm3387, %v3374, 0
  %3394 = vmatprep.subr.mxu0 0.0
  %3395 = vmatpush1.msra.mxu0 %v3365
  %3396 = vmatprep.subr.mxu0 0.0
  %3397 = vmatpush1.msra.mxu0 %v3366
  %3398 = vmatprep.subr.mxu0 0.0
  %3399 = vmatpush1.msra.mxu0 %v3367
  %3400 = vmatprep.subr.mxu0 0.0
  %3401 = vmatpush1.msra.mxu0 %v3368
  %3402 = vmatprep.subr.mxu0 0.0
  %3403 = vmatpush1.msra.mxu0 %v3369
  %3404 = vmatprep.subr.mxu0 0.0
  %3405 = vmatpush1.msra.mxu0 %v3370
  %3406 = vmatprep.subr.mxu0 0.0
  %3407 = vmatpush1.msra.mxu0 %v3371
  %3408 = vmatprep.subr.mxu0 0.0
  %3409 = vmatpush1.msra.mxu0 %v3372
  %3410 = vmatprep.subr.mxu0 0.0
  %3411 = vmatpush1.msra.mxu0 0.0
  %3412 = vmatprep.subr.mxu0 0.0
  %3413 = vmatpush1.msra.mxu0 0.0
  %3414 = vmatprep.subr.mxu0 0.0
  %3415 = vmatpush1.msra.mxu0 0.0
  %3416 = vmatprep.subr.mxu0 0.0
  %3417 = vmatpush1.msra.mxu0 0.0
  %3418 = vmatprep.subr.mxu0 0.0
  %3419 = vmatpush1.msra.mxu0 0.0
  %3420 = vmatprep.subr.mxu0 0.0
  %3421 = vmatpush1.msra.mxu0 0.0
  %3422 = vmatprep.subr.mxu0 0.0
  %3423 = vmatpush1.msra.mxu0 0.0
  %3424 = vmatprep.subr.mxu0 0.0
  %3425 = vmatpush1.msra.mxu0 0.0
  %3426 = vmatprep.subr.mxu0 0.0
  %3427 = vmatpush1.msra.mxu0 0.0
  %3428 = vmatprep.subr.mxu0 0.0
  %3429 = vmatpush1.msra.mxu0 0.0
  %3430 = vmatprep.subr.mxu0 0.0
  %3431 = vmatpush1.msra.mxu0 0.0
  %3432 = vmatprep.subr.mxu0 0.0
  %3433 = vmatpush1.msra.mxu0 0.0
  %3434 = vmatprep.subr.mxu0 0.0
  %3435 = vmatpush1.msra.mxu0 0.0
  %3436 = vmatprep.subr.mxu0 0.0
  %3437 = vmatpush1.msra.mxu0 0.0
  %3438 = vmatprep.subr.mxu0 0.0
  %3439 = vmatpush1.msra.mxu0 0.0
  %3440 = vmatprep.subr.mxu0 0.0
  %3441 = vmatpush1.msra.mxu0 0.0
  %3442 = vmatprep.subr.mxu0 0.0
  %3443 = vmatpush1.msra.mxu0 0.0
  %3444 = vmatprep.subr.mxu0 0.0
  %3445 = vmatpush1.msra.mxu0 0.0
  %3446 = vmatprep.subr.mxu0 0.0
  %3447 = vmatpush1.msra.mxu0 0.0
  %3448 = vmatprep.subr.mxu0 0.0
  %3449 = vmatpush1.msra.mxu0 0.0
  %3450 = vmatprep.subr.mxu0 0.0
  %3451 = vmatpush1.msra.mxu0 0.0
  %3452 = vmatprep.subr.mxu0 0.0
  %3453 = vmatpush1.msra.mxu0 0.0
  %3454 = vmatprep.subr.mxu0 0.0
  %3455 = vmatpush1.msra.mxu0 0.0
  %3456 = vmatprep.subr.mxu0 0.0
  %3457 = vmatpush1.msra.mxu0 0.0
  %3458 = vmatprep.mubr.f32.mxu0 0.0
  %3459 = vmatmul.mubr.f32.gmra.mrb[0].mxu0 %v3389
  %v3460 = vpop.f32.mrb[0].mxu0
  %v3461 = vadd.f32 %v3380, %v3460
  %v3462 = vpop.f32.mrb[0].mxu0
  %3463 = vmatprep.mubr.f32.mxu0 0.0
  %3464 = vmatmul.mubr.f32.gmra.mrb[0].mxu0 %v3392
  %v3465 = vpop.f32.mrb[0].mxu0
  %v3466 = vadd.f32 %v3385, %v3465
  %v3467 = vpop.f32.mrb[0].mxu0
  %3468 = vdwg.mxu0
  %v3469 = vtanh.pop %v3461
  %v3470 = vtanh.pop %v3466
  %3471 = vst [vmem:[%s61] sm:$0xff] %v3469
  %3472 = vst [vmem:[%s61 + $0x8] sm:$0xf] %v3470
  %v3473 = vld [vmem:[%s53] sm:$0xff]
  %v3474 = vld [vmem:[%s53 + $0x8] sm:$0xff]
  %v3475 = vld [vmem:[%s55] sm:$0xff]
  %v3476 = vld [vmem:[%s55 + $0x8] sm:$0xff]
  %v3477 = vmul.f32 %v3301, %v3473
  %v3478 = vmul.f32 %v3302, %v3474
  %v3479 = vmul.f32 %v3257, %v3477
  %v3480 = vmul.f32 %v3258, %v3478
  %v3481 = vsub.f32 %v3475, %v3479
  %v3482 = vsub.f32 %v3476, %v3480
  %3484 = vset.pattern.permute.xlu0 0
  %3485 = vperm.xlu0 %3484, %v3477
  %v3486 = vpop.permute.xlu0 %3485
  %3489 = vset.pattern.permute.xlu0 0
  %3490 = vperm.xlu0 %3489, %v3478
  %v3491 = vpop.permute.xlu0 %3490
  %v3493 = vmul.f32 %v3226, %v3486
  %v3494 = vmul.f32 %v3227, %v3491
  %v3495 = vmul.f32 %v3228, %v3486
  %v3496 = vmul.f32 %v3229, %v3491
  %v3497 = vmul.f32 %v3230, %v3486
  %v3498 = vmul.f32 %v3231, %v3491
  %v3499 = vmul.f32 %v3232, %v3486
  %v3500 = vmul.f32 %v3233, %v3491
  %3502 = vset.pattern.permute.xlu0 0
  %3503 = vperm.xlu0 %3502, %v3481
  %v3504 = vpop.permute.xlu0 %3503
  %3507 = vset.pattern.permute.xlu0 0
  %3508 = vperm.xlu0 %3507, %v3482
  %v3509 = vpop.permute.xlu0 %3508
  %v3511 = vadd.f32 %v3493, %v3504
  %v3512 = vadd.f32 %v3494, %v3509
  %v3513 = vadd.f32 %v3495, %v3504
  %v3514 = vadd.f32 %v3496, %v3509
  %v3515 = vadd.f32 %v3497, %v3504
  %v3516 = vadd.f32 %v3498, %v3509
  %v3517 = vadd.f32 %v3499, %v3504
  %v3518 = vadd.f32 %v3500, %v3509
  %vm3519 = vcmp.ge.f32.partialorder %v3511, 0.0
  %vm3520 = vcmp.ge.f32.partialorder %v3512, 0.0
  %vm3521 = vcmp.ge.f32.partialorder %v3513, 0.0
  %vm3522 = vcmp.ge.f32.partialorder %v3514, 0.0
  %vm3523 = vcmp.ge.f32.partialorder %v3515, 0.0
  %vm3524 = vcmp.ge.f32.partialorder %v3516, 0.0
  %vm3525 = vcmp.ge.f32.partialorder %v3517, 0.0
  %vm3526 = vcmp.ge.f32.partialorder %v3518, 0.0
  %v3527 = vmul.f32 %v3511, 0.01
  %v3528 = vmul.f32 %v3512, 0.01
  %v3529 = vmul.f32 %v3513, 0.01
  %v3530 = vmul.f32 %v3514, 0.01
  %v3531 = vmul.f32 %v3515, 0.01
  %v3532 = vmul.f32 %v3516, 0.01
  %v3533 = vmul.f32 %v3517, 0.01
  %v3534 = vmul.f32 %v3518, 0.01
  %v3535 = vsel %vm3519, %v3511, %v3527
  %v3536 = vsel %vm3520, %v3512, %v3528
  %v3537 = vsel %vm3521, %v3513, %v3529
  %v3538 = vsel %vm3522, %v3514, %v3530
  %v3539 = vsel %vm3523, %v3515, %v3531
  %v3540 = vsel %vm3524, %v3516, %v3532
  %v3541 = vsel %vm3525, %v3517, %v3533
  %v3542 = vsel %vm3526, %v3518, %v3534
  %v3543 = vld [vmem:[%s57] sm:$0xff]
  %v3544 = vld [vmem:[%s57 + $0x8] sm:$0xf]
  %v3545 = vld [vmem:[%s59] sm:$0xff]
  %v3546 = vld [vmem:[%s59 + $0x8] sm:$0xf]
  %3548 = vset.pattern.permute.xlu0 0
  %3549 = vperm.xlu0 %3548, %v3545
  %v3550 = vpop.permute.xlu0 %3549
  %3553 = vset.pattern.permute.xlu0 0
  %3554 = vperm.xlu0 %3553, %v3546
  %v3555 = vpop.permute.xlu0 %3554
  %v3558 = vsel %vm3387, %v3543, 0
  %v3561 = vsel %vm3387, %v3544, 0
  %3563 = vmatprep.subr.mxu0 0.0
  %3564 = vmatpush1.msra.mxu0 %v3535
  %3565 = vmatprep.subr.mxu0 0.0
  %3566 = vmatpush1.msra.mxu0 %v3536
  %3567 = vmatprep.subr.mxu0 0.0
  %3568 = vmatpush1.msra.mxu0 %v3537
  %3569 = vmatprep.subr.mxu0 0.0
  %3570 = vmatpush1.msra.mxu0 %v3538
  %3571 = vmatprep.subr.mxu0 0.0
  %3572 = vmatpush1.msra.mxu0 %v3539
  %3573 = vmatprep.subr.mxu0 0.0
  %3574 = vmatpush1.msra.mxu0 %v3540
  %3575 = vmatprep.subr.mxu0 0.0
  %3576 = vmatpush1.msra.mxu0 %v3541
  %3577 = vmatprep.subr.mxu0 0.0
  %3578 = vmatpush1.msra.mxu0 %v3542
  %3579 = vmatprep.subr.mxu0 0.0
  %3580 = vmatpush1.msra.mxu0 0.0
  %3581 = vmatprep.subr.mxu0 0.0
  %3582 = vmatpush1.msra.mxu0 0.0
  %3583 = vmatprep.subr.mxu0 0.0
  %3584 = vmatpush1.msra.mxu0 0.0
  %3585 = vmatprep.subr.mxu0 0.0
  %3586 = vmatpush1.msra.mxu0 0.0
  %3587 = vmatprep.subr.mxu0 0.0
  %3588 = vmatpush1.msra.mxu0 0.0
  %3589 = vmatprep.subr.mxu0 0.0
  %3590 = vmatpush1.msra.mxu0 0.0
  %3591 = vmatprep.subr.mxu0 0.0
  %3592 = vmatpush1.msra.mxu0 0.0
  %3593 = vmatprep.subr.mxu0 0.0
  %3594 = vmatpush1.msra.mxu0 0.0
  %3595 = vmatprep.subr.mxu0 0.0
  %3596 = vmatpush1.msra.mxu0 0.0
  %3597 = vmatprep.subr.mxu0 0.0
  %3598 = vmatpush1.msra.mxu0 0.0
  %3599 = vmatprep.subr.mxu0 0.0
  %3600 = vmatpush1.msra.mxu0 0.0
  %3601 = vmatprep.subr.mxu0 0.0
  %3602 = vmatpush1.msra.mxu0 0.0
  %3603 = vmatprep.subr.mxu0 0.0
  %3604 = vmatpush1.msra.mxu0 0.0
  %3605 = vmatprep.subr.mxu0 0.0
  %3606 = vmatpush1.msra.mxu0 0.0
  %3607 = vmatprep.subr.mxu0 0.0
  %3608 = vmatpush1.msra.mxu0 0.0
  %3609 = vmatprep.subr.mxu0 0.0
  %3610 = vmatpush1.msra.mxu0 0.0
  %3611 = vmatprep.subr.mxu0 0.0
  %3612 = vmatpush1.msra.mxu0 0.0
  %3613 = vmatprep.subr.mxu0 0.0
  %3614 = vmatpush1.msra.mxu0 0.0
  %3615 = vmatprep.subr.mxu0 0.0
  %3616 = vmatpush1.msra.mxu0 0.0
  %3617 = vmatprep.subr.mxu0 0.0
  %3618 = vmatpush1.msra.mxu0 0.0
  %3619 = vmatprep.subr.mxu0 0.0
  %3620 = vmatpush1.msra.mxu0 0.0
  %3621 = vmatprep.subr.mxu0 0.0
  %3622 = vmatpush1.msra.mxu0 0.0
  %3623 = vmatprep.subr.mxu0 0.0
  %3624 = vmatpush1.msra.mxu0 0.0
  %3625 = vmatprep.subr.mxu0 0.0
  %3626 = vmatpush1.msra.mxu0 0.0
  %3627 = vmatprep.mubr.f32.mxu0 0.0
  %3628 = vmatmul.mubr.f32.gmra.mrb[0].mxu0 %v3558
  %v3629 = vpop.f32.mrb[0].mxu0
  %v3630 = vadd.f32 %v3550, %v3629
  %v3631 = vpop.f32.mrb[0].mxu0
  %3632 = vmatprep.mubr.f32.mxu0 0.0
  %3633 = vmatmul.mubr.f32.gmra.mrb[0].mxu0 %v3561
  %v3634 = vpop.f32.mrb[0].mxu0
  %v3635 = vadd.f32 %v3555, %v3634
  %v3636 = vpop.f32.mrb[0].mxu0
  %3637 = vdwg.mxu0
  %v3638 = vmul.f32 %v3630, 0.5
  %v3639 = vmul.f32 %v3635, 0.5
  %v3640 = vmax.f32 %v3638, 0.0
  %v3641 = vmax.f32 %v3639, 0.0
  %v3642 = vand.u32 2147483647, %v3638
  %v3643 = vand.u32 2147483647, %v3639
  %v3644 = vsub.f32 0.0, %v3642
  %v3645 = vsub.f32 0.0, %v3643
  %v3646 = vmul.f32 %v3644, 1.442695
  %v3647 = vpow.pop %v3646
  %v3648 = vmul.f32 %v3645, 1.442695
  %v3649 = vpow.pop %v3648
  %v3650 = vadd.f32 %v3647, 1.0
  %v3651 = vadd.f32 %v3649, 1.0
  %v3652 = vlog2.pop %v3650
  %v3653 = vmul.f32 %v3652, 0.6931472
  %v3654 = vlog2.pop %v3651
  %v3655 = vmul.f32 %v3654, 0.6931472
  %v3656 = vadd.f32 %v3640, %v3653
  %v3657 = vadd.f32 %v3641, %v3655
  %v3658 = vmin.f32 %v3656, 20.0
  %v3659 = vmin.f32 %v3657, 20.0
  %v3660 = vmul.f32 %v3658, 1.442695
  %v3661 = vpow.pop %v3660
  %v3662 = vmul.f32 %v3659, 1.442695
  %v3663 = vpow.pop %v3662
  %3664 = vst [vmem:[%s63] sm:$0xff] %v3661
  %3665 = vst [vmem:[%s63 + $0x8] sm:$0xf] %v3663
  // Predicated region
  $region122: #{dec_forward.1} parent=0 // pred_check
    _
  $region123: #{dec_forward.1} parent=0 // pred_check_branch
    %3667 = sbr.rel (0) target = $region125
  $region124: #{dec_forward.1} parent=0 // pred_region
    _
  $region125: #{dec_forward.1} parent=0 // pred_fallthru
    _
  // Predicated region
  $region126: #{dec_forward.1} parent=0 // pred_check
    _
  $region127: #{dec_forward.1} parent=0 // pred_check_branch
    %3669 = sbr.rel (0) target = $region129
  $region128: #{dec_forward.1} parent=0 // pred_region
    _
  $region129: #{dec_forward.1} parent=0 // pred_fallthru
    _
  // Predicated region
  $region130: #{dec_forward.1} parent=0 // pred_check
    _
  $region131: #{dec_forward.1} parent=0 // pred_check_branch
    %3671 = sbr.rel (0) target = $region133
  $region132: #{dec_forward.1} parent=0 // pred_region
    _
  $region133: #{dec_forward.1} parent=0 // pred_fallthru
    _
  // Predicated region
  $region134: #{dec_forward.1} parent=0 // pred_check
    _
  $region135: #{dec_forward.1} parent=0 // pred_check_branch
    %3673 = sbr.rel (0) target = $region137
  $region136: #{dec_forward.1} parent=0 // pred_region
    _
  $region137: #{dec_forward.1} parent=0 // pred_fallthru
    _

</llo_original>
